<compile_context>
chip_gen: v7x
topology: tpu7x:2x2x1
jax: 0.10.0
libtpu: 0.0.40
codegen_flags: <defaults>
</compile_context>

<pallas_src>
import functools

import jax
import jax.numpy as jnp
from jax.experimental import pallas as pl
from jax.experimental.pallas import tpu as pltpu


def _normalize(x, eps=1e-5):
    # nn.LayerNorm statistics only (biased variance, eps=1e-5); the affine
    # gamma/beta are folded into the following Linear at trace time.
    mean = jnp.mean(x, axis=-1, keepdims=True)
    var = jnp.mean(jnp.square(x - mean), axis=-1, keepdims=True)
    return (x - mean) * jax.lax.rsqrt(var + eps)


def _layer_norm(x, gamma, beta, eps=1e-5):
    return _normalize(x, eps) * gamma + beta


def slot_attention_kernel(
    inputs_ref, slots_ref,
    wk_ref, bk_ref, wv_ref, bv_ref,
    wq_ref, bq_ref,
    w_ih_r_ref, w_ih_z_ref, w_ih_n_ref,
    w_hh_r_ref, w_hh_z_ref, w_hh_n_ref,
    b_r_ref, b_z_ref, b_ih_n_ref, b_hh_n_ref,
    w1_ref, b1_ref, w2_ref, b2_ref,
    out_ref,
    *, num_iterations, eps,
):
    Bb, N, Cin = inputs_ref.shape
    _, M, D = slots_ref.shape

    # ---- hoist all small parameter reads out of the unrolled loop ---------
    wk, bk = wk_ref[...], bk_ref[...]
    wv, bv = wv_ref[...], bv_ref[...]
    wq, bq = wq_ref[...], bq_ref[...]          # LN affine + attn_scale folded
    w_ih_r, w_ih_z, w_ih_n = w_ih_r_ref[...], w_ih_z_ref[...], w_ih_n_ref[...]
    w_hh_r, w_hh_z, w_hh_n = w_hh_r_ref[...], w_hh_z_ref[...], w_hh_n_ref[...]
    b_r, b_z = b_r_ref[...], b_z_ref[...]
    b_ih_n, b_hh_n = b_ih_n_ref[...], b_hh_n_ref[...]
    w1, b1, w2, b2 = w1_ref[...], b1_ref[...], w2_ref[...], b2_ref[...]

    # ---- norm_inputs + k/v projections on the flattened batch slab --------
    x = _normalize(inputs_ref[...].reshape(Bb * N, Cin))
    k = (jnp.dot(x, wk, preferred_element_type=jnp.float32) + bk
         ).reshape(Bb, N, D)                                        # [Bb, N, D]
    v = (jnp.dot(x, wv, preferred_element_type=jnp.float32) + bv
         ).reshape(Bb, N, D)                                        # [Bb, N, D]

    slots = slots_ref[...].reshape(Bb * M, D).astype(jnp.float32)

    # num_iterations is small (3); static unroll is fine.  If it ever grows
    # past ~4, switch to lax.fori_loop(..., unroll=True) to bound live ranges.
    for _ in range(num_iterations):
        slots_prev = slots

        # project_q = LayerNorm -> Linear (LN affine + scale folded into wq/bq)
        q = jnp.dot(_normalize(slots), wq,
                    preferred_element_type=jnp.float32) + bq        # [Bb*M, D]
        q3 = q.reshape(Bb, M, D)

        # Flipped attention layout: logits [Bb, M, N] (lane-dense in N).
        logits = jnp.einsum('bmd,bnd->bmn', q3, k,
                            preferred_element_type=jnp.float32)
        # softmax over slots (axis 1, sublane reduction)
        logits = logits - jnp.max(logits, axis=1, keepdims=True)
        e = jnp.exp(logits)
        attn = e * pl.reciprocal(jnp.sum(e, axis=1, keepdims=True), approx=True)
        attn = attn + eps
        # normalize over inputs (axis -1, lane reduction)
        attn = attn * pl.reciprocal(jnp.sum(attn, axis=-1, keepdims=True),
                                    approx=True)

        # updates = attn @ v, already in [M, D] orientation (no transpose).
        updates = jnp.einsum('bmn,bnd->bmd', attn, v,
                             preferred_element_type=jnp.float32)    # [Bb, M, D]
        upd = updates.reshape(Bb * M, D)

        # GRUCell (PyTorch gate order r, z, n) with per-gate weights.
        r = jax.nn.sigmoid(
            jnp.dot(upd, w_ih_r, preferred_element_type=jnp.float32)
            + jnp.dot(slots_prev, w_hh_r, preferred_element_type=jnp.float32)
            + b_r)
        z = jax.nn.sigmoid(
            jnp.dot(upd, w_ih_z, preferred_element_type=jnp.float32)
            + jnp.dot(slots_prev, w_hh_z, preferred_element_type=jnp.float32)
            + b_z)
        n = jnp.tanh(
            jnp.dot(upd, w_ih_n, preferred_element_type=jnp.float32) + b_ih_n
            + r * (jnp.dot(slots_prev, w_hh_n, preferred_element_type=jnp.float32)
                   + b_hh_n))
        slots = (1.0 - z) * n + z * slots_prev

        # residual MLP: LayerNorm -> Linear -> ReLU -> Linear (LN affine in w1/b1)
        h = jnp.maximum(
            jnp.dot(_normalize(slots), w1, preferred_element_type=jnp.float32)
            + b1, 0.0)
        h = jnp.dot(h, w2, preferred_element_type=jnp.float32) + b2
        slots = slots + h

    out_ref[...] = slots.reshape(Bb, M, D).astype(out_ref.dtype)


def slot_attention(inputs, slots, params, *, num_iterations, eps=1e-6,
                   batch_block=None):
    B, N, Cin = inputs.shape
    _, M, D = slots.shape
    scale = D ** -0.5

    # ---- trace-time parameter fusion (parameters only, exact algebra) -----
    # LayerNorm affine folded into the following Linear:
    #   (norm(x)*g + b) @ W = norm(x) @ (g^T * W) + (b @ W)
    g_in, b_in = params["ln_in_g"], params["ln_in_b"]
    wk_f = g_in.reshape(Cin, 1) * params["wk"]
    bk_f = b_in @ params["wk"]
    wv_f = g_in.reshape(Cin, 1) * params["wv"]
    bv_f = b_in @ params["wv"]

    g_q, b_q = params["ln_q_g"], params["ln_q_b"]
    wq_f = (g_q.reshape(D, 1) * params["wq"]) * scale     # attn_scale folded
    bq_f = (b_q @ params["wq"]) * scale

    w_ih, w_hh = params["w_ih"], params["w_hh"]            # [D, 3D] each
    b_ih, b_hh = params["b_ih"], params["b_hh"]            # [1, 3D] each
    w_ih_r, w_ih_z, w_ih_n = w_ih[:, :D], w_ih[:, D:2 * D], w_ih[:, 2 * D:]
    w_hh_r, w_hh_z, w_hh_n = w_hh[:, :D], w_hh[:, D:2 * D], w_hh[:, 2 * D:]
    b_r = b_ih[:, :D] + b_hh[:, :D]
    b_z = b_ih[:, D:2 * D] + b_hh[:, D:2 * D]
    b_ih_n = b_ih[:, 2 * D:]
    b_hh_n = b_hh[:, 2 * D:]

    g_m, b_m = params["ln_mlp_g"], params["ln_mlp_b"]
    w1_f = g_m.reshape(D, 1) * params["w1"]
    b1_f = b_m @ params["w1"] + params["b1"]

    param_arrays = [
        wk_f, bk_f, wv_f, bv_f,
        wq_f, bq_f,
        w_ih_r, w_ih_z, w_ih_n,
        w_hh_r, w_hh_z, w_hh_n,
        b_r, b_z, b_ih_n, b_hh_n,
        w1_f, b1_f, params["w2"], params["b2"],
    ]

    # Fold the batch (or a batch block) into each grid step so the matmuls
    # are bigger and per-grid-step overhead is amortized.
    if batch_block is None:
        batch_block = min(B, 8)
    batch_block = max(1, min(batch_block, B))
    while B % batch_block != 0:
        batch_block -= 1
    Bb = batch_block
    grid = (B // Bb,)

    def batched_spec(shape):
        return pl.BlockSpec((Bb,) + shape, lambda b: (b, 0, 0))

    def full_spec(arr):
        nd = arr.ndim
        return pl.BlockSpec(arr.shape, lambda b, _nd=nd: (0,) * _nd)

    in_specs = ([batched_spec((N, Cin)), batched_spec((M, D))]
                + [full_spec(a) for a in param_arrays])
    out_spec = pl.BlockSpec((Bb, M, D), lambda b: (b, 0, 0))

    kernel = functools.partial(
        slot_attention_kernel, num_iterations=num_iterations, eps=eps)

    return pl.pallas_call(
        kernel,
        out_shape=jax.ShapeDtypeStruct((B, M, D), slots.dtype),
        grid_spec=pltpu.PrefetchScalarGridSpec(
            num_scalar_prefetch=0,
            grid=grid,
            in_specs=in_specs,
            out_specs=out_spec,
        ),
        compiler_params=pltpu.CompilerParams(
            dimension_semantics=("parallel",)),
    )(inputs, slots, *param_arrays)


def reference_forward(inputs, slots, p, *, num_iterations, eps=1e-6):
    """Pure-JAX reference mirroring the PyTorch module, for a sanity check."""
    D = slots.shape[-1]
    scale = D ** -0.5
    x = _layer_norm(inputs, p["ln_in_g"], p["ln_in_b"])
    k = x @ p["wk"]
    v = x @ p["wv"]
    for _ in range(num_iterations):
        slots_prev = slots
        q = _layer_norm(slots, p["ln_q_g"], p["ln_q_b"]) @ p["wq"]
        logits = scale * jnp.einsum("bnc,bmc->bnm", k, q)
        attn = jax.nn.softmax(logits, axis=-1) + eps
        attn = attn / jnp.sum(attn, axis=1, keepdims=True)
        updates = jnp.einsum("bnm,bnc->bmc", attn, v)
        gx = updates @ p["w_ih"] + p["b_ih"]
        gh = slots_prev @ p["w_hh"] + p["b_hh"]
        r = jax.nn.sigmoid(gx[..., :D] + gh[..., :D])
        z = jax.nn.sigmoid(gx[..., D:2 * D] + gh[..., D:2 * D])
        n = jnp.tanh(gx[..., 2 * D:] + r * gh[..., 2 * D:])
        slots = (1.0 - z) * n + z * slots_prev
        h = _layer_norm(slots, p["ln_mlp_g"], p["ln_mlp_b"])
        h = jnp.maximum(h @ p["w1"] + p["b1"], 0.0)
        h = h @ p["w2"] + p["b2"]
        slots = slots + h
    return slots


def make_params(key, in_features, slot_size, mlp_hidden_size):
    Cin, D, H = in_features, slot_size, mlp_hidden_size
    ks = jax.random.split(key, 16)

    def w(k, shape, fan_in):
        return (jax.random.normal(k, shape, jnp.float32)
                / jnp.sqrt(jnp.float32(fan_in)))

    # LayerNorm gammas/betas are perturbed from (1, 0) so the trace-time
    # affine-folding path is actually exercised by the self-check.
    return {
        # norm_inputs
        "ln_in_g": 1.0 + 0.1 * jax.random.normal(ks[9], (1, Cin), jnp.float32),
        "ln_in_b": 0.1 * jax.random.normal(ks[10], (1, Cin), jnp.float32),
        # project_q = LayerNorm + Linear(D, D, bias=False); weight stored [in, out]
        "ln_q_g": 1.0 + 0.1 * jax.random.normal(ks[11], (1, D), jnp.float32),
        "ln_q_b": 0.1 * jax.random.normal(ks[12], (1, D), jnp.float32),
        "wq": w(ks[0], (D, D), D),
        # project_k / project_v: Linear(Cin, D, bias=False), stored [in, out]
        "wk": w(ks[1], (Cin, D), Cin),
        "wv": w(ks[2], (Cin, D), Cin),
        # GRUCell(D, D): weight_ih/weight_hh stored transposed [in, 3*D]
        "w_ih": w(ks[3], (D, 3 * D), D),
        "w_hh": w(ks[4], (D, 3 * D), D),
        "b_ih": 0.01 * jax.random.normal(ks[5], (1, 3 * D), jnp.float32),
        "b_hh": 0.01 * jax.random.normal(ks[6], (1, 3 * D), jnp.float32),
        # mlp: LayerNorm + Linear(D,H) + ReLU + Linear(H,D), weights [in, out]
        "ln_mlp_g": 1.0 + 0.1 * jax.random.normal(ks[13], (1, D), jnp.float32),
        "ln_mlp_b": 0.1 * jax.random.normal(ks[14], (1, D), jnp.float32),
        "w1": w(ks[7], (D, H), D),
        "b1": 0.01 * jax.random.normal(ks[15], (1, H), jnp.float32),
        "w2": w(ks[8], (H, D), H),
        "b2": jnp.zeros((1, D), jnp.float32),
    }


if __name__ == "__main__":
    # Small config consistent with the module:
    #   in_features=32, num_iterations=3, num_slots=8, slot_size=32, mlp_hidden=64
    B, N, Cin = 2, 64, 32          # N = flattened 8x8 spatial tokens
    M, D, H = 8, 32, 64
    num_iterations = 3
    eps = 1e-6

    key = jax.random.PRNGKey(0)
    k_param, k_in, k_slot = jax.random.split(key, 3)
    params = make_params(k_param, Cin, D, H)
    inputs = jax.random.normal(k_in, (B, N, Cin), jnp.float32)
    slots = jax.random.normal(k_slot, (B, M, D), jnp.float32)

    out = slot_attention(inputs, slots, params,
                         num_iterations=num_iterations, eps=eps)
    out = jax.block_until_ready(out)

    ref = reference_forward(inputs, slots, params,
                            num_iterations=num_iterations, eps=eps)
    ref = jax.block_until_ready(ref)

    assert out.shape == (B, M, D)
    assert jnp.allclose(out, ref, atol=1e-2, rtol=1e-2), (
        f"max abs diff {jnp.max(jnp.abs(out - ref))}")

    print("KERNEL_OK")
</pallas_src>

<mosaic_0001>
module attributes {stable_mosaic.version = 11 : i64} {
  func.func @slot_attention_kernel(%arg0: i32, %arg1: memref<2x64x32xf32, #tpu.memory_space<vmem>>, %arg2: memref<2x8x32xf32, #tpu.memory_space<vmem>>, %arg3: memref<32x32xf32, #tpu.memory_space<vmem>>, %arg4: memref<1x32xf32, #tpu.memory_space<vmem>>, %arg5: memref<32x32xf32, #tpu.memory_space<vmem>>, %arg6: memref<1x32xf32, #tpu.memory_space<vmem>>, %arg7: memref<32x32xf32, #tpu.memory_space<vmem>>, %arg8: memref<1x32xf32, #tpu.memory_space<vmem>>, %arg9: memref<32x32xf32, #tpu.memory_space<vmem>>, %arg10: memref<32x32xf32, #tpu.memory_space<vmem>>, %arg11: memref<32x32xf32, #tpu.memory_space<vmem>>, %arg12: memref<32x32xf32, #tpu.memory_space<vmem>>, %arg13: memref<32x32xf32, #tpu.memory_space<vmem>>, %arg14: memref<32x32xf32, #tpu.memory_space<vmem>>, %arg15: memref<1x32xf32, #tpu.memory_space<vmem>>, %arg16: memref<1x32xf32, #tpu.memory_space<vmem>>, %arg17: memref<1x32xf32, #tpu.memory_space<vmem>>, %arg18: memref<1x32xf32, #tpu.memory_space<vmem>>, %arg19: memref<32x64xf32, #tpu.memory_space<vmem>>, %arg20: memref<1x64xf32, #tpu.memory_space<vmem>>, %arg21: memref<64x32xf32, #tpu.memory_space<vmem>>, %arg22: memref<1x32xf32, #tpu.memory_space<vmem>>, %arg23: memref<2x8x32xf32, #tpu.memory_space<vmem>>) attributes {dimension_semantics = [#tpu.dimension_semantics<parallel>], iteration_bounds = array<i64: 1>, scalar_prefetch = 0 : i64, scratch_operands = 0 : i64, tpu.core_type = #tpu.core_type<tc>, window_params = [{transform_indices = @transform_0, window_bounds = array<i64: 2, 64, 32>}, {transform_indices = @transform_1, window_bounds = array<i64: 2, 8, 32>}, {pipeline_mode = #tpu.pipeline_mode<synchronous>, transform_indices = @transform_2, window_bounds = array<i64: 32, 32>}, {pipeline_mode = #tpu.pipeline_mode<synchronous>, transform_indices = @transform_3, window_bounds = array<i64: 1, 32>}, {pipeline_mode = #tpu.pipeline_mode<synchronous>, transform_indices = @transform_4, window_bounds = array<i64: 32, 32>}, {pipeline_mode = #tpu.pipeline_mode<synchronous>, transform_indices = @transform_5, window_bounds = array<i64: 1, 32>}, {pipeline_mode = #tpu.pipeline_mode<synchronous>, transform_indices = @transform_6, window_bounds = array<i64: 32, 32>}, {pipeline_mode = #tpu.pipeline_mode<synchronous>, transform_indices = @transform_7, window_bounds = array<i64: 1, 32>}, {pipeline_mode = #tpu.pipeline_mode<synchronous>, transform_indices = @transform_8, window_bounds = array<i64: 32, 32>}, {pipeline_mode = #tpu.pipeline_mode<synchronous>, transform_indices = @transform_9, window_bounds = array<i64: 32, 32>}, {pipeline_mode = #tpu.pipeline_mode<synchronous>, transform_indices = @transform_10, window_bounds = array<i64: 32, 32>}, {pipeline_mode = #tpu.pipeline_mode<synchronous>, transform_indices = @transform_11, window_bounds = array<i64: 32, 32>}, {pipeline_mode = #tpu.pipeline_mode<synchronous>, transform_indices = @transform_12, window_bounds = array<i64: 32, 32>}, {pipeline_mode = #tpu.pipeline_mode<synchronous>, transform_indices = @transform_13, window_bounds = array<i64: 32, 32>}, {pipeline_mode = #tpu.pipeline_mode<synchronous>, transform_indices = @transform_14, window_bounds = array<i64: 1, 32>}, {pipeline_mode = #tpu.pipeline_mode<synchronous>, transform_indices = @transform_15, window_bounds = array<i64: 1, 32>}, {pipeline_mode = #tpu.pipeline_mode<synchronous>, transform_indices = @transform_16, window_bounds = array<i64: 1, 32>}, {pipeline_mode = #tpu.pipeline_mode<synchronous>, transform_indices = @transform_17, window_bounds = array<i64: 1, 32>}, {pipeline_mode = #tpu.pipeline_mode<synchronous>, transform_indices = @transform_18, window_bounds = array<i64: 32, 64>}, {pipeline_mode = #tpu.pipeline_mode<synchronous>, transform_indices = @transform_19, window_bounds = array<i64: 1, 64>}, {pipeline_mode = #tpu.pipeline_mode<synchronous>, transform_indices = @transform_20, window_bounds = array<i64: 64, 32>}, {pipeline_mode = #tpu.pipeline_mode<synchronous>, transform_indices = @transform_21, window_bounds = array<i64: 1, 32>}, {transform_indices = @transform_22, window_bounds = array<i64: 2, 8, 32>}]} {
    %c0 = arith.constant 0 : index
    %c0_0 = arith.constant 0 : index
    %0 = vector.load %arg3[%c0, %c0_0] : memref<32x32xf32, #tpu.memory_space<vmem>>, vector<32x32xf32>
    %c0_1 = arith.constant 0 : index
    %c0_2 = arith.constant 0 : index
    %1 = vector.load %arg4[%c0_1, %c0_2] : memref<1x32xf32, #tpu.memory_space<vmem>>, vector<1x32xf32>
    %c0_3 = arith.constant 0 : index
    %c0_4 = arith.constant 0 : index
    %2 = vector.load %arg5[%c0_3, %c0_4] : memref<32x32xf32, #tpu.memory_space<vmem>>, vector<32x32xf32>
    %c0_5 = arith.constant 0 : index
    %c0_6 = arith.constant 0 : index
    %3 = vector.load %arg6[%c0_5, %c0_6] : memref<1x32xf32, #tpu.memory_space<vmem>>, vector<1x32xf32>
    %c0_7 = arith.constant 0 : index
    %c0_8 = arith.constant 0 : index
    %4 = vector.load %arg7[%c0_7, %c0_8] : memref<32x32xf32, #tpu.memory_space<vmem>>, vector<32x32xf32>
    %c0_9 = arith.constant 0 : index
    %c0_10 = arith.constant 0 : index
    %5 = vector.load %arg8[%c0_9, %c0_10] : memref<1x32xf32, #tpu.memory_space<vmem>>, vector<1x32xf32>
    %c0_11 = arith.constant 0 : index
    %c0_12 = arith.constant 0 : index
    %6 = vector.load %arg9[%c0_11, %c0_12] : memref<32x32xf32, #tpu.memory_space<vmem>>, vector<32x32xf32>
    %c0_13 = arith.constant 0 : index
    %c0_14 = arith.constant 0 : index
    %7 = vector.load %arg10[%c0_13, %c0_14] : memref<32x32xf32, #tpu.memory_space<vmem>>, vector<32x32xf32>
    %c0_15 = arith.constant 0 : index
    %c0_16 = arith.constant 0 : index
    %8 = vector.load %arg11[%c0_15, %c0_16] : memref<32x32xf32, #tpu.memory_space<vmem>>, vector<32x32xf32>
    %c0_17 = arith.constant 0 : index
    %c0_18 = arith.constant 0 : index
    %9 = vector.load %arg12[%c0_17, %c0_18] : memref<32x32xf32, #tpu.memory_space<vmem>>, vector<32x32xf32>
    %c0_19 = arith.constant 0 : index
    %c0_20 = arith.constant 0 : index
    %10 = vector.load %arg13[%c0_19, %c0_20] : memref<32x32xf32, #tpu.memory_space<vmem>>, vector<32x32xf32>
    %c0_21 = arith.constant 0 : index
    %c0_22 = arith.constant 0 : index
    %11 = vector.load %arg14[%c0_21, %c0_22] : memref<32x32xf32, #tpu.memory_space<vmem>>, vector<32x32xf32>
    %c0_23 = arith.constant 0 : index
    %c0_24 = arith.constant 0 : index
    %12 = vector.load %arg15[%c0_23, %c0_24] : memref<1x32xf32, #tpu.memory_space<vmem>>, vector<1x32xf32>
    %c0_25 = arith.constant 0 : index
    %c0_26 = arith.constant 0 : index
    %13 = vector.load %arg16[%c0_25, %c0_26] : memref<1x32xf32, #tpu.memory_space<vmem>>, vector<1x32xf32>
    %c0_27 = arith.constant 0 : index
    %c0_28 = arith.constant 0 : index
    %14 = vector.load %arg17[%c0_27, %c0_28] : memref<1x32xf32, #tpu.memory_space<vmem>>, vector<1x32xf32>
    %c0_29 = arith.constant 0 : index
    %c0_30 = arith.constant 0 : index
    %15 = vector.load %arg18[%c0_29, %c0_30] : memref<1x32xf32, #tpu.memory_space<vmem>>, vector<1x32xf32>
    %c0_31 = arith.constant 0 : index
    %c0_32 = arith.constant 0 : index
    %16 = vector.load %arg19[%c0_31, %c0_32] : memref<32x64xf32, #tpu.memory_space<vmem>>, vector<32x64xf32>
    %c0_33 = arith.constant 0 : index
    %c0_34 = arith.constant 0 : index
    %17 = vector.load %arg20[%c0_33, %c0_34] : memref<1x64xf32, #tpu.memory_space<vmem>>, vector<1x64xf32>
    %c0_35 = arith.constant 0 : index
    %c0_36 = arith.constant 0 : index
    %18 = vector.load %arg21[%c0_35, %c0_36] : memref<64x32xf32, #tpu.memory_space<vmem>>, vector<64x32xf32>
    %c0_37 = arith.constant 0 : index
    %c0_38 = arith.constant 0 : index
    %19 = vector.load %arg22[%c0_37, %c0_38] : memref<1x32xf32, #tpu.memory_space<vmem>>, vector<1x32xf32>
    %c0_39 = arith.constant 0 : index
    %c0_40 = arith.constant 0 : index
    %c0_41 = arith.constant 0 : index
    %20 = vector.load %arg1[%c0_39, %c0_40, %c0_41] : memref<2x64x32xf32, #tpu.memory_space<vmem>>, vector<2x64x32xf32>
    %21 = vector.shape_cast %20 : vector<2x64x32xf32> to vector<128x32xf32>
    %cst = arith.constant dense<0.000000e+00> : vector<128xf32>
    %22 = vector.multi_reduction <add>, %21, %cst [1] : vector<128x32xf32> to vector<128xf32>
    %23 = vector.shape_cast %22 : vector<128xf32> to vector<128x1xf32>
    %cst_42 = arith.constant 3.200000e+01 : f32
    %24 = vector.broadcast %cst_42 : f32 to vector<128x1xf32>
    %25 = arith.divf %23, %24 : vector<128x1xf32>
    %26 = vector.broadcast %25 : vector<128x1xf32> to vector<128x32xf32>
    %27 = arith.subf %21, %26 : vector<128x32xf32>
    %28 = arith.mulf %27, %27 : vector<128x32xf32>
    %cst_43 = arith.constant dense<0.000000e+00> : vector<128xf32>
    %29 = vector.multi_reduction <add>, %28, %cst_43 [1] : vector<128x32xf32> to vector<128xf32>
    %30 = vector.shape_cast %29 : vector<128xf32> to vector<128x1xf32>
    %cst_44 = arith.constant 3.200000e+01 : f32
    %31 = vector.broadcast %cst_44 : f32 to vector<128x1xf32>
    %32 = arith.divf %30, %31 : vector<128x1xf32>
    %33 = vector.broadcast %25 : vector<128x1xf32> to vector<128x32xf32>
    %34 = arith.subf %21, %33 : vector<128x32xf32>
    %cst_45 = arith.constant 9.99999974E-6 : f32
    %35 = vector.broadcast %cst_45 : f32 to vector<128x1xf32>
    %36 = arith.addf %32, %35 : vector<128x1xf32>
    %37 = math.rsqrt %36 : vector<128x1xf32>
    %38 = vector.broadcast %37 : vector<128x1xf32> to vector<128x32xf32>
    %39 = arith.mulf %34, %38 : vector<128x32xf32>
    %cst_46 = arith.constant dense<0.000000e+00> : vector<128x32xf32>
    %40 = tpu.matmul %39, %0, %cst_46 {dimension_numbers = #tpu.dot_dimension_numbers<[1], [0], [0], [1], [0, 0, 1, 1], [], []>} : vector<128x32xf32>, vector<32x32xf32>, vector<128x32xf32> -> vector<128x32xf32>
    %41 = vector.broadcast %1 : vector<1x32xf32> to vector<128x32xf32>
    %42 = arith.addf %40, %41 : vector<128x32xf32>
    %43 = vector.shape_cast %42 : vector<128x32xf32> to vector<2x64x32xf32>
    %cst_47 = arith.constant dense<0.000000e+00> : vector<128x32xf32>
    %44 = tpu.matmul %39, %2, %cst_47 {dimension_numbers = #tpu.dot_dimension_numbers<[1], [0], [0], [1], [0, 0, 1, 1], [], []>} : vector<128x32xf32>, vector<32x32xf32>, vector<128x32xf32> -> vector<128x32xf32>
    %45 = vector.broadcast %3 : vector<1x32xf32> to vector<128x32xf32>
    %46 = arith.addf %44, %45 : vector<128x32xf32>
    %47 = vector.shape_cast %46 : vector<128x32xf32> to vector<2x64x32xf32>
    %c0_48 = arith.constant 0 : index
    %c0_49 = arith.constant 0 : index
    %c0_50 = arith.constant 0 : index
    %48 = vector.load %arg2[%c0_48, %c0_49, %c0_50] : memref<2x8x32xf32, #tpu.memory_space<vmem>>, vector<2x8x32xf32>
    %49 = vector.shape_cast %48 : vector<2x8x32xf32> to vector<16x32xf32>
    %cst_51 = arith.constant dense<0.000000e+00> : vector<16xf32>
    %50 = vector.multi_reduction <add>, %49, %cst_51 [1] : vector<16x32xf32> to vector<16xf32>
    %51 = vector.shape_cast %50 : vector<16xf32> to vector<16x1xf32>
    %cst_52 = arith.constant 3.200000e+01 : f32
    %52 = vector.broadcast %cst_52 : f32 to vector<16x1xf32>
    %53 = arith.divf %51, %52 : vector<16x1xf32>
    %54 = vector.broadcast %53 : vector<16x1xf32> to vector<16x32xf32>
    %55 = arith.subf %49, %54 : vector<16x32xf32>
    %56 = arith.mulf %55, %55 : vector<16x32xf32>
    %cst_53 = arith.constant dense<0.000000e+00> : vector<16xf32>
    %57 = vector.multi_reduction <add>, %56, %cst_53 [1] : vector<16x32xf32> to vector<16xf32>
    %58 = vector.shape_cast %57 : vector<16xf32> to vector<16x1xf32>
    %cst_54 = arith.constant 3.200000e+01 : f32
    %59 = vector.broadcast %cst_54 : f32 to vector<16x1xf32>
    %60 = arith.divf %58, %59 : vector<16x1xf32>
    %61 = vector.broadcast %53 : vector<16x1xf32> to vector<16x32xf32>
    %62 = arith.subf %49, %61 : vector<16x32xf32>
    %cst_55 = arith.constant 9.99999974E-6 : f32
    %63 = vector.broadcast %cst_55 : f32 to vector<16x1xf32>
    %64 = arith.addf %60, %63 : vector<16x1xf32>
    %65 = math.rsqrt %64 : vector<16x1xf32>
    %66 = vector.broadcast %65 : vector<16x1xf32> to vector<16x32xf32>
    %67 = arith.mulf %62, %66 : vector<16x32xf32>
    %cst_56 = arith.constant dense<0.000000e+00> : vector<16x32xf32>
    %68 = tpu.matmul %67, %4, %cst_56 {dimension_numbers = #tpu.dot_dimension_numbers<[1], [0], [0], [1], [0, 0, 1, 1], [], []>} : vector<16x32xf32>, vector<32x32xf32>, vector<16x32xf32> -> vector<16x32xf32>
    %69 = vector.broadcast %5 : vector<1x32xf32> to vector<16x32xf32>
    %70 = arith.addf %68, %69 : vector<16x32xf32>
    %71 = vector.shape_cast %70 : vector<16x32xf32> to vector<2x8x32xf32>
    "tpu.trace_start"() <{level = 10 : i32, message = "bmd,bnd->bmn"}> : () -> ()
    %cst_57 = arith.constant dense<0.000000e+00> : vector<2x8x64xf32>
    %72 = tpu.matmul %71, %43, %cst_57 {dimension_numbers = #tpu.dot_dimension_numbers<[2], [2], [1], [1], [0, 0, 0, 1, 1, 1], [0], [0]>} : vector<2x8x32xf32>, vector<2x64x32xf32>, vector<2x8x64xf32> -> vector<2x8x64xf32>
    "tpu.trace_stop"() : () -> ()
    %cst_58 = arith.constant dense<0xFF800000> : vector<2x64xf32>
    %73 = vector.multi_reduction <maximumf>, %72, %cst_58 [1] : vector<2x8x64xf32> to vector<2x64xf32>
    %74 = vector.shape_cast %73 : vector<2x64xf32> to vector<2x1x64xf32>
    %75 = vector.broadcast %74 : vector<2x1x64xf32> to vector<2x8x64xf32>
    %76 = arith.subf %72, %75 : vector<2x8x64xf32>
    %77 = math.exp %76 : vector<2x8x64xf32>
    %cst_59 = arith.constant dense<0.000000e+00> : vector<2x64xf32>
    %78 = vector.multi_reduction <add>, %77, %cst_59 [1] : vector<2x8x64xf32> to vector<2x64xf32>
    %79 = vector.shape_cast %78 : vector<2x64xf32> to vector<2x1x64xf32>
    %80 = tpu.reciprocal %79 {approx = true} : vector<2x1x64xf32> -> vector<2x1x64xf32>
    %81 = vector.broadcast %80 : vector<2x1x64xf32> to vector<2x8x64xf32>
    %82 = arith.mulf %77, %81 : vector<2x8x64xf32>
    %cst_60 = arith.constant 9.99999997E-7 : f32
    %83 = vector.broadcast %cst_60 : f32 to vector<2x8x64xf32>
    %84 = arith.addf %82, %83 : vector<2x8x64xf32>
    %cst_61 = arith.constant dense<0.000000e+00> : vector<2x8xf32>
    %85 = vector.multi_reduction <add>, %84, %cst_61 [2] : vector<2x8x64xf32> to vector<2x8xf32>
    %86 = vector.shape_cast %85 : vector<2x8xf32> to vector<2x8x1xf32>
    %87 = tpu.reciprocal %86 {approx = true} : vector<2x8x1xf32> -> vector<2x8x1xf32>
    %88 = vector.broadcast %87 : vector<2x8x1xf32> to vector<2x8x64xf32>
    %89 = arith.mulf %84, %88 : vector<2x8x64xf32>
    "tpu.trace_start"() <{level = 10 : i32, message = "bmn,bnd->bmd"}> : () -> ()
    %cst_62 = arith.constant dense<0.000000e+00> : vector<2x8x32xf32>
    %90 = tpu.matmul %89, %47, %cst_62 {dimension_numbers = #tpu.dot_dimension_numbers<[2], [1], [1], [2], [0, 0, 0, 1, 1, 2], [0], [0]>} : vector<2x8x64xf32>, vector<2x64x32xf32>, vector<2x8x32xf32> -> vector<2x8x32xf32>
    "tpu.trace_stop"() : () -> ()
    %91 = vector.shape_cast %90 : vector<2x8x32xf32> to vector<16x32xf32>
    %cst_63 = arith.constant dense<0.000000e+00> : vector<16x32xf32>
    %92 = tpu.matmul %91, %6, %cst_63 {dimension_numbers = #tpu.dot_dimension_numbers<[1], [0], [0], [1], [0, 0, 1, 1], [], []>} : vector<16x32xf32>, vector<32x32xf32>, vector<16x32xf32> -> vector<16x32xf32>
    %cst_64 = arith.constant dense<0.000000e+00> : vector<16x32xf32>
    %93 = tpu.matmul %49, %9, %cst_64 {dimension_numbers = #tpu.dot_dimension_numbers<[1], [0], [0], [1], [0, 0, 1, 1], [], []>} : vector<16x32xf32>, vector<32x32xf32>, vector<16x32xf32> -> vector<16x32xf32>
    %94 = arith.addf %92, %93 : vector<16x32xf32>
    %95 = vector.broadcast %12 : vector<1x32xf32> to vector<16x32xf32>
    %96 = arith.addf %94, %95 : vector<16x32xf32>
    %97 = arith.negf %96 : vector<16x32xf32>
    %98 = math.exp %97 : vector<16x32xf32>
    %cst_65 = arith.constant 1.000000e+00 : f32
    %99 = vector.broadcast %cst_65 : f32 to vector<16x32xf32>
    %100 = arith.addf %99, %98 : vector<16x32xf32>
    %101 = arith.divf %99, %100 : vector<16x32xf32>
    %cst_66 = arith.constant dense<0.000000e+00> : vector<16x32xf32>
    %102 = tpu.matmul %91, %7, %cst_66 {dimension_numbers = #tpu.dot_dimension_numbers<[1], [0], [0], [1], [0, 0, 1, 1], [], []>} : vector<16x32xf32>, vector<32x32xf32>, vector<16x32xf32> -> vector<16x32xf32>
    %cst_67 = arith.constant dense<0.000000e+00> : vector<16x32xf32>
    %103 = tpu.matmul %49, %10, %cst_67 {dimension_numbers = #tpu.dot_dimension_numbers<[1], [0], [0], [1], [0, 0, 1, 1], [], []>} : vector<16x32xf32>, vector<32x32xf32>, vector<16x32xf32> -> vector<16x32xf32>
    %104 = arith.addf %102, %103 : vector<16x32xf32>
    %105 = vector.broadcast %13 : vector<1x32xf32> to vector<16x32xf32>
    %106 = arith.addf %104, %105 : vector<16x32xf32>
    %107 = arith.negf %106 : vector<16x32xf32>
    %108 = math.exp %107 : vector<16x32xf32>
    %cst_68 = arith.constant 1.000000e+00 : f32
    %109 = vector.broadcast %cst_68 : f32 to vector<16x32xf32>
    %110 = arith.addf %109, %108 : vector<16x32xf32>
    %111 = arith.divf %109, %110 : vector<16x32xf32>
    %cst_69 = arith.constant dense<0.000000e+00> : vector<16x32xf32>
    %112 = tpu.matmul %91, %8, %cst_69 {dimension_numbers = #tpu.dot_dimension_numbers<[1], [0], [0], [1], [0, 0, 1, 1], [], []>} : vector<16x32xf32>, vector<32x32xf32>, vector<16x32xf32> -> vector<16x32xf32>
    %113 = vector.broadcast %14 : vector<1x32xf32> to vector<16x32xf32>
    %114 = arith.addf %112, %113 : vector<16x32xf32>
    %cst_70 = arith.constant dense<0.000000e+00> : vector<16x32xf32>
    %115 = tpu.matmul %49, %11, %cst_70 {dimension_numbers = #tpu.dot_dimension_numbers<[1], [0], [0], [1], [0, 0, 1, 1], [], []>} : vector<16x32xf32>, vector<32x32xf32>, vector<16x32xf32> -> vector<16x32xf32>
    %116 = vector.broadcast %15 : vector<1x32xf32> to vector<16x32xf32>
    %117 = arith.addf %115, %116 : vector<16x32xf32>
    %118 = arith.mulf %101, %117 : vector<16x32xf32>
    %119 = arith.addf %114, %118 : vector<16x32xf32>
    %120 = math.tanh %119 : vector<16x32xf32>
    %cst_71 = arith.constant 1.000000e+00 : f32
    %121 = vector.broadcast %cst_71 : f32 to vector<16x32xf32>
    %122 = arith.subf %121, %111 : vector<16x32xf32>
    %123 = arith.mulf %122, %120 : vector<16x32xf32>
    %124 = arith.mulf %111, %49 : vector<16x32xf32>
    %125 = arith.addf %123, %124 : vector<16x32xf32>
    %cst_72 = arith.constant dense<0.000000e+00> : vector<16xf32>
    %126 = vector.multi_reduction <add>, %125, %cst_72 [1] : vector<16x32xf32> to vector<16xf32>
    %127 = vector.shape_cast %126 : vector<16xf32> to vector<16x1xf32>
    %cst_73 = arith.constant 3.200000e+01 : f32
    %128 = vector.broadcast %cst_73 : f32 to vector<16x1xf32>
    %129 = arith.divf %127, %128 : vector<16x1xf32>
    %130 = vector.broadcast %129 : vector<16x1xf32> to vector<16x32xf32>
    %131 = arith.subf %125, %130 : vector<16x32xf32>
    %132 = arith.mulf %131, %131 : vector<16x32xf32>
    %cst_74 = arith.constant dense<0.000000e+00> : vector<16xf32>
    %133 = vector.multi_reduction <add>, %132, %cst_74 [1] : vector<16x32xf32> to vector<16xf32>
    %134 = vector.shape_cast %133 : vector<16xf32> to vector<16x1xf32>
    %cst_75 = arith.constant 3.200000e+01 : f32
    %135 = vector.broadcast %cst_75 : f32 to vector<16x1xf32>
    %136 = arith.divf %134, %135 : vector<16x1xf32>
    %137 = vector.broadcast %129 : vector<16x1xf32> to vector<16x32xf32>
    %138 = arith.subf %125, %137 : vector<16x32xf32>
    %cst_76 = arith.constant 9.99999974E-6 : f32
    %139 = vector.broadcast %cst_76 : f32 to vector<16x1xf32>
    %140 = arith.addf %136, %139 : vector<16x1xf32>
    %141 = math.rsqrt %140 : vector<16x1xf32>
    %142 = vector.broadcast %141 : vector<16x1xf32> to vector<16x32xf32>
    %143 = arith.mulf %138, %142 : vector<16x32xf32>
    %cst_77 = arith.constant dense<0.000000e+00> : vector<16x64xf32>
    %144 = tpu.matmul %143, %16, %cst_77 {dimension_numbers = #tpu.dot_dimension_numbers<[1], [0], [0], [1], [0, 0, 1, 1], [], []>} : vector<16x32xf32>, vector<32x64xf32>, vector<16x64xf32> -> vector<16x64xf32>
    %145 = vector.broadcast %17 : vector<1x64xf32> to vector<16x64xf32>
    %146 = arith.addf %144, %145 : vector<16x64xf32>
    %cst_78 = arith.constant 0.000000e+00 : f32
    %147 = vector.broadcast %cst_78 : f32 to vector<16x64xf32>
    %148 = arith.maximumf %146, %147 : vector<16x64xf32>
    %cst_79 = arith.constant dense<0.000000e+00> : vector<16x32xf32>
    %149 = tpu.matmul %148, %18, %cst_79 {dimension_numbers = #tpu.dot_dimension_numbers<[1], [0], [0], [1], [0, 0, 1, 1], [], []>} : vector<16x64xf32>, vector<64x32xf32>, vector<16x32xf32> -> vector<16x32xf32>
    %150 = vector.broadcast %19 : vector<1x32xf32> to vector<16x32xf32>
    %151 = arith.addf %149, %150 : vector<16x32xf32>
    %152 = arith.addf %125, %151 : vector<16x32xf32>
    %cst_80 = arith.constant dense<0.000000e+00> : vector<16xf32>
    %153 = vector.multi_reduction <add>, %152, %cst_80 [1] : vector<16x32xf32> to vector<16xf32>
    %154 = vector.shape_cast %153 : vector<16xf32> to vector<16x1xf32>
    %cst_81 = arith.constant 3.200000e+01 : f32
    %155 = vector.broadcast %cst_81 : f32 to vector<16x1xf32>
    %156 = arith.divf %154, %155 : vector<16x1xf32>
    %157 = vector.broadcast %156 : vector<16x1xf32> to vector<16x32xf32>
    %158 = arith.subf %152, %157 : vector<16x32xf32>
    %159 = arith.mulf %158, %158 : vector<16x32xf32>
    %cst_82 = arith.constant dense<0.000000e+00> : vector<16xf32>
    %160 = vector.multi_reduction <add>, %159, %cst_82 [1] : vector<16x32xf32> to vector<16xf32>
    %161 = vector.shape_cast %160 : vector<16xf32> to vector<16x1xf32>
    %cst_83 = arith.constant 3.200000e+01 : f32
    %162 = vector.broadcast %cst_83 : f32 to vector<16x1xf32>
    %163 = arith.divf %161, %162 : vector<16x1xf32>
    %164 = vector.broadcast %156 : vector<16x1xf32> to vector<16x32xf32>
    %165 = arith.subf %152, %164 : vector<16x32xf32>
    %cst_84 = arith.constant 9.99999974E-6 : f32
    %166 = vector.broadcast %cst_84 : f32 to vector<16x1xf32>
    %167 = arith.addf %163, %166 : vector<16x1xf32>
    %168 = math.rsqrt %167 : vector<16x1xf32>
    %169 = vector.broadcast %168 : vector<16x1xf32> to vector<16x32xf32>
    %170 = arith.mulf %165, %169 : vector<16x32xf32>
    %cst_85 = arith.constant dense<0.000000e+00> : vector<16x32xf32>
    %171 = tpu.matmul %170, %4, %cst_85 {dimension_numbers = #tpu.dot_dimension_numbers<[1], [0], [0], [1], [0, 0, 1, 1], [], []>} : vector<16x32xf32>, vector<32x32xf32>, vector<16x32xf32> -> vector<16x32xf32>
    %172 = vector.broadcast %5 : vector<1x32xf32> to vector<16x32xf32>
    %173 = arith.addf %171, %172 : vector<16x32xf32>
    %174 = vector.shape_cast %173 : vector<16x32xf32> to vector<2x8x32xf32>
    "tpu.trace_start"() <{level = 10 : i32, message = "bmd,bnd->bmn"}> : () -> ()
    %cst_86 = arith.constant dense<0.000000e+00> : vector<2x8x64xf32>
    %175 = tpu.matmul %174, %43, %cst_86 {dimension_numbers = #tpu.dot_dimension_numbers<[2], [2], [1], [1], [0, 0, 0, 1, 1, 1], [0], [0]>} : vector<2x8x32xf32>, vector<2x64x32xf32>, vector<2x8x64xf32> -> vector<2x8x64xf32>
    "tpu.trace_stop"() : () -> ()
    %cst_87 = arith.constant dense<0xFF800000> : vector<2x64xf32>
    %176 = vector.multi_reduction <maximumf>, %175, %cst_87 [1] : vector<2x8x64xf32> to vector<2x64xf32>
    %177 = vector.shape_cast %176 : vector<2x64xf32> to vector<2x1x64xf32>
    %178 = vector.broadcast %177 : vector<2x1x64xf32> to vector<2x8x64xf32>
    %179 = arith.subf %175, %178 : vector<2x8x64xf32>
    %180 = math.exp %179 : vector<2x8x64xf32>
    %cst_88 = arith.constant dense<0.000000e+00> : vector<2x64xf32>
    %181 = vector.multi_reduction <add>, %180, %cst_88 [1] : vector<2x8x64xf32> to vector<2x64xf32>
    %182 = vector.shape_cast %181 : vector<2x64xf32> to vector<2x1x64xf32>
    %183 = tpu.reciprocal %182 {approx = true} : vector<2x1x64xf32> -> vector<2x1x64xf32>
    %184 = vector.broadcast %183 : vector<2x1x64xf32> to vector<2x8x64xf32>
    %185 = arith.mulf %180, %184 : vector<2x8x64xf32>
    %cst_89 = arith.constant 9.99999997E-7 : f32
    %186 = vector.broadcast %cst_89 : f32 to vector<2x8x64xf32>
    %187 = arith.addf %185, %186 : vector<2x8x64xf32>
    %cst_90 = arith.constant dense<0.000000e+00> : vector<2x8xf32>
    %188 = vector.multi_reduction <add>, %187, %cst_90 [2] : vector<2x8x64xf32> to vector<2x8xf32>
    %189 = vector.shape_cast %188 : vector<2x8xf32> to vector<2x8x1xf32>
    %190 = tpu.reciprocal %189 {approx = true} : vector<2x8x1xf32> -> vector<2x8x1xf32>
    %191 = vector.broadcast %190 : vector<2x8x1xf32> to vector<2x8x64xf32>
    %192 = arith.mulf %187, %191 : vector<2x8x64xf32>
    "tpu.trace_start"() <{level = 10 : i32, message = "bmn,bnd->bmd"}> : () -> ()
    %cst_91 = arith.constant dense<0.000000e+00> : vector<2x8x32xf32>
    %193 = tpu.matmul %192, %47, %cst_91 {dimension_numbers = #tpu.dot_dimension_numbers<[2], [1], [1], [2], [0, 0, 0, 1, 1, 2], [0], [0]>} : vector<2x8x64xf32>, vector<2x64x32xf32>, vector<2x8x32xf32> -> vector<2x8x32xf32>
    "tpu.trace_stop"() : () -> ()
    %194 = vector.shape_cast %193 : vector<2x8x32xf32> to vector<16x32xf32>
    %cst_92 = arith.constant dense<0.000000e+00> : vector<16x32xf32>
    %195 = tpu.matmul %194, %6, %cst_92 {dimension_numbers = #tpu.dot_dimension_numbers<[1], [0], [0], [1], [0, 0, 1, 1], [], []>} : vector<16x32xf32>, vector<32x32xf32>, vector<16x32xf32> -> vector<16x32xf32>
    %cst_93 = arith.constant dense<0.000000e+00> : vector<16x32xf32>
    %196 = tpu.matmul %152, %9, %cst_93 {dimension_numbers = #tpu.dot_dimension_numbers<[1], [0], [0], [1], [0, 0, 1, 1], [], []>} : vector<16x32xf32>, vector<32x32xf32>, vector<16x32xf32> -> vector<16x32xf32>
    %197 = arith.addf %195, %196 : vector<16x32xf32>
    %198 = vector.broadcast %12 : vector<1x32xf32> to vector<16x32xf32>
    %199 = arith.addf %197, %198 : vector<16x32xf32>
    %200 = arith.negf %199 : vector<16x32xf32>
    %201 = math.exp %200 : vector<16x32xf32>
    %cst_94 = arith.constant 1.000000e+00 : f32
    %202 = vector.broadcast %cst_94 : f32 to vector<16x32xf32>
    %203 = arith.addf %202, %201 : vector<16x32xf32>
    %204 = arith.divf %202, %203 : vector<16x32xf32>
    %cst_95 = arith.constant dense<0.000000e+00> : vector<16x32xf32>
    %205 = tpu.matmul %194, %7, %cst_95 {dimension_numbers = #tpu.dot_dimension_numbers<[1], [0], [0], [1], [0, 0, 1, 1], [], []>} : vector<16x32xf32>, vector<32x32xf32>, vector<16x32xf32> -> vector<16x32xf32>
    %cst_96 = arith.constant dense<0.000000e+00> : vector<16x32xf32>
    %206 = tpu.matmul %152, %10, %cst_96 {dimension_numbers = #tpu.dot_dimension_numbers<[1], [0], [0], [1], [0, 0, 1, 1], [], []>} : vector<16x32xf32>, vector<32x32xf32>, vector<16x32xf32> -> vector<16x32xf32>
    %207 = arith.addf %205, %206 : vector<16x32xf32>
    %208 = vector.broadcast %13 : vector<1x32xf32> to vector<16x32xf32>
    %209 = arith.addf %207, %208 : vector<16x32xf32>
    %210 = arith.negf %209 : vector<16x32xf32>
    %211 = math.exp %210 : vector<16x32xf32>
    %cst_97 = arith.constant 1.000000e+00 : f32
    %212 = vector.broadcast %cst_97 : f32 to vector<16x32xf32>
    %213 = arith.addf %212, %211 : vector<16x32xf32>
    %214 = arith.divf %212, %213 : vector<16x32xf32>
    %cst_98 = arith.constant dense<0.000000e+00> : vector<16x32xf32>
    %215 = tpu.matmul %194, %8, %cst_98 {dimension_numbers = #tpu.dot_dimension_numbers<[1], [0], [0], [1], [0, 0, 1, 1], [], []>} : vector<16x32xf32>, vector<32x32xf32>, vector<16x32xf32> -> vector<16x32xf32>
    %216 = vector.broadcast %14 : vector<1x32xf32> to vector<16x32xf32>
    %217 = arith.addf %215, %216 : vector<16x32xf32>
    %cst_99 = arith.constant dense<0.000000e+00> : vector<16x32xf32>
    %218 = tpu.matmul %152, %11, %cst_99 {dimension_numbers = #tpu.dot_dimension_numbers<[1], [0], [0], [1], [0, 0, 1, 1], [], []>} : vector<16x32xf32>, vector<32x32xf32>, vector<16x32xf32> -> vector<16x32xf32>
    %219 = vector.broadcast %15 : vector<1x32xf32> to vector<16x32xf32>
    %220 = arith.addf %218, %219 : vector<16x32xf32>
    %221 = arith.mulf %204, %220 : vector<16x32xf32>
    %222 = arith.addf %217, %221 : vector<16x32xf32>
    %223 = math.tanh %222 : vector<16x32xf32>
    %cst_100 = arith.constant 1.000000e+00 : f32
    %224 = vector.broadcast %cst_100 : f32 to vector<16x32xf32>
    %225 = arith.subf %224, %214 : vector<16x32xf32>
    %226 = arith.mulf %225, %223 : vector<16x32xf32>
    %227 = arith.mulf %214, %152 : vector<16x32xf32>
    %228 = arith.addf %226, %227 : vector<16x32xf32>
    %cst_101 = arith.constant dense<0.000000e+00> : vector<16xf32>
    %229 = vector.multi_reduction <add>, %228, %cst_101 [1] : vector<16x32xf32> to vector<16xf32>
    %230 = vector.shape_cast %229 : vector<16xf32> to vector<16x1xf32>
    %cst_102 = arith.constant 3.200000e+01 : f32
    %231 = vector.broadcast %cst_102 : f32 to vector<16x1xf32>
    %232 = arith.divf %230, %231 : vector<16x1xf32>
    %233 = vector.broadcast %232 : vector<16x1xf32> to vector<16x32xf32>
    %234 = arith.subf %228, %233 : vector<16x32xf32>
    %235 = arith.mulf %234, %234 : vector<16x32xf32>
    %cst_103 = arith.constant dense<0.000000e+00> : vector<16xf32>
    %236 = vector.multi_reduction <add>, %235, %cst_103 [1] : vector<16x32xf32> to vector<16xf32>
    %237 = vector.shape_cast %236 : vector<16xf32> to vector<16x1xf32>
    %cst_104 = arith.constant 3.200000e+01 : f32
    %238 = vector.broadcast %cst_104 : f32 to vector<16x1xf32>
    %239 = arith.divf %237, %238 : vector<16x1xf32>
    %240 = vector.broadcast %232 : vector<16x1xf32> to vector<16x32xf32>
    %241 = arith.subf %228, %240 : vector<16x32xf32>
    %cst_105 = arith.constant 9.99999974E-6 : f32
    %242 = vector.broadcast %cst_105 : f32 to vector<16x1xf32>
    %243 = arith.addf %239, %242 : vector<16x1xf32>
    %244 = math.rsqrt %243 : vector<16x1xf32>
    %245 = vector.broadcast %244 : vector<16x1xf32> to vector<16x32xf32>
    %246 = arith.mulf %241, %245 : vector<16x32xf32>
    %cst_106 = arith.constant dense<0.000000e+00> : vector<16x64xf32>
    %247 = tpu.matmul %246, %16, %cst_106 {dimension_numbers = #tpu.dot_dimension_numbers<[1], [0], [0], [1], [0, 0, 1, 1], [], []>} : vector<16x32xf32>, vector<32x64xf32>, vector<16x64xf32> -> vector<16x64xf32>
    %248 = vector.broadcast %17 : vector<1x64xf32> to vector<16x64xf32>
    %249 = arith.addf %247, %248 : vector<16x64xf32>
    %cst_107 = arith.constant 0.000000e+00 : f32
    %250 = vector.broadcast %cst_107 : f32 to vector<16x64xf32>
    %251 = arith.maximumf %249, %250 : vector<16x64xf32>
    %cst_108 = arith.constant dense<0.000000e+00> : vector<16x32xf32>
    %252 = tpu.matmul %251, %18, %cst_108 {dimension_numbers = #tpu.dot_dimension_numbers<[1], [0], [0], [1], [0, 0, 1, 1], [], []>} : vector<16x64xf32>, vector<64x32xf32>, vector<16x32xf32> -> vector<16x32xf32>
    %253 = vector.broadcast %19 : vector<1x32xf32> to vector<16x32xf32>
    %254 = arith.addf %252, %253 : vector<16x32xf32>
    %255 = arith.addf %228, %254 : vector<16x32xf32>
    %cst_109 = arith.constant dense<0.000000e+00> : vector<16xf32>
    %256 = vector.multi_reduction <add>, %255, %cst_109 [1] : vector<16x32xf32> to vector<16xf32>
    %257 = vector.shape_cast %256 : vector<16xf32> to vector<16x1xf32>
    %cst_110 = arith.constant 3.200000e+01 : f32
    %258 = vector.broadcast %cst_110 : f32 to vector<16x1xf32>
    %259 = arith.divf %257, %258 : vector<16x1xf32>
    %260 = vector.broadcast %259 : vector<16x1xf32> to vector<16x32xf32>
    %261 = arith.subf %255, %260 : vector<16x32xf32>
    %262 = arith.mulf %261, %261 : vector<16x32xf32>
    %cst_111 = arith.constant dense<0.000000e+00> : vector<16xf32>
    %263 = vector.multi_reduction <add>, %262, %cst_111 [1] : vector<16x32xf32> to vector<16xf32>
    %264 = vector.shape_cast %263 : vector<16xf32> to vector<16x1xf32>
    %cst_112 = arith.constant 3.200000e+01 : f32
    %265 = vector.broadcast %cst_112 : f32 to vector<16x1xf32>
    %266 = arith.divf %264, %265 : vector<16x1xf32>
    %267 = vector.broadcast %259 : vector<16x1xf32> to vector<16x32xf32>
    %268 = arith.subf %255, %267 : vector<16x32xf32>
    %cst_113 = arith.constant 9.99999974E-6 : f32
    %269 = vector.broadcast %cst_113 : f32 to vector<16x1xf32>
    %270 = arith.addf %266, %269 : vector<16x1xf32>
    %271 = math.rsqrt %270 : vector<16x1xf32>
    %272 = vector.broadcast %271 : vector<16x1xf32> to vector<16x32xf32>
    %273 = arith.mulf %268, %272 : vector<16x32xf32>
    %cst_114 = arith.constant dense<0.000000e+00> : vector<16x32xf32>
    %274 = tpu.matmul %273, %4, %cst_114 {dimension_numbers = #tpu.dot_dimension_numbers<[1], [0], [0], [1], [0, 0, 1, 1], [], []>} : vector<16x32xf32>, vector<32x32xf32>, vector<16x32xf32> -> vector<16x32xf32>
    %275 = vector.broadcast %5 : vector<1x32xf32> to vector<16x32xf32>
    %276 = arith.addf %274, %275 : vector<16x32xf32>
    %277 = vector.shape_cast %276 : vector<16x32xf32> to vector<2x8x32xf32>
    "tpu.trace_start"() <{level = 10 : i32, message = "bmd,bnd->bmn"}> : () -> ()
    %cst_115 = arith.constant dense<0.000000e+00> : vector<2x8x64xf32>
    %278 = tpu.matmul %277, %43, %cst_115 {dimension_numbers = #tpu.dot_dimension_numbers<[2], [2], [1], [1], [0, 0, 0, 1, 1, 1], [0], [0]>} : vector<2x8x32xf32>, vector<2x64x32xf32>, vector<2x8x64xf32> -> vector<2x8x64xf32>
    "tpu.trace_stop"() : () -> ()
    %cst_116 = arith.constant dense<0xFF800000> : vector<2x64xf32>
    %279 = vector.multi_reduction <maximumf>, %278, %cst_116 [1] : vector<2x8x64xf32> to vector<2x64xf32>
    %280 = vector.shape_cast %279 : vector<2x64xf32> to vector<2x1x64xf32>
    %281 = vector.broadcast %280 : vector<2x1x64xf32> to vector<2x8x64xf32>
    %282 = arith.subf %278, %281 : vector<2x8x64xf32>
    %283 = math.exp %282 : vector<2x8x64xf32>
    %cst_117 = arith.constant dense<0.000000e+00> : vector<2x64xf32>
    %284 = vector.multi_reduction <add>, %283, %cst_117 [1] : vector<2x8x64xf32> to vector<2x64xf32>
    %285 = vector.shape_cast %284 : vector<2x64xf32> to vector<2x1x64xf32>
    %286 = tpu.reciprocal %285 {approx = true} : vector<2x1x64xf32> -> vector<2x1x64xf32>
    %287 = vector.broadcast %286 : vector<2x1x64xf32> to vector<2x8x64xf32>
    %288 = arith.mulf %283, %287 : vector<2x8x64xf32>
    %cst_118 = arith.constant 9.99999997E-7 : f32
    %289 = vector.broadcast %cst_118 : f32 to vector<2x8x64xf32>
    %290 = arith.addf %288, %289 : vector<2x8x64xf32>
    %cst_119 = arith.constant dense<0.000000e+00> : vector<2x8xf32>
    %291 = vector.multi_reduction <add>, %290, %cst_119 [2] : vector<2x8x64xf32> to vector<2x8xf32>
    %292 = vector.shape_cast %291 : vector<2x8xf32> to vector<2x8x1xf32>
    %293 = tpu.reciprocal %292 {approx = true} : vector<2x8x1xf32> -> vector<2x8x1xf32>
    %294 = vector.broadcast %293 : vector<2x8x1xf32> to vector<2x8x64xf32>
    %295 = arith.mulf %290, %294 : vector<2x8x64xf32>
    "tpu.trace_start"() <{level = 10 : i32, message = "bmn,bnd->bmd"}> : () -> ()
    %cst_120 = arith.constant dense<0.000000e+00> : vector<2x8x32xf32>
    %296 = tpu.matmul %295, %47, %cst_120 {dimension_numbers = #tpu.dot_dimension_numbers<[2], [1], [1], [2], [0, 0, 0, 1, 1, 2], [0], [0]>} : vector<2x8x64xf32>, vector<2x64x32xf32>, vector<2x8x32xf32> -> vector<2x8x32xf32>
    "tpu.trace_stop"() : () -> ()
    %297 = vector.shape_cast %296 : vector<2x8x32xf32> to vector<16x32xf32>
    %cst_121 = arith.constant dense<0.000000e+00> : vector<16x32xf32>
    %298 = tpu.matmul %297, %6, %cst_121 {dimension_numbers = #tpu.dot_dimension_numbers<[1], [0], [0], [1], [0, 0, 1, 1], [], []>} : vector<16x32xf32>, vector<32x32xf32>, vector<16x32xf32> -> vector<16x32xf32>
    %cst_122 = arith.constant dense<0.000000e+00> : vector<16x32xf32>
    %299 = tpu.matmul %255, %9, %cst_122 {dimension_numbers = #tpu.dot_dimension_numbers<[1], [0], [0], [1], [0, 0, 1, 1], [], []>} : vector<16x32xf32>, vector<32x32xf32>, vector<16x32xf32> -> vector<16x32xf32>
    %300 = arith.addf %298, %299 : vector<16x32xf32>
    %301 = vector.broadcast %12 : vector<1x32xf32> to vector<16x32xf32>
    %302 = arith.addf %300, %301 : vector<16x32xf32>
    %303 = arith.negf %302 : vector<16x32xf32>
    %304 = math.exp %303 : vector<16x32xf32>
    %cst_123 = arith.constant 1.000000e+00 : f32
    %305 = vector.broadcast %cst_123 : f32 to vector<16x32xf32>
    %306 = arith.addf %305, %304 : vector<16x32xf32>
    %307 = arith.divf %305, %306 : vector<16x32xf32>
    %cst_124 = arith.constant dense<0.000000e+00> : vector<16x32xf32>
    %308 = tpu.matmul %297, %7, %cst_124 {dimension_numbers = #tpu.dot_dimension_numbers<[1], [0], [0], [1], [0, 0, 1, 1], [], []>} : vector<16x32xf32>, vector<32x32xf32>, vector<16x32xf32> -> vector<16x32xf32>
    %cst_125 = arith.constant dense<0.000000e+00> : vector<16x32xf32>
    %309 = tpu.matmul %255, %10, %cst_125 {dimension_numbers = #tpu.dot_dimension_numbers<[1], [0], [0], [1], [0, 0, 1, 1], [], []>} : vector<16x32xf32>, vector<32x32xf32>, vector<16x32xf32> -> vector<16x32xf32>
    %310 = arith.addf %308, %309 : vector<16x32xf32>
    %311 = vector.broadcast %13 : vector<1x32xf32> to vector<16x32xf32>
    %312 = arith.addf %310, %311 : vector<16x32xf32>
    %313 = arith.negf %312 : vector<16x32xf32>
    %314 = math.exp %313 : vector<16x32xf32>
    %cst_126 = arith.constant 1.000000e+00 : f32
    %315 = vector.broadcast %cst_126 : f32 to vector<16x32xf32>
    %316 = arith.addf %315, %314 : vector<16x32xf32>
    %317 = arith.divf %315, %316 : vector<16x32xf32>
    %cst_127 = arith.constant dense<0.000000e+00> : vector<16x32xf32>
    %318 = tpu.matmul %297, %8, %cst_127 {dimension_numbers = #tpu.dot_dimension_numbers<[1], [0], [0], [1], [0, 0, 1, 1], [], []>} : vector<16x32xf32>, vector<32x32xf32>, vector<16x32xf32> -> vector<16x32xf32>
    %319 = vector.broadcast %14 : vector<1x32xf32> to vector<16x32xf32>
    %320 = arith.addf %318, %319 : vector<16x32xf32>
    %cst_128 = arith.constant dense<0.000000e+00> : vector<16x32xf32>
    %321 = tpu.matmul %255, %11, %cst_128 {dimension_numbers = #tpu.dot_dimension_numbers<[1], [0], [0], [1], [0, 0, 1, 1], [], []>} : vector<16x32xf32>, vector<32x32xf32>, vector<16x32xf32> -> vector<16x32xf32>
    %322 = vector.broadcast %15 : vector<1x32xf32> to vector<16x32xf32>
    %323 = arith.addf %321, %322 : vector<16x32xf32>
    %324 = arith.mulf %307, %323 : vector<16x32xf32>
    %325 = arith.addf %320, %324 : vector<16x32xf32>
    %326 = math.tanh %325 : vector<16x32xf32>
    %cst_129 = arith.constant 1.000000e+00 : f32
    %327 = vector.broadcast %cst_129 : f32 to vector<16x32xf32>
    %328 = arith.subf %327, %317 : vector<16x32xf32>
    %329 = arith.mulf %328, %326 : vector<16x32xf32>
    %330 = arith.mulf %317, %255 : vector<16x32xf32>
    %331 = arith.addf %329, %330 : vector<16x32xf32>
    %cst_130 = arith.constant dense<0.000000e+00> : vector<16xf32>
    %332 = vector.multi_reduction <add>, %331, %cst_130 [1] : vector<16x32xf32> to vector<16xf32>
    %333 = vector.shape_cast %332 : vector<16xf32> to vector<16x1xf32>
    %cst_131 = arith.constant 3.200000e+01 : f32
    %334 = vector.broadcast %cst_131 : f32 to vector<16x1xf32>
    %335 = arith.divf %333, %334 : vector<16x1xf32>
    %336 = vector.broadcast %335 : vector<16x1xf32> to vector<16x32xf32>
    %337 = arith.subf %331, %336 : vector<16x32xf32>
    %338 = arith.mulf %337, %337 : vector<16x32xf32>
    %cst_132 = arith.constant dense<0.000000e+00> : vector<16xf32>
    %339 = vector.multi_reduction <add>, %338, %cst_132 [1] : vector<16x32xf32> to vector<16xf32>
    %340 = vector.shape_cast %339 : vector<16xf32> to vector<16x1xf32>
    %cst_133 = arith.constant 3.200000e+01 : f32
    %341 = vector.broadcast %cst_133 : f32 to vector<16x1xf32>
    %342 = arith.divf %340, %341 : vector<16x1xf32>
    %343 = vector.broadcast %335 : vector<16x1xf32> to vector<16x32xf32>
    %344 = arith.subf %331, %343 : vector<16x32xf32>
    %cst_134 = arith.constant 9.99999974E-6 : f32
    %345 = vector.broadcast %cst_134 : f32 to vector<16x1xf32>
    %346 = arith.addf %342, %345 : vector<16x1xf32>
    %347 = math.rsqrt %346 : vector<16x1xf32>
    %348 = vector.broadcast %347 : vector<16x1xf32> to vector<16x32xf32>
    %349 = arith.mulf %344, %348 : vector<16x32xf32>
    %cst_135 = arith.constant dense<0.000000e+00> : vector<16x64xf32>
    %350 = tpu.matmul %349, %16, %cst_135 {dimension_numbers = #tpu.dot_dimension_numbers<[1], [0], [0], [1], [0, 0, 1, 1], [], []>} : vector<16x32xf32>, vector<32x64xf32>, vector<16x64xf32> -> vector<16x64xf32>
    %351 = vector.broadcast %17 : vector<1x64xf32> to vector<16x64xf32>
    %352 = arith.addf %350, %351 : vector<16x64xf32>
    %cst_136 = arith.constant 0.000000e+00 : f32
    %353 = vector.broadcast %cst_136 : f32 to vector<16x64xf32>
    %354 = arith.maximumf %352, %353 : vector<16x64xf32>
    %cst_137 = arith.constant dense<0.000000e+00> : vector<16x32xf32>
    %355 = tpu.matmul %354, %18, %cst_137 {dimension_numbers = #tpu.dot_dimension_numbers<[1], [0], [0], [1], [0, 0, 1, 1], [], []>} : vector<16x64xf32>, vector<64x32xf32>, vector<16x32xf32> -> vector<16x32xf32>
    %356 = vector.broadcast %19 : vector<1x32xf32> to vector<16x32xf32>
    %357 = arith.addf %355, %356 : vector<16x32xf32>
    %358 = arith.addf %331, %357 : vector<16x32xf32>
    %359 = vector.shape_cast %358 : vector<16x32xf32> to vector<2x8x32xf32>
    %c0_138 = arith.constant 0 : index
    %c0_139 = arith.constant 0 : index
    %c0_140 = arith.constant 0 : index
    %360 = vector.load %arg23[%c0_138, %c0_139, %c0_140] : memref<2x8x32xf32, #tpu.memory_space<vmem>>, vector<2x8x32xf32>
    tpu.vector_store %arg23[%c0_138, %c0_139, %c0_140], %359 {strides = array<i32>} : memref<2x8x32xf32, #tpu.memory_space<vmem>>, vector<2x8x32xf32>,
    return
  }
  func.func @transform_0(%arg0: i32) -> (i32, i32, i32) {
    %c0_i32 = arith.constant 0 : i32
    %c0_i32_0 = arith.constant 0 : i32
    %c0_i32_1 = arith.constant 0 : i32
    return %arg0, %c0_i32, %c0_i32_0 : i32, i32, i32
  }
  func.func @transform_1(%arg0: i32) -> (i32, i32, i32) {
    %c0_i32 = arith.constant 0 : i32
    %c0_i32_0 = arith.constant 0 : i32
    %c0_i32_1 = arith.constant 0 : i32
    return %arg0, %c0_i32, %c0_i32_0 : i32, i32, i32
  }
  func.func @transform_2(%arg0: i32) -> (i32, i32) {
    %c0_i32 = arith.constant 0 : i32
    %c0_i32_0 = arith.constant 0 : i32
    %c0_i32_1 = arith.constant 0 : i32
    return %c0_i32, %c0_i32_0 : i32, i32
  }
  func.func @transform_3(%arg0: i32) -> (i32, i32) {
    %c0_i32 = arith.constant 0 : i32
    %c0_i32_0 = arith.constant 0 : i32
    %c0_i32_1 = arith.constant 0 : i32
    return %c0_i32, %c0_i32_0 : i32, i32
  }
  func.func @transform_4(%arg0: i32) -> (i32, i32) {
    %c0_i32 = arith.constant 0 : i32
    %c0_i32_0 = arith.constant 0 : i32
    %c0_i32_1 = arith.constant 0 : i32
    return %c0_i32, %c0_i32_0 : i32, i32
  }
  func.func @transform_5(%arg0: i32) -> (i32, i32) {
    %c0_i32 = arith.constant 0 : i32
    %c0_i32_0 = arith.constant 0 : i32
    %c0_i32_1 = arith.constant 0 : i32
    return %c0_i32, %c0_i32_0 : i32, i32
  }
  func.func @transform_6(%arg0: i32) -> (i32, i32) {
    %c0_i32 = arith.constant 0 : i32
    %c0_i32_0 = arith.constant 0 : i32
    %c0_i32_1 = arith.constant 0 : i32
    return %c0_i32, %c0_i32_0 : i32, i32
  }
  func.func @transform_7(%arg0: i32) -> (i32, i32) {
    %c0_i32 = arith.constant 0 : i32
    %c0_i32_0 = arith.constant 0 : i32
    %c0_i32_1 = arith.constant 0 : i32
    return %c0_i32, %c0_i32_0 : i32, i32
  }
  func.func @transform_8(%arg0: i32) -> (i32, i32) {
    %c0_i32 = arith.constant 0 : i32
    %c0_i32_0 = arith.constant 0 : i32
    %c0_i32_1 = arith.constant 0 : i32
    return %c0_i32, %c0_i32_0 : i32, i32
  }
  func.func @transform_9(%arg0: i32) -> (i32, i32) {
    %c0_i32 = arith.constant 0 : i32
    %c0_i32_0 = arith.constant 0 : i32
    %c0_i32_1 = arith.constant 0 : i32
    return %c0_i32, %c0_i32_0 : i32, i32
  }
  func.func @transform_10(%arg0: i32) -> (i32, i32) {
    %c0_i32 = arith.constant 0 : i32
    %c0_i32_0 = arith.constant 0 : i32
    %c0_i32_1 = arith.constant 0 : i32
    return %c0_i32, %c0_i32_0 : i32, i32
  }
  func.func @transform_11(%arg0: i32) -> (i32, i32) {
    %c0_i32 = arith.constant 0 : i32
    %c0_i32_0 = arith.constant 0 : i32
    %c0_i32_1 = arith.constant 0 : i32
    return %c0_i32, %c0_i32_0 : i32, i32
  }
  func.func @transform_12(%arg0: i32) -> (i32, i32) {
    %c0_i32 = arith.constant 0 : i32
    %c0_i32_0 = arith.constant 0 : i32
    %c0_i32_1 = arith.constant 0 : i32
    return %c0_i32, %c0_i32_0 : i32, i32
  }
  func.func @transform_13(%arg0: i32) -> (i32, i32) {
    %c0_i32 = arith.constant 0 : i32
    %c0_i32_0 = arith.constant 0 : i32
    %c0_i32_1 = arith.constant 0 : i32
    return %c0_i32, %c0_i32_0 : i32, i32
  }
  func.func @transform_14(%arg0: i32) -> (i32, i32) {
    %c0_i32 = arith.constant 0 : i32
    %c0_i32_0 = arith.constant 0 : i32
    %c0_i32_1 = arith.constant 0 : i32
    return %c0_i32, %c0_i32_0 : i32, i32
  }
  func.func @transform_15(%arg0: i32) -> (i32, i32) {
    %c0_i32 = arith.constant 0 : i32
    %c0_i32_0 = arith.constant 0 : i32
    %c0_i32_1 = arith.constant 0 : i32
    return %c0_i32, %c0_i32_0 : i32, i32
  }
  func.func @transform_16(%arg0: i32) -> (i32, i32) {
    %c0_i32 = arith.constant 0 : i32
    %c0_i32_0 = arith.constant 0 : i32
    %c0_i32_1 = arith.constant 0 : i32
    return %c0_i32, %c0_i32_0 : i32, i32
  }
  func.func @transform_17(%arg0: i32) -> (i32, i32) {
    %c0_i32 = arith.constant 0 : i32
    %c0_i32_0 = arith.constant 0 : i32
    %c0_i32_1 = arith.constant 0 : i32
    return %c0_i32, %c0_i32_0 : i32, i32
  }
  func.func @transform_18(%arg0: i32) -> (i32, i32) {
    %c0_i32 = arith.constant 0 : i32
    %c0_i32_0 = arith.constant 0 : i32
    %c0_i32_1 = arith.constant 0 : i32
    return %c0_i32, %c0_i32_0 : i32, i32
  }
  func.func @transform_19(%arg0: i32) -> (i32, i32) {
    %c0_i32 = arith.constant 0 : i32
    %c0_i32_0 = arith.constant 0 : i32
    %c0_i32_1 = arith.constant 0 : i32
    return %c0_i32, %c0_i32_0 : i32, i32
  }
  func.func @transform_20(%arg0: i32) -> (i32, i32) {
    %c0_i32 = arith.constant 0 : i32
    %c0_i32_0 = arith.constant 0 : i32
    %c0_i32_1 = arith.constant 0 : i32
    return %c0_i32, %c0_i32_0 : i32, i32
  }
  func.func @transform_21(%arg0: i32) -> (i32, i32) {
    %c0_i32 = arith.constant 0 : i32
    %c0_i32_0 = arith.constant 0 : i32
    %c0_i32_1 = arith.constant 0 : i32
    return %c0_i32, %c0_i32_0 : i32, i32
  }
  func.func @transform_22(%arg0: i32) -> (i32, i32, i32) {
    %c0_i32 = arith.constant 0 : i32
    %c0_i32_0 = arith.constant 0 : i32
    %c0_i32_1 = arith.constant 0 : i32
    return %arg0, %c0_i32, %c0_i32_0 : i32, i32, i32
  }
}

</mosaic_0001>

<llo_original>
// kernel: tpu_custom_call.1
$region0: #{tpu_custom_call.1}
  #allocation0 [shape = 'u32[]', space=smem, size = 0x4, offset = 0x4, fixed_abs, tag = 'smem constant byte address 0x4 - core index']
  #allocation1 [shape = 'u32[144,128]{1,0:T(1,128)}', space=vmem, size = 0x12000, scoped, tag = 'internal scratch']
  %s0 = inlined_call_operand.vmem [shape: f32[2,64,32], index: 0, kind: input, shape index: {}]
  %s1 = inlined_call_operand.hbm [shape: f32[2,8,32], index: 1, kind: input, shape index: {}]
  %s2 = inlined_call_operand.vmem [shape: f32[32,32], index: 2, kind: input, shape index: {}]
  %s3 = inlined_call_operand.hbm [shape: f32[1,32], index: 3, kind: input, shape index: {}]
  %s4 = inlined_call_operand.vmem [shape: f32[32,32], index: 4, kind: input, shape index: {}]
  %s5 = inlined_call_operand.hbm [shape: f32[1,32], index: 5, kind: input, shape index: {}]
  %s6 = inlined_call_operand.vmem [shape: f32[32,32], index: 6, kind: input, shape index: {}]
  %s7 = inlined_call_operand.hbm [shape: f32[1,32], index: 7, kind: input, shape index: {}]
  %s8 = inlined_call_operand.vmem [shape: f32[32,32], index: 8, kind: input, shape index: {}]
  %s9 = inlined_call_operand.vmem [shape: f32[32,32], index: 9, kind: input, shape index: {}]
  %s10 = inlined_call_operand.vmem [shape: f32[32,32], index: 10, kind: input, shape index: {}]
  %s11 = inlined_call_operand.vmem [shape: f32[32,32], index: 11, kind: input, shape index: {}]
  %s12 = inlined_call_operand.vmem [shape: f32[32,32], index: 12, kind: input, shape index: {}]
  %s13 = inlined_call_operand.hbm [shape: f32[32,32], index: 13, kind: input, shape index: {}]
  %s14 = inlined_call_operand.hbm [shape: f32[1,32], index: 14, kind: input, shape index: {}]
  %s15 = inlined_call_operand.hbm [shape: f32[1,32], index: 15, kind: input, shape index: {}]
  %s16 = inlined_call_operand.hbm [shape: f32[1,32], index: 16, kind: input, shape index: {}]
  %s17 = inlined_call_operand.hbm [shape: f32[1,32], index: 17, kind: input, shape index: {}]
  %s18 = inlined_call_operand.hbm [shape: f32[32,64], index: 18, kind: input, shape index: {}]
  %s19 = inlined_call_operand.vmem [shape: f32[1,64], index: 19, kind: input, shape index: {}]
  %s20 = inlined_call_operand.vmem [shape: f32[64,32], index: 20, kind: input, shape index: {}]
  %s21 = inlined_call_operand.vmem [shape: f32[1,32], index: 21, kind: input, shape index: {}]
  %s22 = inlined_call_operand.hbm [shape: f32[2,8,32], index: 22, kind: output, shape index: {}]
  %s23 = sld [smem:[#allocation0]]
  $region138: #{tpu_custom_call.1} parent=0
    _
  %s25 = ssub.s32 1, %s23
  %s26 = scalar_select 0, %s25, %s23
  $region1: #{tpu_custom_call.1} parent=0
    #allocation2 [shape = 'u8[8192]{0}', space=vmem, size = 0x2000, scoped, tag = 'input window, operand 1, single buffered']
    #allocation3 [shape = 's32[1]{0}', space=sflag, size = 0x4, scoped, tag = 'scoped memory for tpu_custom_call.1']
    #allocation4 [shape = 's32[1]{0}', space=sflag, size = 0x4, scoped, tag = 'scoped memory for tpu_custom_call.1']
    #allocation5 [shape = 'u8[512]{0}', space=vmem, size = 0x400, scoped, tag = 'input window, operand 3, single buffered']
    #allocation6 [shape = 's32[1]{0}', space=sflag, size = 0x4, scoped, tag = 'scoped memory for tpu_custom_call.1']
    #allocation7 [shape = 'u8[512]{0}', space=vmem, size = 0x400, scoped, tag = 'input window, operand 5, single buffered']
    #allocation8 [shape = 'u8[512]{0}', space=vmem, size = 0x400, scoped, tag = 'input window, operand 7, single buffered']
    #allocation9 [shape = 's32[1]{0}', space=sflag, size = 0x4, scoped, tag = 'scoped memory for tpu_custom_call.1']
    #allocation10 [shape = 'u8[16384]{0}', space=vmem, size = 0x4000, scoped, tag = 'input window, operand 13, single buffered']
    #allocation11 [shape = 'u8[512]{0}', space=vmem, size = 0x400, scoped, tag = 'input window, operand 14, single buffered']
    #allocation12 [shape = 's32[1]{0}', space=sflag, size = 0x4, scoped, tag = 'scoped memory for tpu_custom_call.1']
    #allocation13 [shape = 'u8[512]{0}', space=vmem, size = 0x400, scoped, tag = 'input window, operand 15, single buffered']
    #allocation14 [shape = 'u8[512]{0}', space=vmem, size = 0x400, scoped, tag = 'input window, operand 16, single buffered']
    #allocation15 [shape = 's32[1]{0}', space=sflag, size = 0x4, scoped, tag = 'scoped memory for tpu_custom_call.1']
    #allocation16 [shape = 'u8[512]{0}', space=vmem, size = 0x400, scoped, tag = 'input window, operand 17, single buffered']
    #allocation17 [shape = 'u8[16384]{0}', space=vmem, size = 0x4000, scoped, tag = 'input window, operand 18, single buffered']
    #allocation18 [shape = 's32[1]{0}', space=sflag, size = 0x4, scoped, tag = 'scoped memory for tpu_custom_call.1']
    #allocation19 [shape = 'u8[8192]{0}', space=vmem, size = 0x2000, scoped, tag = 'output window, operand 0, single buffered']
    %27 = vsyncpa [#allocation3], 0
    %28 = vsyncpa [#allocation6], 0
    %29 = vsyncpa [#allocation9], 0
    %30 = vsyncpa [#allocation12], 0
    %31 = vsyncpa [#allocation15], 0
    %32 = vsyncpa [#allocation18], 0
    %33 = vsyncpa [#allocation4], 0
    // Predicated region
    $region2: #{tpu_custom_call.1} parent=1 // pred_check
      _
    $region3: #{tpu_custom_call.1} parent=1 // pred_check_branch
      %35 = sbr.rel (0) target = $region5
    $region4: #{tpu_custom_call.1} parent=1 // pred_region
      _
    $region5: #{tpu_custom_call.1} parent=1 // pred_fallthru
      _
    // Predicated region
    $region6: #{tpu_custom_call.1} parent=1 // pred_check
      _
    $region7: #{tpu_custom_call.1} parent=1 // pred_check_branch
      %37 = sbr.rel (0) target = $region9
    $region8: #{tpu_custom_call.1} parent=1 // pred_region
      %s39 = ssub.s32 256, 256
      %40 = vsyncadd [#allocation3], %s39
      %s41 = sshll.u32 [#allocation2], 4
      %s42 = int_to_ptr.vmem [resolvable:$true] %s41
      %47 = dma.hbm_to_vmem [thread:$0]  %s1, 256, %s42, [#allocation3], 128, 128, 8
    $region9: #{tpu_custom_call.1} parent=1 // pred_fallthru
      _
    // Predicated region
    $region10: #{tpu_custom_call.1} parent=1 // pred_check
      _
    $region11: #{tpu_custom_call.1} parent=1 // pred_check_branch
      %49 = sbr.rel (0) target = $region13
    $region12: #{tpu_custom_call.1} parent=1 // pred_region
      _
    $region13: #{tpu_custom_call.1} parent=1 // pred_fallthru
      _
    // Predicated region
    $region14: #{tpu_custom_call.1} parent=1 // pred_check
      _
    $region15: #{tpu_custom_call.1} parent=1 // pred_check_branch
      %51 = sbr.rel (0) target = $region17
    $region16: #{tpu_custom_call.1} parent=1 // pred_region
      %s53 = ssub.s32 16, 16
      %54 = vsyncadd [#allocation6], %s53
      %s56 = sshll.u32 [#allocation5], 4
      %s57 = int_to_ptr.vmem [resolvable:$true] %s56
      %59 = dma.hbm_to_vmem [thread:$0]  %s3, 16, %s57, [#allocation6]
    $region17: #{tpu_custom_call.1} parent=1 // pred_fallthru
      _
    // Predicated region
    $region18: #{tpu_custom_call.1} parent=1 // pred_check
      _
    $region19: #{tpu_custom_call.1} parent=1 // pred_check_branch
      %61 = sbr.rel (0) target = $region21
    $region20: #{tpu_custom_call.1} parent=1 // pred_region
      _
    $region21: #{tpu_custom_call.1} parent=1 // pred_fallthru
      _
    // Predicated region
    $region22: #{tpu_custom_call.1} parent=1 // pred_check
      _
    $region23: #{tpu_custom_call.1} parent=1 // pred_check_branch
      %63 = sbr.rel (0) target = $region25
    $region24: #{tpu_custom_call.1} parent=1 // pred_region
      %s65 = ssub.s32 16, 16
      %66 = vsyncadd [#allocation6], %s65
      %s68 = sshll.u32 [#allocation7], 4
      %s69 = int_to_ptr.vmem [resolvable:$true] %s68
      %71 = dma.hbm_to_vmem [thread:$0]  %s5, 16, %s69, [#allocation6]
    $region25: #{tpu_custom_call.1} parent=1 // pred_fallthru
      _
    // Predicated region
    $region26: #{tpu_custom_call.1} parent=1 // pred_check
      _
    $region27: #{tpu_custom_call.1} parent=1 // pred_check_branch
      %73 = sbr.rel (0) target = $region29
    $region28: #{tpu_custom_call.1} parent=1 // pred_region
      _
    $region29: #{tpu_custom_call.1} parent=1 // pred_fallthru
      _
    // Predicated region
    $region30: #{tpu_custom_call.1} parent=1 // pred_check
      _
    $region31: #{tpu_custom_call.1} parent=1 // pred_check_branch
      %75 = sbr.rel (0) target = $region33
    $region32: #{tpu_custom_call.1} parent=1 // pred_region
      %s77 = ssub.s32 16, 16
      %78 = vsyncadd [#allocation9], %s77
      %s80 = sshll.u32 [#allocation8], 4
      %s81 = int_to_ptr.vmem [resolvable:$true] %s80
      %83 = dma.hbm_to_vmem [thread:$0]  %s7, 16, %s81, [#allocation9]
    $region33: #{tpu_custom_call.1} parent=1 // pred_fallthru
      _
    // Predicated region
    $region34: #{tpu_custom_call.1} parent=1 // pred_check
      _
    $region35: #{tpu_custom_call.1} parent=1 // pred_check_branch
      %85 = sbr.rel (0) target = $region37
    $region36: #{tpu_custom_call.1} parent=1 // pred_region
      _
    $region37: #{tpu_custom_call.1} parent=1 // pred_fallthru
      _
    // Predicated region
    $region38: #{tpu_custom_call.1} parent=1 // pred_check
      _
    $region39: #{tpu_custom_call.1} parent=1 // pred_check_branch
      %87 = sbr.rel (0) target = $region41
    $region40: #{tpu_custom_call.1} parent=1 // pred_region
      _
    $region41: #{tpu_custom_call.1} parent=1 // pred_fallthru
      _
    // Predicated region
    $region42: #{tpu_custom_call.1} parent=1 // pred_check
      _
    $region43: #{tpu_custom_call.1} parent=1 // pred_check_branch
      %89 = sbr.rel (0) target = $region45
    $region44: #{tpu_custom_call.1} parent=1 // pred_region
      _
    $region45: #{tpu_custom_call.1} parent=1 // pred_fallthru
      _
    // Predicated region
    $region46: #{tpu_custom_call.1} parent=1 // pred_check
      _
    $region47: #{tpu_custom_call.1} parent=1 // pred_check_branch
      %91 = sbr.rel (0) target = $region49
    $region48: #{tpu_custom_call.1} parent=1 // pred_region
      _
    $region49: #{tpu_custom_call.1} parent=1 // pred_fallthru
      _
    // Predicated region
    $region50: #{tpu_custom_call.1} parent=1 // pred_check
      _
    $region51: #{tpu_custom_call.1} parent=1 // pred_check_branch
      %93 = sbr.rel (0) target = $region53
    $region52: #{tpu_custom_call.1} parent=1 // pred_region
      _
    $region53: #{tpu_custom_call.1} parent=1 // pred_fallthru
      _
    // Predicated region
    $region54: #{tpu_custom_call.1} parent=1 // pred_check
      _
    $region55: #{tpu_custom_call.1} parent=1 // pred_check_branch
      %95 = sbr.rel (0) target = $region57
    $region56: #{tpu_custom_call.1} parent=1 // pred_region
      %s97 = ssub.s32 512, 512
      %98 = vsyncadd [#allocation9], %s97
      %s99 = sshll.u32 [#allocation10], 4
      %s100 = int_to_ptr.vmem [resolvable:$true] %s99
      %105 = dma.hbm_to_vmem [thread:$0]  %s13, 512, %s100, [#allocation9], 128, 128, 8
    $region57: #{tpu_custom_call.1} parent=1 // pred_fallthru
      _
    // Predicated region
    $region58: #{tpu_custom_call.1} parent=1 // pred_check
      _
    $region59: #{tpu_custom_call.1} parent=1 // pred_check_branch
      %107 = sbr.rel (0) target = $region61
    $region60: #{tpu_custom_call.1} parent=1 // pred_region
      %s109 = ssub.s32 16, 16
      %110 = vsyncadd [#allocation12], %s109
      %s112 = sshll.u32 [#allocation11], 4
      %s113 = int_to_ptr.vmem [resolvable:$true] %s112
      %115 = dma.hbm_to_vmem [thread:$0]  %s14, 16, %s113, [#allocation12]
    $region61: #{tpu_custom_call.1} parent=1 // pred_fallthru
      _
    // Predicated region
    $region62: #{tpu_custom_call.1} parent=1 // pred_check
      _
    $region63: #{tpu_custom_call.1} parent=1 // pred_check_branch
      %117 = sbr.rel (0) target = $region65
    $region64: #{tpu_custom_call.1} parent=1 // pred_region
      %s119 = ssub.s32 16, 16
      %120 = vsyncadd [#allocation12], %s119
      %s122 = sshll.u32 [#allocation13], 4
      %s123 = int_to_ptr.vmem [resolvable:$true] %s122
      %125 = dma.hbm_to_vmem [thread:$0]  %s15, 16, %s123, [#allocation12]
    $region65: #{tpu_custom_call.1} parent=1 // pred_fallthru
      _
    // Predicated region
    $region66: #{tpu_custom_call.1} parent=1 // pred_check
      _
    $region67: #{tpu_custom_call.1} parent=1 // pred_check_branch
      %127 = sbr.rel (0) target = $region69
    $region68: #{tpu_custom_call.1} parent=1 // pred_region
      %s129 = ssub.s32 16, 16
      %130 = vsyncadd [#allocation15], %s129
      %s132 = sshll.u32 [#allocation14], 4
      %s133 = int_to_ptr.vmem [resolvable:$true] %s132
      %135 = dma.hbm_to_vmem [thread:$0]  %s16, 16, %s133, [#allocation15]
    $region69: #{tpu_custom_call.1} parent=1 // pred_fallthru
      _
    // Predicated region
    $region70: #{tpu_custom_call.1} parent=1 // pred_check
      _
    $region71: #{tpu_custom_call.1} parent=1 // pred_check_branch
      %137 = sbr.rel (0) target = $region73
    $region72: #{tpu_custom_call.1} parent=1 // pred_region
      %s139 = ssub.s32 16, 16
      %140 = vsyncadd [#allocation15], %s139
      %s142 = sshll.u32 [#allocation16], 4
      %s143 = int_to_ptr.vmem [resolvable:$true] %s142
      %145 = dma.hbm_to_vmem [thread:$0]  %s17, 16, %s143, [#allocation15]
    $region73: #{tpu_custom_call.1} parent=1 // pred_fallthru
      _
    // Predicated region
    $region74: #{tpu_custom_call.1} parent=1 // pred_check
      _
    $region75: #{tpu_custom_call.1} parent=1 // pred_check_branch
      %147 = sbr.rel (0) target = $region77
    $region76: #{tpu_custom_call.1} parent=1 // pred_region
      %s149 = ssub.s32 512, 512
      %150 = vsyncadd [#allocation18], %s149
      %s151 = sshll.u32 [#allocation17], 4
      %s152 = int_to_ptr.vmem [resolvable:$true] %s151
      %157 = dma.hbm_to_vmem [thread:$0]  %s18, 512, %s152, [#allocation18], 128, 128, 8
    $region77: #{tpu_custom_call.1} parent=1 // pred_fallthru
      _
    // Predicated region
    $region78: #{tpu_custom_call.1} parent=1 // pred_check
      _
    $region79: #{tpu_custom_call.1} parent=1 // pred_check_branch
      %159 = sbr.rel (0) target = $region81
    $region80: #{tpu_custom_call.1} parent=1 // pred_region
      _
    $region81: #{tpu_custom_call.1} parent=1 // pred_fallthru
      _
    // Predicated region
    $region82: #{tpu_custom_call.1} parent=1 // pred_check
      _
    $region83: #{tpu_custom_call.1} parent=1 // pred_check_branch
      %161 = sbr.rel (0) target = $region85
    $region84: #{tpu_custom_call.1} parent=1 // pred_region
      _
    $region85: #{tpu_custom_call.1} parent=1 // pred_fallthru
      _
    // Predicated region
    $region86: #{tpu_custom_call.1} parent=1 // pred_check
      _
    $region87: #{tpu_custom_call.1} parent=1 // pred_check_branch
      %163 = sbr.rel (0) target = $region89
    $region88: #{tpu_custom_call.1} parent=1 // pred_region
      _
    $region89: #{tpu_custom_call.1} parent=1 // pred_fallthru
      _
    // Predicated region
    $region90: #{tpu_custom_call.1} parent=1 // pred_check
      _
    $region91: #{tpu_custom_call.1} parent=1 // pred_check_branch
      %165 = sbr.rel (0) target = $region93
    $region92: #{tpu_custom_call.1} parent=1 // pred_region
      %166 = dma.done [#allocation3], 256
    $region93: #{tpu_custom_call.1} parent=1 // pred_fallthru
      _
    // Predicated region
    $region94: #{tpu_custom_call.1} parent=1 // pred_check
      _
    $region95: #{tpu_custom_call.1} parent=1 // pred_check_branch
      %168 = sbr.rel (0) target = $region97
    $region96: #{tpu_custom_call.1} parent=1 // pred_region
      %169 = dma.done [#allocation6], 16
    $region97: #{tpu_custom_call.1} parent=1 // pred_fallthru
      _
    // Predicated region
    $region98: #{tpu_custom_call.1} parent=1 // pred_check
      _
    $region99: #{tpu_custom_call.1} parent=1 // pred_check_branch
      %171 = sbr.rel (0) target = $region101
    $region100: #{tpu_custom_call.1} parent=1 // pred_region
      %172 = dma.done [#allocation6], 16
    $region101: #{tpu_custom_call.1} parent=1 // pred_fallthru
      _
    // Predicated region
    $region102: #{tpu_custom_call.1} parent=1 // pred_check
      _
    $region103: #{tpu_custom_call.1} parent=1 // pred_check_branch
      %174 = sbr.rel (0) target = $region105
    $region104: #{tpu_custom_call.1} parent=1 // pred_region
      %175 = dma.done [#allocation9], 16
    $region105: #{tpu_custom_call.1} parent=1 // pred_fallthru
      _
    // Predicated region
    $region106: #{tpu_custom_call.1} parent=1 // pred_check
      _
    $region107: #{tpu_custom_call.1} parent=1 // pred_check_branch
      %177 = sbr.rel (0) target = $region109
    $region108: #{tpu_custom_call.1} parent=1 // pred_region
      %178 = dma.done [#allocation9], 512
    $region109: #{tpu_custom_call.1} parent=1 // pred_fallthru
      _
    // Predicated region
    $region110: #{tpu_custom_call.1} parent=1 // pred_check
      _
    $region111: #{tpu_custom_call.1} parent=1 // pred_check_branch
      %180 = sbr.rel (0) target = $region113
    $region112: #{tpu_custom_call.1} parent=1 // pred_region
      %181 = dma.done [#allocation12], 16
    $region113: #{tpu_custom_call.1} parent=1 // pred_fallthru
      _
    // Predicated region
    $region114: #{tpu_custom_call.1} parent=1 // pred_check
      _
    $region115: #{tpu_custom_call.1} parent=1 // pred_check_branch
      %183 = sbr.rel (0) target = $region117
    $region116: #{tpu_custom_call.1} parent=1 // pred_region
      %184 = dma.done [#allocation12], 16
    $region117: #{tpu_custom_call.1} parent=1 // pred_fallthru
      _
    // Predicated region
    $region118: #{tpu_custom_call.1} parent=1 // pred_check
      _
    $region119: #{tpu_custom_call.1} parent=1 // pred_check_branch
      %186 = sbr.rel (0) target = $region121
    $region120: #{tpu_custom_call.1} parent=1 // pred_region
      %187 = dma.done [#allocation15], 16
    $region121: #{tpu_custom_call.1} parent=1 // pred_fallthru
      _
    // Predicated region
    $region122: #{tpu_custom_call.1} parent=1 // pred_check
      _
    $region123: #{tpu_custom_call.1} parent=1 // pred_check_branch
      %189 = sbr.rel (0) target = $region125
    $region124: #{tpu_custom_call.1} parent=1 // pred_region
      %190 = dma.done [#allocation15], 16
    $region125: #{tpu_custom_call.1} parent=1 // pred_fallthru
      _
    // Predicated region
    $region126: #{tpu_custom_call.1} parent=1 // pred_check
      _
    $region127: #{tpu_custom_call.1} parent=1 // pred_check_branch
      %192 = sbr.rel (0) target = $region129
    $region128: #{tpu_custom_call.1} parent=1 // pred_region
      %193 = dma.done [#allocation18], 512
    $region129: #{tpu_custom_call.1} parent=1 // pred_fallthru
      _
    %v194 = vld [vmem:[%s2] sm:$0xff]
    %v195 = vld [vmem:[%s2 + $0x8] sm:$0xff]
    %v196 = vld [vmem:[%s2 + $0x10] sm:$0xff]
    %v197 = vld [vmem:[%s2 + $0x18] sm:$0xff]
    %v198 = vld [vmem:[#allocation5] sm:$0x1]
    %v199 = vld [vmem:[%s4] sm:$0xff]
    %v200 = vld [vmem:[%s4 + $0x8] sm:$0xff]
    %v201 = vld [vmem:[%s4 + $0x10] sm:$0xff]
    %v202 = vld [vmem:[%s4 + $0x18] sm:$0xff]
    %v203 = vld [vmem:[#allocation7] sm:$0x1]
    %v204 = vld [vmem:[%s6] sm:$0xff]
    %v205 = vld [vmem:[%s6 + $0x8] sm:$0xff]
    %v206 = vld [vmem:[%s6 + $0x10] sm:$0xff]
    %v207 = vld [vmem:[%s6 + $0x18] sm:$0xff]
    %v208 = vld [vmem:[#allocation8] sm:$0x1]
    %v209 = vld [vmem:[%s8] sm:$0xff]
    %v210 = vld [vmem:[%s8 + $0x8] sm:$0xff]
    %v211 = vld [vmem:[%s8 + $0x10] sm:$0xff]
    %v212 = vld [vmem:[%s8 + $0x18] sm:$0xff]
    %v213 = vld [vmem:[%s9] sm:$0xff]
    %v214 = vld [vmem:[%s9 + $0x8] sm:$0xff]
    %v215 = vld [vmem:[%s9 + $0x10] sm:$0xff]
    %v216 = vld [vmem:[%s9 + $0x18] sm:$0xff]
    %v217 = vld [vmem:[%s10] sm:$0xff]
    %v218 = vld [vmem:[%s10 + $0x8] sm:$0xff]
    %v219 = vld [vmem:[%s10 + $0x10] sm:$0xff]
    %v220 = vld [vmem:[%s10 + $0x18] sm:$0xff]
    %v221 = vld [vmem:[%s11] sm:$0xff]
    %v222 = vld [vmem:[%s11 + $0x8] sm:$0xff]
    %v223 = vld [vmem:[%s11 + $0x10] sm:$0xff]
    %v224 = vld [vmem:[%s11 + $0x18] sm:$0xff]
    %v225 = vld [vmem:[%s12] sm:$0xff]
    %v226 = vld [vmem:[%s12 + $0x8] sm:$0xff]
    %v227 = vld [vmem:[%s12 + $0x10] sm:$0xff]
    %v228 = vld [vmem:[%s12 + $0x18] sm:$0xff]
    %v229 = vld [vmem:[#allocation10] sm:$0xff]
    %v230 = vld [vmem:[#allocation10 + $0x8] sm:$0xff]
    %v231 = vld [vmem:[#allocation10 + $0x10] sm:$0xff]
    %v232 = vld [vmem:[#allocation10 + $0x18] sm:$0xff]
    %v233 = vld [vmem:[#allocation11] sm:$0x1]
    %v234 = vld [vmem:[#allocation13] sm:$0x1]
    %v235 = vld [vmem:[#allocation14] sm:$0x1]
    %v236 = vld [vmem:[#allocation16] sm:$0x1]
    %v237 = vld [vmem:[#allocation17] sm:$0xff]
    %v238 = vld [vmem:[#allocation17 + $0x8] sm:$0xff]
    %v239 = vld [vmem:[#allocation17 + $0x10] sm:$0xff]
    %v240 = vld [vmem:[#allocation17 + $0x18] sm:$0xff]
    %v241 = vld [vmem:[%s19] sm:$0x1]
    %v242 = vld [vmem:[%s20] sm:$0xff]
    %v243 = vld [vmem:[%s20 + $0x8] sm:$0xff]
    %v244 = vld [vmem:[%s20 + $0x10] sm:$0xff]
    %v245 = vld [vmem:[%s20 + $0x18] sm:$0xff]
    %v246 = vld [vmem:[%s20 + $0x20] sm:$0xff]
    %v247 = vld [vmem:[%s20 + $0x28] sm:$0xff]
    %v248 = vld [vmem:[%s20 + $0x30] sm:$0xff]
    %v249 = vld [vmem:[%s20 + $0x38] sm:$0xff]
    %v250 = vld [vmem:[%s21] sm:$0x1]
    %v251 = vld [vmem:[%s0] sm:$0xff]
    %v252 = vld [vmem:[%s0 + $0x8] sm:$0xff]
    %v253 = vld [vmem:[%s0 + $0x10] sm:$0xff]
    %v254 = vld [vmem:[%s0 + $0x18] sm:$0xff]
    %v255 = vld [vmem:[%s0 + $0x20] sm:$0xff]
    %v256 = vld [vmem:[%s0 + $0x28] sm:$0xff]
    %v257 = vld [vmem:[%s0 + $0x30] sm:$0xff]
    %v258 = vld [vmem:[%s0 + $0x38] sm:$0xff]
    %v259 = vld [vmem:[%s0 + $0x40] sm:$0xff]
    %v260 = vld [vmem:[%s0 + $0x48] sm:$0xff]
    %v261 = vld [vmem:[%s0 + $0x50] sm:$0xff]
    %v262 = vld [vmem:[%s0 + $0x58] sm:$0xff]
    %v263 = vld [vmem:[%s0 + $0x60] sm:$0xff]
    %v264 = vld [vmem:[%s0 + $0x68] sm:$0xff]
    %v265 = vld [vmem:[%s0 + $0x70] sm:$0xff]
    %v266 = vld [vmem:[%s0 + $0x78] sm:$0xff]
    %vm267 = vcmask 261120
    %v268 = vsel %vm267, %v251, 0.0
    %269 = vadd.xlane.f32.xlu0 %v268
    %v270 = vpop.xlane.xlu0 %269
    %v271 = vsel %vm267, %v252, 0.0
    %272 = vadd.xlane.f32.xlu0 %v271
    %v273 = vpop.xlane.xlu0 %272
    %v274 = vsel %vm267, %v253, 0.0
    %275 = vadd.xlane.f32.xlu0 %v274
    %v276 = vpop.xlane.xlu0 %275
    %v277 = vsel %vm267, %v254, 0.0
    %278 = vadd.xlane.f32.xlu0 %v277
    %v279 = vpop.xlane.xlu0 %278
    %v280 = vsel %vm267, %v255, 0.0
    %281 = vadd.xlane.f32.xlu0 %v280
    %v282 = vpop.xlane.xlu0 %281
    %v283 = vsel %vm267, %v256, 0.0
    %284 = vadd.xlane.f32.xlu0 %v283
    %v285 = vpop.xlane.xlu0 %284
    %v286 = vsel %vm267, %v257, 0.0
    %287 = vadd.xlane.f32.xlu0 %v286
    %v288 = vpop.xlane.xlu0 %287
    %v289 = vsel %vm267, %v258, 0.0
    %290 = vadd.xlane.f32.xlu0 %v289
    %v291 = vpop.xlane.xlu0 %290
    %v292 = vsel %vm267, %v259, 0.0
    %293 = vadd.xlane.f32.xlu0 %v292
    %v294 = vpop.xlane.xlu0 %293
    %v295 = vsel %vm267, %v260, 0.0
    %296 = vadd.xlane.f32.xlu0 %v295
    %v297 = vpop.xlane.xlu0 %296
    %v298 = vsel %vm267, %v261, 0.0
    %299 = vadd.xlane.f32.xlu0 %v298
    %v300 = vpop.xlane.xlu0 %299
    %v301 = vsel %vm267, %v262, 0.0
    %302 = vadd.xlane.f32.xlu0 %v301
    %v303 = vpop.xlane.xlu0 %302
    %v304 = vsel %vm267, %v263, 0.0
    %305 = vadd.xlane.f32.xlu0 %v304
    %v306 = vpop.xlane.xlu0 %305
    %v307 = vsel %vm267, %v264, 0.0
    %308 = vadd.xlane.f32.xlu0 %v307
    %v309 = vpop.xlane.xlu0 %308
    %v310 = vsel %vm267, %v265, 0.0
    %311 = vadd.xlane.f32.xlu0 %v310
    %v312 = vpop.xlane.xlu0 %311
    %v313 = vsel %vm267, %v266, 0.0
    %314 = vadd.xlane.f32.xlu0 %v313
    %v315 = vpop.xlane.xlu0 %314
    %v316 = vrcp.pop 32.0
    %v317 = vmul.f32 %v270, %v316
    %v318 = vmul.f32 %v273, %v316
    %v319 = vmul.f32 %v276, %v316
    %v320 = vmul.f32 %v279, %v316
    %v321 = vmul.f32 %v282, %v316
    %v322 = vmul.f32 %v285, %v316
    %v323 = vmul.f32 %v288, %v316
    %v324 = vmul.f32 %v291, %v316
    %v325 = vmul.f32 %v294, %v316
    %v326 = vmul.f32 %v297, %v316
    %v327 = vmul.f32 %v300, %v316
    %v328 = vmul.f32 %v303, %v316
    %v329 = vmul.f32 %v306, %v316
    %v330 = vmul.f32 %v309, %v316
    %v331 = vmul.f32 %v312, %v316
    %v332 = vmul.f32 %v315, %v316
    %v333 = vsub.f32 %v251, %v317
    %v334 = vsub.f32 %v252, %v318
    %v335 = vsub.f32 %v253, %v319
    %v336 = vsub.f32 %v254, %v320
    %v337 = vsub.f32 %v255, %v321
    %v338 = vsub.f32 %v256, %v322
    %v339 = vsub.f32 %v257, %v323
    %v340 = vsub.f32 %v258, %v324
    %v341 = vsub.f32 %v259, %v325
    %v342 = vsub.f32 %v260, %v326
    %v343 = vsub.f32 %v261, %v327
    %v344 = vsub.f32 %v262, %v328
    %v345 = vsub.f32 %v263, %v329
    %v346 = vsub.f32 %v264, %v330
    %v347 = vsub.f32 %v265, %v331
    %v348 = vsub.f32 %v266, %v332
    %v349 = vmul.f32 %v333, %v333
    %v350 = vmul.f32 %v334, %v334
    %v351 = vmul.f32 %v335, %v335
    %v352 = vmul.f32 %v336, %v336
    %v353 = vmul.f32 %v337, %v337
    %v354 = vmul.f32 %v338, %v338
    %v355 = vmul.f32 %v339, %v339
    %v356 = vmul.f32 %v340, %v340
    %v357 = vmul.f32 %v341, %v341
    %v358 = vmul.f32 %v342, %v342
    %v359 = vmul.f32 %v343, %v343
    %v360 = vmul.f32 %v344, %v344
    %v361 = vmul.f32 %v345, %v345
    %v362 = vmul.f32 %v346, %v346
    %v363 = vmul.f32 %v347, %v347
    %v364 = vmul.f32 %v348, %v348
    %v365 = vsel %vm267, %v349, 0.0
    %366 = vadd.xlane.f32.xlu0 %v365
    %v367 = vpop.xlane.xlu0 %366
    %v368 = vsel %vm267, %v350, 0.0
    %369 = vadd.xlane.f32.xlu0 %v368
    %v370 = vpop.xlane.xlu0 %369
    %v371 = vsel %vm267, %v351, 0.0
    %372 = vadd.xlane.f32.xlu0 %v371
    %v373 = vpop.xlane.xlu0 %372
    %v374 = vsel %vm267, %v352, 0.0
    %375 = vadd.xlane.f32.xlu0 %v374
    %v376 = vpop.xlane.xlu0 %375
    %v377 = vsel %vm267, %v353, 0.0
    %378 = vadd.xlane.f32.xlu0 %v377
    %v379 = vpop.xlane.xlu0 %378
    %v380 = vsel %vm267, %v354, 0.0
    %381 = vadd.xlane.f32.xlu0 %v380
    %v382 = vpop.xlane.xlu0 %381
    %v383 = vsel %vm267, %v355, 0.0
    %384 = vadd.xlane.f32.xlu0 %v383
    %v385 = vpop.xlane.xlu0 %384
    %v386 = vsel %vm267, %v356, 0.0
    %387 = vadd.xlane.f32.xlu0 %v386
    %v388 = vpop.xlane.xlu0 %387
    %v389 = vsel %vm267, %v357, 0.0
    %390 = vadd.xlane.f32.xlu0 %v389
    %v391 = vpop.xlane.xlu0 %390
    %v392 = vsel %vm267, %v358, 0.0
    %393 = vadd.xlane.f32.xlu0 %v392
    %v394 = vpop.xlane.xlu0 %393
    %v395 = vsel %vm267, %v359, 0.0
    %396 = vadd.xlane.f32.xlu0 %v395
    %v397 = vpop.xlane.xlu0 %396
    %v398 = vsel %vm267, %v360, 0.0
    %399 = vadd.xlane.f32.xlu0 %v398
    %v400 = vpop.xlane.xlu0 %399
    %v401 = vsel %vm267, %v361, 0.0
    %402 = vadd.xlane.f32.xlu0 %v401
    %v403 = vpop.xlane.xlu0 %402
    %v404 = vsel %vm267, %v362, 0.0
    %405 = vadd.xlane.f32.xlu0 %v404
    %v406 = vpop.xlane.xlu0 %405
    %v407 = vsel %vm267, %v363, 0.0
    %408 = vadd.xlane.f32.xlu0 %v407
    %v409 = vpop.xlane.xlu0 %408
    %v410 = vsel %vm267, %v364, 0.0
    %411 = vadd.xlane.f32.xlu0 %v410
    %v412 = vpop.xlane.xlu0 %411
    %v413 = vmul.f32 %v367, %v316
    %v414 = vmul.f32 %v370, %v316
    %v415 = vmul.f32 %v373, %v316
    %v416 = vmul.f32 %v376, %v316
    %v417 = vmul.f32 %v379, %v316
    %v418 = vmul.f32 %v382, %v316
    %v419 = vmul.f32 %v385, %v316
    %v420 = vmul.f32 %v388, %v316
    %v421 = vmul.f32 %v391, %v316
    %v422 = vmul.f32 %v394, %v316
    %v423 = vmul.f32 %v397, %v316
    %v424 = vmul.f32 %v400, %v316
    %v425 = vmul.f32 %v403, %v316
    %v426 = vmul.f32 %v406, %v316
    %v427 = vmul.f32 %v409, %v316
    %v428 = vmul.f32 %v412, %v316
    %v429 = vadd.f32 %v413, 1e-05
    %v430 = vadd.f32 %v414, 1e-05
    %v431 = vadd.f32 %v415, 1e-05
    %v432 = vadd.f32 %v416, 1e-05
    %v433 = vadd.f32 %v417, 1e-05
    %v434 = vadd.f32 %v418, 1e-05
    %v435 = vadd.f32 %v419, 1e-05
    %v436 = vadd.f32 %v420, 1e-05
    %v437 = vadd.f32 %v421, 1e-05
    %v438 = vadd.f32 %v422, 1e-05
    %v439 = vadd.f32 %v423, 1e-05
    %v440 = vadd.f32 %v424, 1e-05
    %v441 = vadd.f32 %v425, 1e-05
    %v442 = vadd.f32 %v426, 1e-05
    %v443 = vadd.f32 %v427, 1e-05
    %v444 = vadd.f32 %v428, 1e-05
    %v445 = vrsqrt.pop %v429
    %v446 = vrsqrt.pop %v430
    %v447 = vrsqrt.pop %v431
    %v448 = vrsqrt.pop %v432
    %v449 = vrsqrt.pop %v433
    %v450 = vrsqrt.pop %v434
    %v451 = vrsqrt.pop %v435
    %v452 = vrsqrt.pop %v436
    %v453 = vrsqrt.pop %v437
    %v454 = vrsqrt.pop %v438
    %v455 = vrsqrt.pop %v439
    %v456 = vrsqrt.pop %v440
    %v457 = vrsqrt.pop %v441
    %v458 = vrsqrt.pop %v442
    %v459 = vrsqrt.pop %v443
    %v460 = vrsqrt.pop %v444
    %v461 = vmul.f32 %v333, %v445
    %v462 = vmul.f32 %v334, %v446
    %v463 = vmul.f32 %v335, %v447
    %v464 = vmul.f32 %v336, %v448
    %v465 = vmul.f32 %v337, %v449
    %v466 = vmul.f32 %v338, %v450
    %v467 = vmul.f32 %v339, %v451
    %v468 = vmul.f32 %v340, %v452
    %v469 = vmul.f32 %v341, %v453
    %v470 = vmul.f32 %v342, %v454
    %v471 = vmul.f32 %v343, %v455
    %v472 = vmul.f32 %v344, %v456
    %v473 = vmul.f32 %v345, %v457
    %v474 = vmul.f32 %v346, %v458
    %v475 = vmul.f32 %v347, %v459
    %v476 = vmul.f32 %v348, %v460
    %v478 = vlaneseq
    %v479 = vshrl.u32 %v478, 7
    %v480 = vsub.s32 0, %v479
    %v481 = vrot.slane %v198, %v480
    %v484 = vsel %vm267, %v461, 0
    %v487 = vsel %vm267, %v462, 0
    %v490 = vsel %vm267, %v463, 0
    %v493 = vsel %vm267, %v464, 0
    %v496 = vsel %vm267, %v465, 0
    %v499 = vsel %vm267, %v466, 0
    %v502 = vsel %vm267, %v467, 0
    %v505 = vsel %vm267, %v468, 0
    %v508 = vsel %vm267, %v469, 0
    %v511 = vsel %vm267, %v470, 0
    %v514 = vsel %vm267, %v471, 0
    %v517 = vsel %vm267, %v472, 0
    %v520 = vsel %vm267, %v473, 0
    %v523 = vsel %vm267, %v474, 0
    %v526 = vsel %vm267, %v475, 0
    %v529 = vsel %vm267, %v476, 0
    %531 = vmatprep.subr.mxu0 0.0
    %532 = vmatpush1.msra.mxu0 %v194
    %533 = vmatprep.subr.mxu0 0.0
    %534 = vmatpush1.msra.mxu0 %v195
    %535 = vmatprep.subr.mxu0 0.0
    %536 = vmatpush1.msra.mxu0 %v196
    %537 = vmatprep.subr.mxu0 0.0
    %538 = vmatpush1.msra.mxu0 %v197
    %539 = vmatprep.subr.mxu0 0.0
    %540 = vmatpush1.msra.mxu0 0.0
    %541 = vmatprep.subr.mxu0 0.0
    %542 = vmatpush1.msra.mxu0 0.0
    %543 = vmatprep.subr.mxu0 0.0
    %544 = vmatpush1.msra.mxu0 0.0
    %545 = vmatprep.subr.mxu0 0.0
    %546 = vmatpush1.msra.mxu0 0.0
    %547 = vmatprep.subr.mxu0 0.0
    %548 = vmatpush1.msra.mxu0 0.0
    %549 = vmatprep.subr.mxu0 0.0
    %550 = vmatpush1.msra.mxu0 0.0
    %551 = vmatprep.subr.mxu0 0.0
    %552 = vmatpush1.msra.mxu0 0.0
    %553 = vmatprep.subr.mxu0 0.0
    %554 = vmatpush1.msra.mxu0 0.0
    %555 = vmatprep.subr.mxu0 0.0
    %556 = vmatpush1.msra.mxu0 0.0
    %557 = vmatprep.subr.mxu0 0.0
    %558 = vmatpush1.msra.mxu0 0.0
    %559 = vmatprep.subr.mxu0 0.0
    %560 = vmatpush1.msra.mxu0 0.0
    %561 = vmatprep.subr.mxu0 0.0
    %562 = vmatpush1.msra.mxu0 0.0
    %563 = vmatprep.subr.mxu0 0.0
    %564 = vmatpush1.msra.mxu0 0.0
    %565 = vmatprep.subr.mxu0 0.0
    %566 = vmatpush1.msra.mxu0 0.0
    %567 = vmatprep.subr.mxu0 0.0
    %568 = vmatpush1.msra.mxu0 0.0
    %569 = vmatprep.subr.mxu0 0.0
    %570 = vmatpush1.msra.mxu0 0.0
    %571 = vmatprep.subr.mxu0 0.0
    %572 = vmatpush1.msra.mxu0 0.0
    %573 = vmatprep.subr.mxu0 0.0
    %574 = vmatpush1.msra.mxu0 0.0
    %575 = vmatprep.subr.mxu0 0.0
    %576 = vmatpush1.msra.mxu0 0.0
    %577 = vmatprep.subr.mxu0 0.0
    %578 = vmatpush1.msra.mxu0 0.0
    %579 = vmatprep.subr.mxu0 0.0
    %580 = vmatpush1.msra.mxu0 0.0
    %581 = vmatprep.subr.mxu0 0.0
    %582 = vmatpush1.msra.mxu0 0.0
    %583 = vmatprep.subr.mxu0 0.0
    %584 = vmatpush1.msra.mxu0 0.0
    %585 = vmatprep.subr.mxu0 0.0
    %586 = vmatpush1.msra.mxu0 0.0
    %587 = vmatprep.subr.mxu0 0.0
    %588 = vmatpush1.msra.mxu0 0.0
    %589 = vmatprep.subr.mxu0 0.0
    %590 = vmatpush1.msra.mxu0 0.0
    %591 = vmatprep.subr.mxu0 0.0
    %592 = vmatpush1.msra.mxu0 0.0
    %593 = vmatprep.subr.mxu0 0.0
    %594 = vmatpush1.msra.mxu0 0.0
    %595 = vmatprep.mubr.f32.mxu0 0.0
    %596 = vmatmul.mubr.f32.gmra.mrb[0].mxu0 %v484
    %v597 = vpop.f32.mrb[0].mxu0
    %v598 = vadd.f32 %v481, %v597
    %v599 = vpop.f32.mrb[0].mxu0
    %600 = vmatprep.mubr.f32.mxu0 0.0
    %601 = vmatmul.mubr.f32.gmra.mrb[0].mxu0 %v487
    %v602 = vpop.f32.mrb[0].mxu0
    %v603 = vadd.f32 %v481, %v602
    %v604 = vpop.f32.mrb[0].mxu0
    %605 = vmatprep.mubr.f32.mxu0 0.0
    %606 = vmatmul.mubr.f32.gmra.mrb[0].mxu0 %v490
    %v607 = vpop.f32.mrb[0].mxu0
    %v608 = vadd.f32 %v481, %v607
    %v609 = vpop.f32.mrb[0].mxu0
    %610 = vmatprep.mubr.f32.mxu0 0.0
    %611 = vmatmul.mubr.f32.gmra.mrb[0].mxu0 %v493
    %v612 = vpop.f32.mrb[0].mxu0
    %v613 = vadd.f32 %v481, %v612
    %v614 = vpop.f32.mrb[0].mxu0
    %615 = vmatprep.mubr.f32.mxu0 0.0
    %616 = vmatmul.mubr.f32.gmra.mrb[0].mxu0 %v496
    %v617 = vpop.f32.mrb[0].mxu0
    %v618 = vadd.f32 %v481, %v617
    %v619 = vpop.f32.mrb[0].mxu0
    %620 = vmatprep.mubr.f32.mxu0 0.0
    %621 = vmatmul.mubr.f32.gmra.mrb[0].mxu0 %v499
    %v622 = vpop.f32.mrb[0].mxu0
    %v623 = vadd.f32 %v481, %v622
    %v624 = vpop.f32.mrb[0].mxu0
    %625 = vmatprep.mubr.f32.mxu0 0.0
    %626 = vmatmul.mubr.f32.gmra.mrb[0].mxu0 %v502
    %v627 = vpop.f32.mrb[0].mxu0
    %v628 = vadd.f32 %v481, %v627
    %v629 = vpop.f32.mrb[0].mxu0
    %630 = vmatprep.mubr.f32.mxu0 0.0
    %631 = vmatmul.mubr.f32.gmra.mrb[0].mxu0 %v505
    %v632 = vpop.f32.mrb[0].mxu0
    %v633 = vadd.f32 %v481, %v632
    %v634 = vpop.f32.mrb[0].mxu0
    %635 = vmatprep.mubr.f32.mxu0 0.0
    %636 = vmatmul.mubr.f32.gmra.mrb[0].mxu0 %v508
    %v637 = vpop.f32.mrb[0].mxu0
    %v638 = vadd.f32 %v481, %v637
    %v639 = vpop.f32.mrb[0].mxu0
    %640 = vmatprep.mubr.f32.mxu0 0.0
    %641 = vmatmul.mubr.f32.gmra.mrb[0].mxu0 %v511
    %v642 = vpop.f32.mrb[0].mxu0
    %v643 = vadd.f32 %v481, %v642
    %v644 = vpop.f32.mrb[0].mxu0
    %645 = vmatprep.mubr.f32.mxu0 0.0
    %646 = vmatmul.mubr.f32.gmra.mrb[0].mxu0 %v514
    %v647 = vpop.f32.mrb[0].mxu0
    %v648 = vadd.f32 %v481, %v647
    %v649 = vpop.f32.mrb[0].mxu0
    %650 = vmatprep.mubr.f32.mxu0 0.0
    %651 = vmatmul.mubr.f32.gmra.mrb[0].mxu0 %v517
    %v652 = vpop.f32.mrb[0].mxu0
    %v653 = vadd.f32 %v481, %v652
    %v654 = vpop.f32.mrb[0].mxu0
    %655 = vmatprep.mubr.f32.mxu0 0.0
    %656 = vmatmul.mubr.f32.gmra.mrb[0].mxu0 %v520
    %v657 = vpop.f32.mrb[0].mxu0
    %v658 = vadd.f32 %v481, %v657
    %v659 = vpop.f32.mrb[0].mxu0
    %660 = vmatprep.mubr.f32.mxu0 0.0
    %661 = vmatmul.mubr.f32.gmra.mrb[0].mxu0 %v523
    %v662 = vpop.f32.mrb[0].mxu0
    %v663 = vadd.f32 %v481, %v662
    %v664 = vpop.f32.mrb[0].mxu0
    %665 = vmatprep.mubr.f32.mxu0 0.0
    %666 = vmatmul.mubr.f32.gmra.mrb[0].mxu0 %v526
    %v667 = vpop.f32.mrb[0].mxu0
    %v668 = vadd.f32 %v481, %v667
    %v669 = vpop.f32.mrb[0].mxu0
    %670 = vmatprep.mubr.f32.mxu0 0.0
    %671 = vmatmul.mubr.f32.gmra.mrb[0].mxu0 %v529
    %v672 = vpop.f32.mrb[0].mxu0
    %v673 = vadd.f32 %v481, %v672
    %v674 = vpop.f32.mrb[0].mxu0
    %675 = vdwg.mxu0
    %v677 = vlaneseq
    %v678 = vshrl.u32 %v677, 7
    %v679 = vsub.s32 0, %v678
    %v680 = vrot.slane %v203, %v679
    %682 = vmatprep.subr.mxu0 0.0
    %683 = vmatpush1.msra.mxu0 %v199
    %684 = vmatprep.subr.mxu0 0.0
    %685 = vmatpush1.msra.mxu0 %v200
    %686 = vmatprep.subr.mxu0 0.0
    %687 = vmatpush1.msra.mxu0 %v201
    %688 = vmatprep.subr.mxu0 0.0
    %689 = vmatpush1.msra.mxu0 %v202
    %690 = vmatprep.subr.mxu0 0.0
    %691 = vmatpush1.msra.mxu0 0.0
    %692 = vmatprep.subr.mxu0 0.0
    %693 = vmatpush1.msra.mxu0 0.0
    %694 = vmatprep.subr.mxu0 0.0
    %695 = vmatpush1.msra.mxu0 0.0
    %696 = vmatprep.subr.mxu0 0.0
    %697 = vmatpush1.msra.mxu0 0.0
    %698 = vmatprep.subr.mxu0 0.0
    %699 = vmatpush1.msra.mxu0 0.0
    %700 = vmatprep.subr.mxu0 0.0
    %701 = vmatpush1.msra.mxu0 0.0
    %702 = vmatprep.subr.mxu0 0.0
    %703 = vmatpush1.msra.mxu0 0.0
    %704 = vmatprep.subr.mxu0 0.0
    %705 = vmatpush1.msra.mxu0 0.0
    %706 = vmatprep.subr.mxu0 0.0
    %707 = vmatpush1.msra.mxu0 0.0
    %708 = vmatprep.subr.mxu0 0.0
    %709 = vmatpush1.msra.mxu0 0.0
    %710 = vmatprep.subr.mxu0 0.0
    %711 = vmatpush1.msra.mxu0 0.0
    %712 = vmatprep.subr.mxu0 0.0
    %713 = vmatpush1.msra.mxu0 0.0
    %714 = vmatprep.subr.mxu0 0.0
    %715 = vmatpush1.msra.mxu0 0.0
    %716 = vmatprep.subr.mxu0 0.0
    %717 = vmatpush1.msra.mxu0 0.0
    %718 = vmatprep.subr.mxu0 0.0
    %719 = vmatpush1.msra.mxu0 0.0
    %720 = vmatprep.subr.mxu0 0.0
    %721 = vmatpush1.msra.mxu0 0.0
    %722 = vmatprep.subr.mxu0 0.0
    %723 = vmatpush1.msra.mxu0 0.0
    %724 = vmatprep.subr.mxu0 0.0
    %725 = vmatpush1.msra.mxu0 0.0
    %726 = vmatprep.subr.mxu0 0.0
    %727 = vmatpush1.msra.mxu0 0.0
    %728 = vmatprep.subr.mxu0 0.0
    %729 = vmatpush1.msra.mxu0 0.0
    %730 = vmatprep.subr.mxu0 0.0
    %731 = vmatpush1.msra.mxu0 0.0
    %732 = vmatprep.subr.mxu0 0.0
    %733 = vmatpush1.msra.mxu0 0.0
    %734 = vmatprep.subr.mxu0 0.0
    %735 = vmatpush1.msra.mxu0 0.0
    %736 = vmatprep.subr.mxu0 0.0
    %737 = vmatpush1.msra.mxu0 0.0
    %738 = vmatprep.subr.mxu0 0.0
    %739 = vmatpush1.msra.mxu0 0.0
    %740 = vmatprep.subr.mxu0 0.0
    %741 = vmatpush1.msra.mxu0 0.0
    %742 = vmatprep.subr.mxu0 0.0
    %743 = vmatpush1.msra.mxu0 0.0
    %744 = vmatprep.subr.mxu0 0.0
    %745 = vmatpush1.msra.mxu0 0.0
    %746 = vmatprep.mubr.f32.mxu0 0.0
    %747 = vmatmul.mubr.f32.gmra.mrb[0].mxu0 %v484
    %v748 = vpop.f32.mrb[0].mxu0
    %v749 = vadd.f32 %v680, %v748
    %v750 = vpop.f32.mrb[0].mxu0
    %751 = vmatprep.mubr.f32.mxu0 0.0
    %752 = vmatmul.mubr.f32.gmra.mrb[0].mxu0 %v487
    %v753 = vpop.f32.mrb[0].mxu0
    %v754 = vadd.f32 %v680, %v753
    %v755 = vpop.f32.mrb[0].mxu0
    %756 = vmatprep.mubr.f32.mxu0 0.0
    %757 = vmatmul.mubr.f32.gmra.mrb[0].mxu0 %v490
    %v758 = vpop.f32.mrb[0].mxu0
    %v759 = vadd.f32 %v680, %v758
    %v760 = vpop.f32.mrb[0].mxu0
    %761 = vmatprep.mubr.f32.mxu0 0.0
    %762 = vmatmul.mubr.f32.gmra.mrb[0].mxu0 %v493
    %v763 = vpop.f32.mrb[0].mxu0
    %v764 = vadd.f32 %v680, %v763
    %v765 = vpop.f32.mrb[0].mxu0
    %766 = vmatprep.mubr.f32.mxu0 0.0
    %767 = vmatmul.mubr.f32.gmra.mrb[0].mxu0 %v496
    %v768 = vpop.f32.mrb[0].mxu0
    %v769 = vadd.f32 %v680, %v768
    %v770 = vpop.f32.mrb[0].mxu0
    %771 = vmatprep.mubr.f32.mxu0 0.0
    %772 = vmatmul.mubr.f32.gmra.mrb[0].mxu0 %v499
    %v773 = vpop.f32.mrb[0].mxu0
    %v774 = vadd.f32 %v680, %v773
    %v775 = vpop.f32.mrb[0].mxu0
    %776 = vmatprep.mubr.f32.mxu0 0.0
    %777 = vmatmul.mubr.f32.gmra.mrb[0].mxu0 %v502
    %v778 = vpop.f32.mrb[0].mxu0
    %v779 = vadd.f32 %v680, %v778
    %v780 = vpop.f32.mrb[0].mxu0
    %781 = vmatprep.mubr.f32.mxu0 0.0
    %782 = vmatmul.mubr.f32.gmra.mrb[0].mxu0 %v505
    %v783 = vpop.f32.mrb[0].mxu0
    %v784 = vadd.f32 %v680, %v783
    %v785 = vpop.f32.mrb[0].mxu0
    %786 = vmatprep.mubr.f32.mxu0 0.0
    %787 = vmatmul.mubr.f32.gmra.mrb[0].mxu0 %v508
    %v788 = vpop.f32.mrb[0].mxu0
    %v789 = vadd.f32 %v680, %v788
    %v790 = vpop.f32.mrb[0].mxu0
    %791 = vmatprep.mubr.f32.mxu0 0.0
    %792 = vmatmul.mubr.f32.gmra.mrb[0].mxu0 %v511
    %v793 = vpop.f32.mrb[0].mxu0
    %v794 = vadd.f32 %v680, %v793
    %v795 = vpop.f32.mrb[0].mxu0
    %796 = vmatprep.mubr.f32.mxu0 0.0
    %797 = vmatmul.mubr.f32.gmra.mrb[0].mxu0 %v514
    %v798 = vpop.f32.mrb[0].mxu0
    %v799 = vadd.f32 %v680, %v798
    %v800 = vpop.f32.mrb[0].mxu0
    %801 = vmatprep.mubr.f32.mxu0 0.0
    %802 = vmatmul.mubr.f32.gmra.mrb[0].mxu0 %v517
    %v803 = vpop.f32.mrb[0].mxu0
    %v804 = vadd.f32 %v680, %v803
    %v805 = vpop.f32.mrb[0].mxu0
    %806 = vmatprep.mubr.f32.mxu0 0.0
    %807 = vmatmul.mubr.f32.gmra.mrb[0].mxu0 %v520
    %v808 = vpop.f32.mrb[0].mxu0
    %v809 = vadd.f32 %v680, %v808
    %v810 = vpop.f32.mrb[0].mxu0
    %811 = vmatprep.mubr.f32.mxu0 0.0
    %812 = vmatmul.mubr.f32.gmra.mrb[0].mxu0 %v523
    %v813 = vpop.f32.mrb[0].mxu0
    %v814 = vadd.f32 %v680, %v813
    %v815 = vpop.f32.mrb[0].mxu0
    %816 = vmatprep.mubr.f32.mxu0 0.0
    %817 = vmatmul.mubr.f32.gmra.mrb[0].mxu0 %v526
    %v818 = vpop.f32.mrb[0].mxu0
    %v819 = vadd.f32 %v680, %v818
    %v820 = vpop.f32.mrb[0].mxu0
    %821 = vmatprep.mubr.f32.mxu0 0.0
    %822 = vmatmul.mubr.f32.gmra.mrb[0].mxu0 %v529
    %v823 = vpop.f32.mrb[0].mxu0
    %v824 = vadd.f32 %v680, %v823
    %v825 = vpop.f32.mrb[0].mxu0
    %826 = vdwg.mxu0
    %v827 = vld [vmem:[#allocation2] sm:$0xff]
    %v828 = vld [vmem:[#allocation2 + $0x8] sm:$0xff]
    %v829 = vsel %vm267, %v827, 0.0
    %830 = vadd.xlane.f32.xlu0 %v829
    %v831 = vpop.xlane.xlu0 %830
    %v832 = vsel %vm267, %v828, 0.0
    %833 = vadd.xlane.f32.xlu0 %v832
    %v834 = vpop.xlane.xlu0 %833
    %v835 = vmul.f32 %v831, %v316
    %v836 = vmul.f32 %v834, %v316
    %v837 = vsub.f32 %v827, %v835
    %v838 = vsub.f32 %v828, %v836
    %v839 = vmul.f32 %v837, %v837
    %v840 = vmul.f32 %v838, %v838
    %v841 = vsel %vm267, %v839, 0.0
    %842 = vadd.xlane.f32.xlu0 %v841
    %v843 = vpop.xlane.xlu0 %842
    %v844 = vsel %vm267, %v840, 0.0
    %845 = vadd.xlane.f32.xlu0 %v844
    %v846 = vpop.xlane.xlu0 %845
    %v847 = vmul.f32 %v843, %v316
    %v848 = vmul.f32 %v846, %v316
    %v849 = vadd.f32 %v847, 1e-05
    %v850 = vadd.f32 %v848, 1e-05
    %v851 = vrsqrt.pop %v849
    %v852 = vrsqrt.pop %v850
    %v853 = vmul.f32 %v837, %v851
    %v854 = vmul.f32 %v838, %v852
    %v856 = vlaneseq
    %v857 = vshrl.u32 %v856, 7
    %v858 = vsub.s32 0, %v857
    %v859 = vrot.slane %v208, %v858
    %v862 = vsel %vm267, %v853, 0
    %v865 = vsel %vm267, %v854, 0
    %867 = vmatprep.subr.mxu0 0.0
    %868 = vmatpush1.msra.mxu0 %v204
    %869 = vmatprep.subr.mxu0 0.0
    %870 = vmatpush1.msra.mxu0 %v205
    %871 = vmatprep.subr.mxu0 0.0
    %872 = vmatpush1.msra.mxu0 %v206
    %873 = vmatprep.subr.mxu0 0.0
    %874 = vmatpush1.msra.mxu0 %v207
    %875 = vmatprep.subr.mxu0 0.0
    %876 = vmatpush1.msra.mxu0 0.0
    %877 = vmatprep.subr.mxu0 0.0
    %878 = vmatpush1.msra.mxu0 0.0
    %879 = vmatprep.subr.mxu0 0.0
    %880 = vmatpush1.msra.mxu0 0.0
    %881 = vmatprep.subr.mxu0 0.0
    %882 = vmatpush1.msra.mxu0 0.0
    %883 = vmatprep.subr.mxu0 0.0
    %884 = vmatpush1.msra.mxu0 0.0
    %885 = vmatprep.subr.mxu0 0.0
    %886 = vmatpush1.msra.mxu0 0.0
    %887 = vmatprep.subr.mxu0 0.0
    %888 = vmatpush1.msra.mxu0 0.0
    %889 = vmatprep.subr.mxu0 0.0
    %890 = vmatpush1.msra.mxu0 0.0
    %891 = vmatprep.subr.mxu0 0.0
    %892 = vmatpush1.msra.mxu0 0.0
    %893 = vmatprep.subr.mxu0 0.0
    %894 = vmatpush1.msra.mxu0 0.0
    %895 = vmatprep.subr.mxu0 0.0
    %896 = vmatpush1.msra.mxu0 0.0
    %897 = vmatprep.subr.mxu0 0.0
    %898 = vmatpush1.msra.mxu0 0.0
    %899 = vmatprep.subr.mxu0 0.0
    %900 = vmatpush1.msra.mxu0 0.0
    %901 = vmatprep.subr.mxu0 0.0
    %902 = vmatpush1.msra.mxu0 0.0
    %903 = vmatprep.subr.mxu0 0.0
    %904 = vmatpush1.msra.mxu0 0.0
    %905 = vmatprep.subr.mxu0 0.0
    %906 = vmatpush1.msra.mxu0 0.0
    %907 = vmatprep.subr.mxu0 0.0
    %908 = vmatpush1.msra.mxu0 0.0
    %909 = vmatprep.subr.mxu0 0.0
    %910 = vmatpush1.msra.mxu0 0.0
    %911 = vmatprep.subr.mxu0 0.0
    %912 = vmatpush1.msra.mxu0 0.0
    %913 = vmatprep.subr.mxu0 0.0
    %914 = vmatpush1.msra.mxu0 0.0
    %915 = vmatprep.subr.mxu0 0.0
    %916 = vmatpush1.msra.mxu0 0.0
    %917 = vmatprep.subr.mxu0 0.0
    %918 = vmatpush1.msra.mxu0 0.0
    %919 = vmatprep.subr.mxu0 0.0
    %920 = vmatpush1.msra.mxu0 0.0
    %921 = vmatprep.subr.mxu0 0.0
    %922 = vmatpush1.msra.mxu0 0.0
    %923 = vmatprep.subr.mxu0 0.0
    %924 = vmatpush1.msra.mxu0 0.0
    %925 = vmatprep.subr.mxu0 0.0
    %926 = vmatpush1.msra.mxu0 0.0
    %927 = vmatprep.subr.mxu0 0.0
    %928 = vmatpush1.msra.mxu0 0.0
    %929 = vmatprep.subr.mxu0 0.0
    %930 = vmatpush1.msra.mxu0 0.0
    %931 = vmatprep.mubr.f32.mxu0 0.0
    %932 = vmatmul.mubr.f32.gmra.mrb[0].mxu0 %v862
    %v933 = vpop.f32.mrb[0].mxu0
    %v934 = vadd.f32 %v859, %v933
    %v935 = vpop.f32.mrb[0].mxu0
    %936 = vmatprep.mubr.f32.mxu0 0.0
    %937 = vmatmul.mubr.f32.gmra.mrb[0].mxu0 %v865
    %v938 = vpop.f32.mrb[0].mxu0
    %v939 = vadd.f32 %v859, %v938
    %v940 = vpop.f32.mrb[0].mxu0
    %941 = vdwg.mxu0
    %v943 = vsel %vm267, %v934, 0
    %v946 = vsel %vm267, %v598, 0
    %v949 = vsel %vm267, %v603, 0
    %v952 = vsel %vm267, %v608, 0
    %v955 = vsel %vm267, %v613, 0
    %v958 = vsel %vm267, %v618, 0
    %v961 = vsel %vm267, %v623, 0
    %v964 = vsel %vm267, %v628, 0
    %v967 = vsel %vm267, %v633, 0
    %969 = vmatprep.subr.mxu0 0.0
    %970 = vmatpush1.xpose.msra.mxu0 %v946
    %971 = vmatprep.subr.mxu0 0.0
    %972 = vmatpush1.xpose.msra.mxu0 %v949
    %973 = vmatprep.subr.mxu0 0.0
    %974 = vmatpush1.xpose.msra.mxu0 %v952
    %975 = vmatprep.subr.mxu0 0.0
    %976 = vmatpush1.xpose.msra.mxu0 %v955
    %977 = vmatprep.subr.mxu0 0.0
    %978 = vmatpush1.xpose.msra.mxu0 %v958
    %979 = vmatprep.subr.mxu0 0.0
    %980 = vmatpush1.xpose.msra.mxu0 %v961
    %981 = vmatprep.subr.mxu0 0.0
    %982 = vmatpush1.xpose.msra.mxu0 %v964
    %983 = vmatprep.subr.mxu0 0.0
    %984 = vmatpush1.xpose.msra.mxu0 %v967
    %985 = vmatprep.subr.mxu0 0.0
    %986 = vmatpush1.xpose.msra.mxu0 0.0
    %987 = vmatprep.subr.mxu0 0.0
    %988 = vmatpush1.xpose.msra.mxu0 0.0
    %989 = vmatprep.subr.mxu0 0.0
    %990 = vmatpush1.xpose.msra.mxu0 0.0
    %991 = vmatprep.subr.mxu0 0.0
    %992 = vmatpush1.xpose.msra.mxu0 0.0
    %993 = vmatprep.subr.mxu0 0.0
    %994 = vmatpush1.xpose.msra.mxu0 0.0
    %995 = vmatprep.subr.mxu0 0.0
    %996 = vmatpush1.xpose.msra.mxu0 0.0
    %997 = vmatprep.subr.mxu0 0.0
    %998 = vmatpush1.xpose.msra.mxu0 0.0
    %999 = vmatprep.subr.mxu0 0.0
    %1000 = vmatpush1.xpose.msra.mxu0 0.0
    %1001 = vmatprep.subr.mxu0 0.0
    %1002 = vmatpush1.xpose.msra.mxu0 0.0
    %1003 = vmatprep.subr.mxu0 0.0
    %1004 = vmatpush1.xpose.msra.mxu0 0.0
    %1005 = vmatprep.subr.mxu0 0.0
    %1006 = vmatpush1.xpose.msra.mxu0 0.0
    %1007 = vmatprep.subr.mxu0 0.0
    %1008 = vmatpush1.xpose.msra.mxu0 0.0
    %1009 = vmatprep.subr.mxu0 0.0
    %1010 = vmatpush1.xpose.msra.mxu0 0.0
    %1011 = vmatprep.subr.mxu0 0.0
    %1012 = vmatpush1.xpose.msra.mxu0 0.0
    %1013 = vmatprep.subr.mxu0 0.0
    %1014 = vmatpush1.xpose.msra.mxu0 0.0
    %1015 = vmatprep.subr.mxu0 0.0
    %1016 = vmatpush1.xpose.msra.mxu0 0.0
    %1017 = vmatprep.subr.mxu0 0.0
    %1018 = vmatpush1.xpose.msra.mxu0 0.0
    %1019 = vmatprep.subr.mxu0 0.0
    %1020 = vmatpush1.xpose.msra.mxu0 0.0
    %1021 = vmatprep.subr.mxu0 0.0
    %1022 = vmatpush1.xpose.msra.mxu0 0.0
    %1023 = vmatprep.subr.mxu0 0.0
    %1024 = vmatpush1.xpose.msra.mxu0 0.0
    %1025 = vmatprep.subr.mxu0 0.0
    %1026 = vmatpush1.xpose.msra.mxu0 0.0
    %1027 = vmatprep.subr.mxu0 0.0
    %1028 = vmatpush1.xpose.msra.mxu0 0.0
    %1029 = vmatprep.subr.mxu0 0.0
    %1030 = vmatpush1.xpose.msra.mxu0 0.0
    %1031 = vmatprep.subr.mxu0 0.0
    %1032 = vmatpush1.xpose.msra.mxu0 0.0
    %1033 = vmatprep.mubr.f32.mxu0 0.0
    %1034 = vmatmul.mubr.f32.gmra.mrb[0].mxu0 %v943
    %v1035 = vpop.f32.mrb[0].mxu0
    %v1036 = vadd.f32 0.0, %v1035
    %v1037 = vpop.f32.mrb[0].mxu0
    %1038 = vdwg.mxu0
    %v1040 = vsel %vm267, %v939, 0
    %v1043 = vsel %vm267, %v638, 0
    %v1046 = vsel %vm267, %v643, 0
    %v1049 = vsel %vm267, %v648, 0
    %v1052 = vsel %vm267, %v653, 0
    %v1055 = vsel %vm267, %v658, 0
    %v1058 = vsel %vm267, %v663, 0
    %v1061 = vsel %vm267, %v668, 0
    %v1064 = vsel %vm267, %v673, 0
    %1066 = vmatprep.subr.mxu0 0.0
    %1067 = vmatpush1.xpose.msra.mxu0 %v1043
    %1068 = vmatprep.subr.mxu0 0.0
    %1069 = vmatpush1.xpose.msra.mxu0 %v1046
    %1070 = vmatprep.subr.mxu0 0.0
    %1071 = vmatpush1.xpose.msra.mxu0 %v1049
    %1072 = vmatprep.subr.mxu0 0.0
    %1073 = vmatpush1.xpose.msra.mxu0 %v1052
    %1074 = vmatprep.subr.mxu0 0.0
    %1075 = vmatpush1.xpose.msra.mxu0 %v1055
    %1076 = vmatprep.subr.mxu0 0.0
    %1077 = vmatpush1.xpose.msra.mxu0 %v1058
    %1078 = vmatprep.subr.mxu0 0.0
    %1079 = vmatpush1.xpose.msra.mxu0 %v1061
    %1080 = vmatprep.subr.mxu0 0.0
    %1081 = vmatpush1.xpose.msra.mxu0 %v1064
    %1082 = vmatprep.subr.mxu0 0.0
    %1083 = vmatpush1.xpose.msra.mxu0 0.0
    %1084 = vmatprep.subr.mxu0 0.0
    %1085 = vmatpush1.xpose.msra.mxu0 0.0
    %1086 = vmatprep.subr.mxu0 0.0
    %1087 = vmatpush1.xpose.msra.mxu0 0.0
    %1088 = vmatprep.subr.mxu0 0.0
    %1089 = vmatpush1.xpose.msra.mxu0 0.0
    %1090 = vmatprep.subr.mxu0 0.0
    %1091 = vmatpush1.xpose.msra.mxu0 0.0
    %1092 = vmatprep.subr.mxu0 0.0
    %1093 = vmatpush1.xpose.msra.mxu0 0.0
    %1094 = vmatprep.subr.mxu0 0.0
    %1095 = vmatpush1.xpose.msra.mxu0 0.0
    %1096 = vmatprep.subr.mxu0 0.0
    %1097 = vmatpush1.xpose.msra.mxu0 0.0
    %1098 = vmatprep.subr.mxu0 0.0
    %1099 = vmatpush1.xpose.msra.mxu0 0.0
    %1100 = vmatprep.subr.mxu0 0.0
    %1101 = vmatpush1.xpose.msra.mxu0 0.0
    %1102 = vmatprep.subr.mxu0 0.0
    %1103 = vmatpush1.xpose.msra.mxu0 0.0
    %1104 = vmatprep.subr.mxu0 0.0
    %1105 = vmatpush1.xpose.msra.mxu0 0.0
    %1106 = vmatprep.subr.mxu0 0.0
    %1107 = vmatpush1.xpose.msra.mxu0 0.0
    %1108 = vmatprep.subr.mxu0 0.0
    %1109 = vmatpush1.xpose.msra.mxu0 0.0
    %1110 = vmatprep.subr.mxu0 0.0
    %1111 = vmatpush1.xpose.msra.mxu0 0.0
    %1112 = vmatprep.subr.mxu0 0.0
    %1113 = vmatpush1.xpose.msra.mxu0 0.0
    %1114 = vmatprep.subr.mxu0 0.0
    %1115 = vmatpush1.xpose.msra.mxu0 0.0
    %1116 = vmatprep.subr.mxu0 0.0
    %1117 = vmatpush1.xpose.msra.mxu0 0.0
    %1118 = vmatprep.subr.mxu0 0.0
    %1119 = vmatpush1.xpose.msra.mxu0 0.0
    %1120 = vmatprep.subr.mxu0 0.0
    %1121 = vmatpush1.xpose.msra.mxu0 0.0
    %1122 = vmatprep.subr.mxu0 0.0
    %1123 = vmatpush1.xpose.msra.mxu0 0.0
    %1124 = vmatprep.subr.mxu0 0.0
    %1125 = vmatpush1.xpose.msra.mxu0 0.0
    %1126 = vmatprep.subr.mxu0 0.0
    %1127 = vmatpush1.xpose.msra.mxu0 0.0
    %1128 = vmatprep.subr.mxu0 0.0
    %1129 = vmatpush1.xpose.msra.mxu0 0.0
    %1130 = vmatprep.mubr.f32.mxu0 0.0
    %1131 = vmatmul.mubr.f32.gmra.mrb[0].mxu0 %v1040
    %v1132 = vpop.f32.mrb[0].mxu0
    %v1133 = vadd.f32 0.0, %v1132
    %v1134 = vpop.f32.mrb[0].mxu0
    %1135 = vdwg.mxu0
    %vm1136 = vcmask 523264
    %v1137 = vsel %vm1136, %v1036, -inf
    %v1138 = vrot.slane %v1137, 4
    %v1139 = vmax.f32 %v1137, %v1138
    %v1140 = vrot.slane %v1139, 2
    %v1141 = vmax.f32 %v1139, %v1140
    %v1142 = vrot.slane %v1141, 1
    %v1143 = vmax.f32 %v1141, %v1142
    %v1144 = vsel %vm1136, %v1133, -inf
    %v1145 = vrot.slane %v1144, 4
    %v1146 = vmax.f32 %v1144, %v1145
    %v1147 = vrot.slane %v1146, 2
    %v1148 = vmax.f32 %v1146, %v1147
    %v1149 = vrot.slane %v1148, 1
    %v1150 = vmax.f32 %v1148, %v1149
    %v1151 = vsub.f32 %v1036, %v1143
    %v1152 = vsub.f32 %v1133, %v1150
    %v1153 = vmul.f32 %v1151, 1.442695
    %v1154 = vpow.pop %v1153
    %v1155 = vmul.f32 %v1152, 1.442695
    %v1156 = vpow.pop %v1155
    %v1157 = vsel %vm1136, %v1154, 0.0
    %v1158 = vrot.slane %v1157, 4
    %v1159 = vadd.f32 %v1157, %v1158
    %v1160 = vrot.slane %v1159, 2
    %v1161 = vadd.f32 %v1159, %v1160
    %v1162 = vrot.slane %v1161, 1
    %v1163 = vadd.f32 %v1161, %v1162
    %v1164 = vsel %vm1136, %v1156, 0.0
    %v1165 = vrot.slane %v1164, 4
    %v1166 = vadd.f32 %v1164, %v1165
    %v1167 = vrot.slane %v1166, 2
    %v1168 = vadd.f32 %v1166, %v1167
    %v1169 = vrot.slane %v1168, 1
    %v1170 = vadd.f32 %v1168, %v1169
    %v1171 = vrcp.pop %v1163
    %v1172 = vrcp.pop %v1170
    %v1173 = vmul.f32 %v1154, %v1171
    %v1174 = vmul.f32 %v1156, %v1172
    %v1175 = vadd.f32 %v1173, 1e-06
    %v1176 = vadd.f32 %v1174, 1e-06
    %v1177 = vsel %vm1136, %v1175, 0.0
    %1178 = vadd.xlane.f32.xlu0 %v1177
    %v1179 = vpop.xlane.xlu0 %1178
    %v1180 = vsel %vm1136, %v1176, 0.0
    %1181 = vadd.xlane.f32.xlu0 %v1180
    %v1182 = vpop.xlane.xlu0 %1181
    %v1183 = vrcp.pop %v1179
    %v1184 = vrcp.pop %v1182
    %v1185 = vmul.f32 %v1175, %v1183
    %v1186 = vmul.f32 %v1176, %v1184
    %v1188 = vsel %vm1136, %v1185, 0
    %1190 = vmatprep.subr.mxu0 0.0
    %1191 = vmatpush1.msra.mxu0 %v749
    %1192 = vmatprep.subr.mxu0 0.0
    %1193 = vmatpush1.msra.mxu0 %v754
    %1194 = vmatprep.subr.mxu0 0.0
    %1195 = vmatpush1.msra.mxu0 %v759
    %1196 = vmatprep.subr.mxu0 0.0
    %1197 = vmatpush1.msra.mxu0 %v764
    %1198 = vmatprep.subr.mxu0 0.0
    %1199 = vmatpush1.msra.mxu0 %v769
    %1200 = vmatprep.subr.mxu0 0.0
    %1201 = vmatpush1.msra.mxu0 %v774
    %1202 = vmatprep.subr.mxu0 0.0
    %1203 = vmatpush1.msra.mxu0 %v779
    %1204 = vmatprep.subr.mxu0 0.0
    %1205 = vmatpush1.msra.mxu0 %v784
    %1206 = vmatprep.subr.mxu0 0.0
    %1207 = vmatpush1.msra.mxu0 0.0
    %1208 = vmatprep.subr.mxu0 0.0
    %1209 = vmatpush1.msra.mxu0 0.0
    %1210 = vmatprep.subr.mxu0 0.0
    %1211 = vmatpush1.msra.mxu0 0.0
    %1212 = vmatprep.subr.mxu0 0.0
    %1213 = vmatpush1.msra.mxu0 0.0
    %1214 = vmatprep.subr.mxu0 0.0
    %1215 = vmatpush1.msra.mxu0 0.0
    %1216 = vmatprep.subr.mxu0 0.0
    %1217 = vmatpush1.msra.mxu0 0.0
    %1218 = vmatprep.subr.mxu0 0.0
    %1219 = vmatpush1.msra.mxu0 0.0
    %1220 = vmatprep.subr.mxu0 0.0
    %1221 = vmatpush1.msra.mxu0 0.0
    %1222 = vmatprep.subr.mxu0 0.0
    %1223 = vmatpush1.msra.mxu0 0.0
    %1224 = vmatprep.subr.mxu0 0.0
    %1225 = vmatpush1.msra.mxu0 0.0
    %1226 = vmatprep.subr.mxu0 0.0
    %1227 = vmatpush1.msra.mxu0 0.0
    %1228 = vmatprep.subr.mxu0 0.0
    %1229 = vmatpush1.msra.mxu0 0.0
    %1230 = vmatprep.subr.mxu0 0.0
    %1231 = vmatpush1.msra.mxu0 0.0
    %1232 = vmatprep.subr.mxu0 0.0
    %1233 = vmatpush1.msra.mxu0 0.0
    %1234 = vmatprep.subr.mxu0 0.0
    %1235 = vmatpush1.msra.mxu0 0.0
    %1236 = vmatprep.subr.mxu0 0.0
    %1237 = vmatpush1.msra.mxu0 0.0
    %1238 = vmatprep.subr.mxu0 0.0
    %1239 = vmatpush1.msra.mxu0 0.0
    %1240 = vmatprep.subr.mxu0 0.0
    %1241 = vmatpush1.msra.mxu0 0.0
    %1242 = vmatprep.subr.mxu0 0.0
    %1243 = vmatpush1.msra.mxu0 0.0
    %1244 = vmatprep.subr.mxu0 0.0
    %1245 = vmatpush1.msra.mxu0 0.0
    %1246 = vmatprep.subr.mxu0 0.0
    %1247 = vmatpush1.msra.mxu0 0.0
    %1248 = vmatprep.subr.mxu0 0.0
    %1249 = vmatpush1.msra.mxu0 0.0
    %1250 = vmatprep.subr.mxu0 0.0
    %1251 = vmatpush1.msra.mxu0 0.0
    %1252 = vmatprep.subr.mxu0 0.0
    %1253 = vmatpush1.msra.mxu0 0.0
    %1254 = vmatprep.mubr.f32.mxu0 0.0
    %1255 = vmatmul.mubr.f32.gmra.mrb[0].mxu0 %v1188
    %v1256 = vpop.f32.mrb[0].mxu0
    %v1257 = vadd.f32 0.0, %v1256
    %v1258 = vpop.f32.mrb[0].mxu0
    %1259 = vdwg.mxu0
    %v1261 = vsel %vm1136, %v1186, 0
    %1263 = vmatprep.subr.mxu0 0.0
    %1264 = vmatpush1.msra.mxu0 %v789
    %1265 = vmatprep.subr.mxu0 0.0
    %1266 = vmatpush1.msra.mxu0 %v794
    %1267 = vmatprep.subr.mxu0 0.0
    %1268 = vmatpush1.msra.mxu0 %v799
    %1269 = vmatprep.subr.mxu0 0.0
    %1270 = vmatpush1.msra.mxu0 %v804
    %1271 = vmatprep.subr.mxu0 0.0
    %1272 = vmatpush1.msra.mxu0 %v809
    %1273 = vmatprep.subr.mxu0 0.0
    %1274 = vmatpush1.msra.mxu0 %v814
    %1275 = vmatprep.subr.mxu0 0.0
    %1276 = vmatpush1.msra.mxu0 %v819
    %1277 = vmatprep.subr.mxu0 0.0
    %1278 = vmatpush1.msra.mxu0 %v824
    %1279 = vmatprep.subr.mxu0 0.0
    %1280 = vmatpush1.msra.mxu0 0.0
    %1281 = vmatprep.subr.mxu0 0.0
    %1282 = vmatpush1.msra.mxu0 0.0
    %1283 = vmatprep.subr.mxu0 0.0
    %1284 = vmatpush1.msra.mxu0 0.0
    %1285 = vmatprep.subr.mxu0 0.0
    %1286 = vmatpush1.msra.mxu0 0.0
    %1287 = vmatprep.subr.mxu0 0.0
    %1288 = vmatpush1.msra.mxu0 0.0
    %1289 = vmatprep.subr.mxu0 0.0
    %1290 = vmatpush1.msra.mxu0 0.0
    %1291 = vmatprep.subr.mxu0 0.0
    %1292 = vmatpush1.msra.mxu0 0.0
    %1293 = vmatprep.subr.mxu0 0.0
    %1294 = vmatpush1.msra.mxu0 0.0
    %1295 = vmatprep.subr.mxu0 0.0
    %1296 = vmatpush1.msra.mxu0 0.0
    %1297 = vmatprep.subr.mxu0 0.0
    %1298 = vmatpush1.msra.mxu0 0.0
    %1299 = vmatprep.subr.mxu0 0.0
    %1300 = vmatpush1.msra.mxu0 0.0
    %1301 = vmatprep.subr.mxu0 0.0
    %1302 = vmatpush1.msra.mxu0 0.0
    %1303 = vmatprep.subr.mxu0 0.0
    %1304 = vmatpush1.msra.mxu0 0.0
    %1305 = vmatprep.subr.mxu0 0.0
    %1306 = vmatpush1.msra.mxu0 0.0
    %1307 = vmatprep.subr.mxu0 0.0
    %1308 = vmatpush1.msra.mxu0 0.0
    %1309 = vmatprep.subr.mxu0 0.0
    %1310 = vmatpush1.msra.mxu0 0.0
    %1311 = vmatprep.subr.mxu0 0.0
    %1312 = vmatpush1.msra.mxu0 0.0
    %1313 = vmatprep.subr.mxu0 0.0
    %1314 = vmatpush1.msra.mxu0 0.0
    %1315 = vmatprep.subr.mxu0 0.0
    %1316 = vmatpush1.msra.mxu0 0.0
    %1317 = vmatprep.subr.mxu0 0.0
    %1318 = vmatpush1.msra.mxu0 0.0
    %1319 = vmatprep.subr.mxu0 0.0
    %1320 = vmatpush1.msra.mxu0 0.0
    %1321 = vmatprep.subr.mxu0 0.0
    %1322 = vmatpush1.msra.mxu0 0.0
    %1323 = vmatprep.subr.mxu0 0.0
    %1324 = vmatpush1.msra.mxu0 0.0
    %1325 = vmatprep.subr.mxu0 0.0
    %1326 = vmatpush1.msra.mxu0 0.0
    %1327 = vmatprep.mubr.f32.mxu0 0.0
    %1328 = vmatmul.mubr.f32.gmra.mrb[0].mxu0 %v1261
    %v1329 = vpop.f32.mrb[0].mxu0
    %v1330 = vadd.f32 0.0, %v1329
    %v1331 = vpop.f32.mrb[0].mxu0
    %1332 = vdwg.mxu0
    %v1334 = vsel %vm267, %v827, 0
    %v1337 = vsel %vm267, %v828, 0
    %1339 = vmatprep.subr.mxu0 0.0
    %1340 = vmatpush1.msra.mxu0 %v221
    %1341 = vmatprep.subr.mxu0 0.0
    %1342 = vmatpush1.msra.mxu0 %v222
    %1343 = vmatprep.subr.mxu0 0.0
    %1344 = vmatpush1.msra.mxu0 %v223
    %1345 = vmatprep.subr.mxu0 0.0
    %1346 = vmatpush1.msra.mxu0 %v224
    %1347 = vmatprep.subr.mxu0 0.0
    %1348 = vmatpush1.msra.mxu0 0.0
    %1349 = vmatprep.subr.mxu0 0.0
    %1350 = vmatpush1.msra.mxu0 0.0
    %1351 = vmatprep.subr.mxu0 0.0
    %1352 = vmatpush1.msra.mxu0 0.0
    %1353 = vmatprep.subr.mxu0 0.0
    %1354 = vmatpush1.msra.mxu0 0.0
    %1355 = vmatprep.subr.mxu0 0.0
    %1356 = vmatpush1.msra.mxu0 0.0
    %1357 = vmatprep.subr.mxu0 0.0
    %1358 = vmatpush1.msra.mxu0 0.0
    %1359 = vmatprep.subr.mxu0 0.0
    %1360 = vmatpush1.msra.mxu0 0.0
    %1361 = vmatprep.subr.mxu0 0.0
    %1362 = vmatpush1.msra.mxu0 0.0
    %1363 = vmatprep.subr.mxu0 0.0
    %1364 = vmatpush1.msra.mxu0 0.0
    %1365 = vmatprep.subr.mxu0 0.0
    %1366 = vmatpush1.msra.mxu0 0.0
    %1367 = vmatprep.subr.mxu0 0.0
    %1368 = vmatpush1.msra.mxu0 0.0
    %1369 = vmatprep.subr.mxu0 0.0
    %1370 = vmatpush1.msra.mxu0 0.0
    %1371 = vmatprep.subr.mxu0 0.0
    %1372 = vmatpush1.msra.mxu0 0.0
    %1373 = vmatprep.subr.mxu0 0.0
    %1374 = vmatpush1.msra.mxu0 0.0
    %1375 = vmatprep.subr.mxu0 0.0
    %1376 = vmatpush1.msra.mxu0 0.0
    %1377 = vmatprep.subr.mxu0 0.0
    %1378 = vmatpush1.msra.mxu0 0.0
    %1379 = vmatprep.subr.mxu0 0.0
    %1380 = vmatpush1.msra.mxu0 0.0
    %1381 = vmatprep.subr.mxu0 0.0
    %1382 = vmatpush1.msra.mxu0 0.0
    %1383 = vmatprep.subr.mxu0 0.0
    %1384 = vmatpush1.msra.mxu0 0.0
    %1385 = vmatprep.subr.mxu0 0.0
    %1386 = vmatpush1.msra.mxu0 0.0
    %1387 = vmatprep.subr.mxu0 0.0
    %1388 = vmatpush1.msra.mxu0 0.0
    %1389 = vmatprep.subr.mxu0 0.0
    %1390 = vmatpush1.msra.mxu0 0.0
    %1391 = vmatprep.subr.mxu0 0.0
    %1392 = vmatpush1.msra.mxu0 0.0
    %1393 = vmatprep.subr.mxu0 0.0
    %1394 = vmatpush1.msra.mxu0 0.0
    %1395 = vmatprep.subr.mxu0 0.0
    %1396 = vmatpush1.msra.mxu0 0.0
    %1397 = vmatprep.subr.mxu0 0.0
    %1398 = vmatpush1.msra.mxu0 0.0
    %1399 = vmatprep.subr.mxu0 0.0
    %1400 = vmatpush1.msra.mxu0 0.0
    %1401 = vmatprep.subr.mxu0 0.0
    %1402 = vmatpush1.msra.mxu0 0.0
    %1403 = vmatprep.mubr.f32.mxu0 0.0
    %1404 = vmatmul.mubr.f32.gmra.mrb[0].mxu0 %v1334
    %v1405 = vpop.f32.mrb[0].mxu0
    %v1406 = vadd.f32 0.0, %v1405
    %v1407 = vpop.f32.mrb[0].mxu0
    %1408 = vmatprep.mubr.f32.mxu0 0.0
    %1409 = vmatmul.mubr.f32.gmra.mrb[0].mxu0 %v1337
    %v1410 = vpop.f32.mrb[0].mxu0
    %v1411 = vadd.f32 0.0, %v1410
    %v1412 = vpop.f32.mrb[0].mxu0
    %1413 = vdwg.mxu0
    %v1415 = vsel %vm267, %v1257, 0
    %v1418 = vsel %vm267, %v1330, 0
    %1420 = vmatprep.subr.mxu0 0.0
    %1421 = vmatpush1.msra.mxu0 %v209
    %1422 = vmatprep.subr.mxu0 0.0
    %1423 = vmatpush1.msra.mxu0 %v210
    %1424 = vmatprep.subr.mxu0 0.0
    %1425 = vmatpush1.msra.mxu0 %v211
    %1426 = vmatprep.subr.mxu0 0.0
    %1427 = vmatpush1.msra.mxu0 %v212
    %1428 = vmatprep.subr.mxu0 0.0
    %1429 = vmatpush1.msra.mxu0 0.0
    %1430 = vmatprep.subr.mxu0 0.0
    %1431 = vmatpush1.msra.mxu0 0.0
    %1432 = vmatprep.subr.mxu0 0.0
    %1433 = vmatpush1.msra.mxu0 0.0
    %1434 = vmatprep.subr.mxu0 0.0
    %1435 = vmatpush1.msra.mxu0 0.0
    %1436 = vmatprep.subr.mxu0 0.0
    %1437 = vmatpush1.msra.mxu0 0.0
    %1438 = vmatprep.subr.mxu0 0.0
    %1439 = vmatpush1.msra.mxu0 0.0
    %1440 = vmatprep.subr.mxu0 0.0
    %1441 = vmatpush1.msra.mxu0 0.0
    %1442 = vmatprep.subr.mxu0 0.0
    %1443 = vmatpush1.msra.mxu0 0.0
    %1444 = vmatprep.subr.mxu0 0.0
    %1445 = vmatpush1.msra.mxu0 0.0
    %1446 = vmatprep.subr.mxu0 0.0
    %1447 = vmatpush1.msra.mxu0 0.0
    %1448 = vmatprep.subr.mxu0 0.0
    %1449 = vmatpush1.msra.mxu0 0.0
    %1450 = vmatprep.subr.mxu0 0.0
    %1451 = vmatpush1.msra.mxu0 0.0
    %1452 = vmatprep.subr.mxu0 0.0
    %1453 = vmatpush1.msra.mxu0 0.0
    %1454 = vmatprep.subr.mxu0 0.0
    %1455 = vmatpush1.msra.mxu0 0.0
    %1456 = vmatprep.subr.mxu0 0.0
    %1457 = vmatpush1.msra.mxu0 0.0
    %1458 = vmatprep.subr.mxu0 0.0
    %1459 = vmatpush1.msra.mxu0 0.0
    %1460 = vmatprep.subr.mxu0 0.0
    %1461 = vmatpush1.msra.mxu0 0.0
    %1462 = vmatprep.subr.mxu0 0.0
    %1463 = vmatpush1.msra.mxu0 0.0
    %1464 = vmatprep.subr.mxu0 0.0
    %1465 = vmatpush1.msra.mxu0 0.0
    %1466 = vmatprep.subr.mxu0 0.0
    %1467 = vmatpush1.msra.mxu0 0.0
    %1468 = vmatprep.subr.mxu0 0.0
    %1469 = vmatpush1.msra.mxu0 0.0
    %1470 = vmatprep.subr.mxu0 0.0
    %1471 = vmatpush1.msra.mxu0 0.0
    %1472 = vmatprep.subr.mxu0 0.0
    %1473 = vmatpush1.msra.mxu0 0.0
    %1474 = vmatprep.subr.mxu0 0.0
    %1475 = vmatpush1.msra.mxu0 0.0
    %1476 = vmatprep.subr.mxu0 0.0
    %1477 = vmatpush1.msra.mxu0 0.0
    %1478 = vmatprep.subr.mxu0 0.0
    %1479 = vmatpush1.msra.mxu0 0.0
    %1480 = vmatprep.subr.mxu0 0.0
    %1481 = vmatpush1.msra.mxu0 0.0
    %1482 = vmatprep.subr.mxu0 0.0
    %1483 = vmatpush1.msra.mxu0 0.0
    %1484 = vmatprep.mubr.f32.mxu0 0.0
    %1485 = vmatmul.mubr.f32.gmra.mrb[0].mxu0 %v1415
    %v1486 = vpop.f32.mrb[0].mxu0
    %v1487 = vadd.f32 %v1406, %v1486
    %v1488 = vpop.f32.mrb[0].mxu0
    %1489 = vmatprep.mubr.f32.mxu0 0.0
    %1490 = vmatmul.mubr.f32.gmra.mrb[0].mxu0 %v1418
    %v1491 = vpop.f32.mrb[0].mxu0
    %v1492 = vadd.f32 %v1411, %v1491
    %v1493 = vpop.f32.mrb[0].mxu0
    %1494 = vdwg.mxu0
    %v1496 = vlaneseq
    %v1497 = vshrl.u32 %v1496, 7
    %v1498 = vsub.s32 0, %v1497
    %v1499 = vrot.slane %v233, %v1498
    %v1501 = vadd.f32 %v1487, %v1499
    %v1502 = vadd.f32 %v1492, %v1499
    %v1503 = vxor.u32 %v1501, 2147483648
    %v1504 = vxor.u32 %v1502, 2147483648
    %v1505 = vmul.f32 %v1503, 1.442695
    %v1506 = vpow.pop %v1505
    %v1507 = vmul.f32 %v1504, 1.442695
    %v1508 = vpow.pop %v1507
    %v1509 = vadd.f32 %v1506, 1.0
    %v1510 = vadd.f32 %v1508, 1.0
    %v1511 = vrcp.pop %v1509
    %v1512 = vmul.f32 1.0, %v1511
    %v1513 = vrcp.pop %v1510
    %v1514 = vmul.f32 1.0, %v1513
    %1515 = vmatprep.subr.mxu0 0.0
    %1516 = vmatpush1.msra.mxu0 %v225
    %1517 = vmatprep.subr.mxu0 0.0
    %1518 = vmatpush1.msra.mxu0 %v226
    %1519 = vmatprep.subr.mxu0 0.0
    %1520 = vmatpush1.msra.mxu0 %v227
    %1521 = vmatprep.subr.mxu0 0.0
    %1522 = vmatpush1.msra.mxu0 %v228
    %1523 = vmatprep.subr.mxu0 0.0
    %1524 = vmatpush1.msra.mxu0 0.0
    %1525 = vmatprep.subr.mxu0 0.0
    %1526 = vmatpush1.msra.mxu0 0.0
    %1527 = vmatprep.subr.mxu0 0.0
    %1528 = vmatpush1.msra.mxu0 0.0
    %1529 = vmatprep.subr.mxu0 0.0
    %1530 = vmatpush1.msra.mxu0 0.0
    %1531 = vmatprep.subr.mxu0 0.0
    %1532 = vmatpush1.msra.mxu0 0.0
    %1533 = vmatprep.subr.mxu0 0.0
    %1534 = vmatpush1.msra.mxu0 0.0
    %1535 = vmatprep.subr.mxu0 0.0
    %1536 = vmatpush1.msra.mxu0 0.0
    %1537 = vmatprep.subr.mxu0 0.0
    %1538 = vmatpush1.msra.mxu0 0.0
    %1539 = vmatprep.subr.mxu0 0.0
    %1540 = vmatpush1.msra.mxu0 0.0
    %1541 = vmatprep.subr.mxu0 0.0
    %1542 = vmatpush1.msra.mxu0 0.0
    %1543 = vmatprep.subr.mxu0 0.0
    %1544 = vmatpush1.msra.mxu0 0.0
    %1545 = vmatprep.subr.mxu0 0.0
    %1546 = vmatpush1.msra.mxu0 0.0
    %1547 = vmatprep.subr.mxu0 0.0
    %1548 = vmatpush1.msra.mxu0 0.0
    %1549 = vmatprep.subr.mxu0 0.0
    %1550 = vmatpush1.msra.mxu0 0.0
    %1551 = vmatprep.subr.mxu0 0.0
    %1552 = vmatpush1.msra.mxu0 0.0
    %1553 = vmatprep.subr.mxu0 0.0
    %1554 = vmatpush1.msra.mxu0 0.0
    %1555 = vmatprep.subr.mxu0 0.0
    %1556 = vmatpush1.msra.mxu0 0.0
    %1557 = vmatprep.subr.mxu0 0.0
    %1558 = vmatpush1.msra.mxu0 0.0
    %1559 = vmatprep.subr.mxu0 0.0
    %1560 = vmatpush1.msra.mxu0 0.0
    %1561 = vmatprep.subr.mxu0 0.0
    %1562 = vmatpush1.msra.mxu0 0.0
    %1563 = vmatprep.subr.mxu0 0.0
    %1564 = vmatpush1.msra.mxu0 0.0
    %1565 = vmatprep.subr.mxu0 0.0
    %1566 = vmatpush1.msra.mxu0 0.0
    %1567 = vmatprep.subr.mxu0 0.0
    %1568 = vmatpush1.msra.mxu0 0.0
    %1569 = vmatprep.subr.mxu0 0.0
    %1570 = vmatpush1.msra.mxu0 0.0
    %1571 = vmatprep.subr.mxu0 0.0
    %1572 = vmatpush1.msra.mxu0 0.0
    %1573 = vmatprep.subr.mxu0 0.0
    %1574 = vmatpush1.msra.mxu0 0.0
    %1575 = vmatprep.subr.mxu0 0.0
    %1576 = vmatpush1.msra.mxu0 0.0
    %1577 = vmatprep.subr.mxu0 0.0
    %1578 = vmatpush1.msra.mxu0 0.0
    %1579 = vmatprep.mubr.f32.mxu0 0.0
    %1580 = vmatmul.mubr.f32.gmra.mrb[0].mxu0 %v1334
    %v1581 = vpop.f32.mrb[0].mxu0
    %v1582 = vadd.f32 0.0, %v1581
    %v1583 = vpop.f32.mrb[0].mxu0
    %1584 = vmatprep.mubr.f32.mxu0 0.0
    %1585 = vmatmul.mubr.f32.gmra.mrb[0].mxu0 %v1337
    %v1586 = vpop.f32.mrb[0].mxu0
    %v1587 = vadd.f32 0.0, %v1586
    %v1588 = vpop.f32.mrb[0].mxu0
    %1589 = vdwg.mxu0
    %1590 = vmatprep.subr.mxu0 0.0
    %1591 = vmatpush1.msra.mxu0 %v213
    %1592 = vmatprep.subr.mxu0 0.0
    %1593 = vmatpush1.msra.mxu0 %v214
    %1594 = vmatprep.subr.mxu0 0.0
    %1595 = vmatpush1.msra.mxu0 %v215
    %1596 = vmatprep.subr.mxu0 0.0
    %1597 = vmatpush1.msra.mxu0 %v216
    %1598 = vmatprep.subr.mxu0 0.0
    %1599 = vmatpush1.msra.mxu0 0.0
    %1600 = vmatprep.subr.mxu0 0.0
    %1601 = vmatpush1.msra.mxu0 0.0
    %1602 = vmatprep.subr.mxu0 0.0
    %1603 = vmatpush1.msra.mxu0 0.0
    %1604 = vmatprep.subr.mxu0 0.0
    %1605 = vmatpush1.msra.mxu0 0.0
    %1606 = vmatprep.subr.mxu0 0.0
    %1607 = vmatpush1.msra.mxu0 0.0
    %1608 = vmatprep.subr.mxu0 0.0
    %1609 = vmatpush1.msra.mxu0 0.0
    %1610 = vmatprep.subr.mxu0 0.0
    %1611 = vmatpush1.msra.mxu0 0.0
    %1612 = vmatprep.subr.mxu0 0.0
    %1613 = vmatpush1.msra.mxu0 0.0
    %1614 = vmatprep.subr.mxu0 0.0
    %1615 = vmatpush1.msra.mxu0 0.0
    %1616 = vmatprep.subr.mxu0 0.0
    %1617 = vmatpush1.msra.mxu0 0.0
    %1618 = vmatprep.subr.mxu0 0.0
    %1619 = vmatpush1.msra.mxu0 0.0
    %1620 = vmatprep.subr.mxu0 0.0
    %1621 = vmatpush1.msra.mxu0 0.0
    %1622 = vmatprep.subr.mxu0 0.0
    %1623 = vmatpush1.msra.mxu0 0.0
    %1624 = vmatprep.subr.mxu0 0.0
    %1625 = vmatpush1.msra.mxu0 0.0
    %1626 = vmatprep.subr.mxu0 0.0
    %1627 = vmatpush1.msra.mxu0 0.0
    %1628 = vmatprep.subr.mxu0 0.0
    %1629 = vmatpush1.msra.mxu0 0.0
    %1630 = vmatprep.subr.mxu0 0.0
    %1631 = vmatpush1.msra.mxu0 0.0
    %1632 = vmatprep.subr.mxu0 0.0
    %1633 = vmatpush1.msra.mxu0 0.0
    %1634 = vmatprep.subr.mxu0 0.0
    %1635 = vmatpush1.msra.mxu0 0.0
    %1636 = vmatprep.subr.mxu0 0.0
    %1637 = vmatpush1.msra.mxu0 0.0
    %1638 = vmatprep.subr.mxu0 0.0
    %1639 = vmatpush1.msra.mxu0 0.0
    %1640 = vmatprep.subr.mxu0 0.0
    %1641 = vmatpush1.msra.mxu0 0.0
    %1642 = vmatprep.subr.mxu0 0.0
    %1643 = vmatpush1.msra.mxu0 0.0
    %1644 = vmatprep.subr.mxu0 0.0
    %1645 = vmatpush1.msra.mxu0 0.0
    %1646 = vmatprep.subr.mxu0 0.0
    %1647 = vmatpush1.msra.mxu0 0.0
    %1648 = vmatprep.subr.mxu0 0.0
    %1649 = vmatpush1.msra.mxu0 0.0
    %1650 = vmatprep.subr.mxu0 0.0
    %1651 = vmatpush1.msra.mxu0 0.0
    %1652 = vmatprep.subr.mxu0 0.0
    %1653 = vmatpush1.msra.mxu0 0.0
    %1654 = vmatprep.mubr.f32.mxu0 0.0
    %1655 = vmatmul.mubr.f32.gmra.mrb[0].mxu0 %v1415
    %v1656 = vpop.f32.mrb[0].mxu0
    %v1657 = vadd.f32 %v1582, %v1656
    %v1658 = vpop.f32.mrb[0].mxu0
    %1659 = vmatprep.mubr.f32.mxu0 0.0
    %1660 = vmatmul.mubr.f32.gmra.mrb[0].mxu0 %v1418
    %v1661 = vpop.f32.mrb[0].mxu0
    %v1662 = vadd.f32 %v1587, %v1661
    %v1663 = vpop.f32.mrb[0].mxu0
    %1664 = vdwg.mxu0
    %v1666 = vlaneseq
    %v1667 = vshrl.u32 %v1666, 7
    %v1668 = vsub.s32 0, %v1667
    %v1669 = vrot.slane %v234, %v1668
    %v1671 = vadd.f32 %v1657, %v1669
    %v1672 = vadd.f32 %v1662, %v1669
    %v1673 = vxor.u32 %v1671, 2147483648
    %v1674 = vxor.u32 %v1672, 2147483648
    %v1675 = vmul.f32 %v1673, 1.442695
    %v1676 = vpow.pop %v1675
    %v1677 = vmul.f32 %v1674, 1.442695
    %v1678 = vpow.pop %v1677
    %v1679 = vadd.f32 %v1676, 1.0
    %v1680 = vadd.f32 %v1678, 1.0
    %v1681 = vrcp.pop %v1679
    %v1682 = vmul.f32 1.0, %v1681
    %v1683 = vrcp.pop %v1680
    %v1684 = vmul.f32 1.0, %v1683
    %v1686 = vlaneseq
    %v1687 = vshrl.u32 %v1686, 7
    %v1688 = vsub.s32 0, %v1687
    %v1689 = vrot.slane %v235, %v1688
    %1691 = vmatprep.subr.mxu0 0.0
    %1692 = vmatpush1.msra.mxu0 %v217
    %1693 = vmatprep.subr.mxu0 0.0
    %1694 = vmatpush1.msra.mxu0 %v218
    %1695 = vmatprep.subr.mxu0 0.0
    %1696 = vmatpush1.msra.mxu0 %v219
    %1697 = vmatprep.subr.mxu0 0.0
    %1698 = vmatpush1.msra.mxu0 %v220
    %1699 = vmatprep.subr.mxu0 0.0
    %1700 = vmatpush1.msra.mxu0 0.0
    %1701 = vmatprep.subr.mxu0 0.0
    %1702 = vmatpush1.msra.mxu0 0.0
    %1703 = vmatprep.subr.mxu0 0.0
    %1704 = vmatpush1.msra.mxu0 0.0
    %1705 = vmatprep.subr.mxu0 0.0
    %1706 = vmatpush1.msra.mxu0 0.0
    %1707 = vmatprep.subr.mxu0 0.0
    %1708 = vmatpush1.msra.mxu0 0.0
    %1709 = vmatprep.subr.mxu0 0.0
    %1710 = vmatpush1.msra.mxu0 0.0
    %1711 = vmatprep.subr.mxu0 0.0
    %1712 = vmatpush1.msra.mxu0 0.0
    %1713 = vmatprep.subr.mxu0 0.0
    %1714 = vmatpush1.msra.mxu0 0.0
    %1715 = vmatprep.subr.mxu0 0.0
    %1716 = vmatpush1.msra.mxu0 0.0
    %1717 = vmatprep.subr.mxu0 0.0
    %1718 = vmatpush1.msra.mxu0 0.0
    %1719 = vmatprep.subr.mxu0 0.0
    %1720 = vmatpush1.msra.mxu0 0.0
    %1721 = vmatprep.subr.mxu0 0.0
    %1722 = vmatpush1.msra.mxu0 0.0
    %1723 = vmatprep.subr.mxu0 0.0
    %1724 = vmatpush1.msra.mxu0 0.0
    %1725 = vmatprep.subr.mxu0 0.0
    %1726 = vmatpush1.msra.mxu0 0.0
    %1727 = vmatprep.subr.mxu0 0.0
    %1728 = vmatpush1.msra.mxu0 0.0
    %1729 = vmatprep.subr.mxu0 0.0
    %1730 = vmatpush1.msra.mxu0 0.0
    %1731 = vmatprep.subr.mxu0 0.0
    %1732 = vmatpush1.msra.mxu0 0.0
    %1733 = vmatprep.subr.mxu0 0.0
    %1734 = vmatpush1.msra.mxu0 0.0
    %1735 = vmatprep.subr.mxu0 0.0
    %1736 = vmatpush1.msra.mxu0 0.0
    %1737 = vmatprep.subr.mxu0 0.0
    %1738 = vmatpush1.msra.mxu0 0.0
    %1739 = vmatprep.subr.mxu0 0.0
    %1740 = vmatpush1.msra.mxu0 0.0
    %1741 = vmatprep.subr.mxu0 0.0
    %1742 = vmatpush1.msra.mxu0 0.0
    %1743 = vmatprep.subr.mxu0 0.0
    %1744 = vmatpush1.msra.mxu0 0.0
    %1745 = vmatprep.subr.mxu0 0.0
    %1746 = vmatpush1.msra.mxu0 0.0
    %1747 = vmatprep.subr.mxu0 0.0
    %1748 = vmatpush1.msra.mxu0 0.0
    %1749 = vmatprep.subr.mxu0 0.0
    %1750 = vmatpush1.msra.mxu0 0.0
    %1751 = vmatprep.subr.mxu0 0.0
    %1752 = vmatpush1.msra.mxu0 0.0
    %1753 = vmatprep.subr.mxu0 0.0
    %1754 = vmatpush1.msra.mxu0 0.0
    %1755 = vmatprep.mubr.f32.mxu0 0.0
    %1756 = vmatmul.mubr.f32.gmra.mrb[0].mxu0 %v1415
    %v1757 = vpop.f32.mrb[0].mxu0
    %v1758 = vadd.f32 %v1689, %v1757
    %v1759 = vpop.f32.mrb[0].mxu0
    %1760 = vmatprep.mubr.f32.mxu0 0.0
    %1761 = vmatmul.mubr.f32.gmra.mrb[0].mxu0 %v1418
    %v1762 = vpop.f32.mrb[0].mxu0
    %v1763 = vadd.f32 %v1689, %v1762
    %v1764 = vpop.f32.mrb[0].mxu0
    %1765 = vdwg.mxu0
    %v1767 = vlaneseq
    %v1768 = vshrl.u32 %v1767, 7
    %v1769 = vsub.s32 0, %v1768
    %v1770 = vrot.slane %v236, %v1769
    %1772 = vmatprep.subr.mxu0 0.0
    %1773 = vmatpush1.msra.mxu0 %v229
    %1774 = vmatprep.subr.mxu0 0.0
    %1775 = vmatpush1.msra.mxu0 %v230
    %1776 = vmatprep.subr.mxu0 0.0
    %1777 = vmatpush1.msra.mxu0 %v231
    %1778 = vmatprep.subr.mxu0 0.0
    %1779 = vmatpush1.msra.mxu0 %v232
    %1780 = vmatprep.subr.mxu0 0.0
    %1781 = vmatpush1.msra.mxu0 0.0
    %1782 = vmatprep.subr.mxu0 0.0
    %1783 = vmatpush1.msra.mxu0 0.0
    %1784 = vmatprep.subr.mxu0 0.0
    %1785 = vmatpush1.msra.mxu0 0.0
    %1786 = vmatprep.subr.mxu0 0.0
    %1787 = vmatpush1.msra.mxu0 0.0
    %1788 = vmatprep.subr.mxu0 0.0
    %1789 = vmatpush1.msra.mxu0 0.0
    %1790 = vmatprep.subr.mxu0 0.0
    %1791 = vmatpush1.msra.mxu0 0.0
    %1792 = vmatprep.subr.mxu0 0.0
    %1793 = vmatpush1.msra.mxu0 0.0
    %1794 = vmatprep.subr.mxu0 0.0
    %1795 = vmatpush1.msra.mxu0 0.0
    %1796 = vmatprep.subr.mxu0 0.0
    %1797 = vmatpush1.msra.mxu0 0.0
    %1798 = vmatprep.subr.mxu0 0.0
    %1799 = vmatpush1.msra.mxu0 0.0
    %1800 = vmatprep.subr.mxu0 0.0
    %1801 = vmatpush1.msra.mxu0 0.0
    %1802 = vmatprep.subr.mxu0 0.0
    %1803 = vmatpush1.msra.mxu0 0.0
    %1804 = vmatprep.subr.mxu0 0.0
    %1805 = vmatpush1.msra.mxu0 0.0
    %1806 = vmatprep.subr.mxu0 0.0
    %1807 = vmatpush1.msra.mxu0 0.0
    %1808 = vmatprep.subr.mxu0 0.0
    %1809 = vmatpush1.msra.mxu0 0.0
    %1810 = vmatprep.subr.mxu0 0.0
    %1811 = vmatpush1.msra.mxu0 0.0
    %1812 = vmatprep.subr.mxu0 0.0
    %1813 = vmatpush1.msra.mxu0 0.0
    %1814 = vmatprep.subr.mxu0 0.0
    %1815 = vmatpush1.msra.mxu0 0.0
    %1816 = vmatprep.subr.mxu0 0.0
    %1817 = vmatpush1.msra.mxu0 0.0
    %1818 = vmatprep.subr.mxu0 0.0
    %1819 = vmatpush1.msra.mxu0 0.0
    %1820 = vmatprep.subr.mxu0 0.0
    %1821 = vmatpush1.msra.mxu0 0.0
    %1822 = vmatprep.subr.mxu0 0.0
    %1823 = vmatpush1.msra.mxu0 0.0
    %1824 = vmatprep.subr.mxu0 0.0
    %1825 = vmatpush1.msra.mxu0 0.0
    %1826 = vmatprep.subr.mxu0 0.0
    %1827 = vmatpush1.msra.mxu0 0.0
    %1828 = vmatprep.subr.mxu0 0.0
    %1829 = vmatpush1.msra.mxu0 0.0
    %1830 = vmatprep.subr.mxu0 0.0
    %1831 = vmatpush1.msra.mxu0 0.0
    %1832 = vmatprep.subr.mxu0 0.0
    %1833 = vmatpush1.msra.mxu0 0.0
    %1834 = vmatprep.subr.mxu0 0.0
    %1835 = vmatpush1.msra.mxu0 0.0
    %1836 = vmatprep.mubr.f32.mxu0 0.0
    %1837 = vmatmul.mubr.f32.gmra.mrb[0].mxu0 %v1334
    %v1838 = vpop.f32.mrb[0].mxu0
    %v1839 = vadd.f32 %v1770, %v1838
    %v1840 = vpop.f32.mrb[0].mxu0
    %1841 = vmatprep.mubr.f32.mxu0 0.0
    %1842 = vmatmul.mubr.f32.gmra.mrb[0].mxu0 %v1337
    %v1843 = vpop.f32.mrb[0].mxu0
    %v1844 = vadd.f32 %v1770, %v1843
    %v1845 = vpop.f32.mrb[0].mxu0
    %1846 = vdwg.mxu0
    %v1847 = vmul.f32 %v1512, %v1839
    %v1848 = vmul.f32 %v1514, %v1844
    %v1849 = vadd.f32 %v1758, %v1847
    %v1850 = vadd.f32 %v1763, %v1848
    %v1851 = vtanh.pop %v1849
    %v1852 = vtanh.pop %v1850
    %v1853 = vsub.f32 1.0, %v1682
    %v1854 = vsub.f32 1.0, %v1684
    %v1855 = vmul.f32 %v1853, %v1851
    %v1856 = vmul.f32 %v1854, %v1852
    %v1857 = vmul.f32 %v1682, %v827
    %v1858 = vmul.f32 %v1684, %v828
    %v1859 = vadd.f32 %v1855, %v1857
    %v1860 = vadd.f32 %v1856, %v1858
    %v1861 = vsel %vm267, %v1859, 0.0
    %1862 = vadd.xlane.f32.xlu0 %v1861
    %v1863 = vpop.xlane.xlu0 %1862
    %v1864 = vsel %vm267, %v1860, 0.0
    %1865 = vadd.xlane.f32.xlu0 %v1864
    %v1866 = vpop.xlane.xlu0 %1865
    %v1867 = vmul.f32 %v1863, %v316
    %v1868 = vmul.f32 %v1866, %v316
    %v1869 = vsub.f32 %v1859, %v1867
    %v1870 = vsub.f32 %v1860, %v1868
    %v1871 = vmul.f32 %v1869, %v1869
    %v1872 = vmul.f32 %v1870, %v1870
    %v1873 = vsel %vm267, %v1871, 0.0
    %1874 = vadd.xlane.f32.xlu0 %v1873
    %v1875 = vpop.xlane.xlu0 %1874
    %v1876 = vsel %vm267, %v1872, 0.0
    %1877 = vadd.xlane.f32.xlu0 %v1876
    %v1878 = vpop.xlane.xlu0 %1877
    %v1879 = vmul.f32 %v1875, %v316
    %v1880 = vmul.f32 %v1878, %v316
    %v1881 = vadd.f32 %v1879, 1e-05
    %v1882 = vadd.f32 %v1880, 1e-05
    %v1883 = vrsqrt.pop %v1881
    %v1884 = vrsqrt.pop %v1882
    %v1885 = vmul.f32 %v1869, %v1883
    %v1886 = vmul.f32 %v1870, %v1884
    %v1888 = vlaneseq
    %v1889 = vshrl.u32 %v1888, 7
    %v1890 = vsub.s32 0, %v1889
    %v1891 = vrot.slane %v241, %v1890
    %v1894 = vsel %vm267, %v1885, 0
    %v1897 = vsel %vm267, %v1886, 0
    %1899 = vmatprep.subr.mxu0 0.0
    %1900 = vmatpush1.msra.mxu0 %v237
    %1901 = vmatprep.subr.mxu0 0.0
    %1902 = vmatpush1.msra.mxu0 %v238
    %1903 = vmatprep.subr.mxu0 0.0
    %1904 = vmatpush1.msra.mxu0 %v239
    %1905 = vmatprep.subr.mxu0 0.0
    %1906 = vmatpush1.msra.mxu0 %v240
    %1907 = vmatprep.subr.mxu0 0.0
    %1908 = vmatpush1.msra.mxu0 0.0
    %1909 = vmatprep.subr.mxu0 0.0
    %1910 = vmatpush1.msra.mxu0 0.0
    %1911 = vmatprep.subr.mxu0 0.0
    %1912 = vmatpush1.msra.mxu0 0.0
    %1913 = vmatprep.subr.mxu0 0.0
    %1914 = vmatpush1.msra.mxu0 0.0
    %1915 = vmatprep.subr.mxu0 0.0
    %1916 = vmatpush1.msra.mxu0 0.0
    %1917 = vmatprep.subr.mxu0 0.0
    %1918 = vmatpush1.msra.mxu0 0.0
    %1919 = vmatprep.subr.mxu0 0.0
    %1920 = vmatpush1.msra.mxu0 0.0
    %1921 = vmatprep.subr.mxu0 0.0
    %1922 = vmatpush1.msra.mxu0 0.0
    %1923 = vmatprep.subr.mxu0 0.0
    %1924 = vmatpush1.msra.mxu0 0.0
    %1925 = vmatprep.subr.mxu0 0.0
    %1926 = vmatpush1.msra.mxu0 0.0
    %1927 = vmatprep.subr.mxu0 0.0
    %1928 = vmatpush1.msra.mxu0 0.0
    %1929 = vmatprep.subr.mxu0 0.0
    %1930 = vmatpush1.msra.mxu0 0.0
    %1931 = vmatprep.subr.mxu0 0.0
    %1932 = vmatpush1.msra.mxu0 0.0
    %1933 = vmatprep.subr.mxu0 0.0
    %1934 = vmatpush1.msra.mxu0 0.0
    %1935 = vmatprep.subr.mxu0 0.0
    %1936 = vmatpush1.msra.mxu0 0.0
    %1937 = vmatprep.subr.mxu0 0.0
    %1938 = vmatpush1.msra.mxu0 0.0
    %1939 = vmatprep.subr.mxu0 0.0
    %1940 = vmatpush1.msra.mxu0 0.0
    %1941 = vmatprep.subr.mxu0 0.0
    %1942 = vmatpush1.msra.mxu0 0.0
    %1943 = vmatprep.subr.mxu0 0.0
    %1944 = vmatpush1.msra.mxu0 0.0
    %1945 = vmatprep.subr.mxu0 0.0
    %1946 = vmatpush1.msra.mxu0 0.0
    %1947 = vmatprep.subr.mxu0 0.0
    %1948 = vmatpush1.msra.mxu0 0.0
    %1949 = vmatprep.subr.mxu0 0.0
    %1950 = vmatpush1.msra.mxu0 0.0
    %1951 = vmatprep.subr.mxu0 0.0
    %1952 = vmatpush1.msra.mxu0 0.0
    %1953 = vmatprep.subr.mxu0 0.0
    %1954 = vmatpush1.msra.mxu0 0.0
    %1955 = vmatprep.subr.mxu0 0.0
    %1956 = vmatpush1.msra.mxu0 0.0
    %1957 = vmatprep.subr.mxu0 0.0
    %1958 = vmatpush1.msra.mxu0 0.0
    %1959 = vmatprep.subr.mxu0 0.0
    %1960 = vmatpush1.msra.mxu0 0.0
    %1961 = vmatprep.subr.mxu0 0.0
    %1962 = vmatpush1.msra.mxu0 0.0
    %1963 = vmatprep.mubr.f32.mxu0 0.0
    %1964 = vmatmul.mubr.f32.gmra.mrb[0].mxu0 %v1894
    %v1965 = vpop.f32.mrb[0].mxu0
    %v1966 = vadd.f32 %v1891, %v1965
    %v1967 = vpop.f32.mrb[0].mxu0
    %1968 = vmatprep.mubr.f32.mxu0 0.0
    %1969 = vmatmul.mubr.f32.gmra.mrb[0].mxu0 %v1897
    %v1970 = vpop.f32.mrb[0].mxu0
    %v1971 = vadd.f32 %v1891, %v1970
    %v1972 = vpop.f32.mrb[0].mxu0
    %1973 = vdwg.mxu0
    %v1974 = vmax.f32 %v1966, 0.0
    %v1975 = vmax.f32 %v1971, 0.0
    %v1977 = vlaneseq
    %v1978 = vshrl.u32 %v1977, 7
    %v1979 = vsub.s32 0, %v1978
    %v1980 = vrot.slane %v250, %v1979
    %v1983 = vsel %vm1136, %v1974, 0
    %v1986 = vsel %vm1136, %v1975, 0
    %1988 = vmatprep.subr.mxu0 0.0
    %1989 = vmatpush1.msra.mxu0 %v242
    %1990 = vmatprep.subr.mxu0 0.0
    %1991 = vmatpush1.msra.mxu0 %v243
    %1992 = vmatprep.subr.mxu0 0.0
    %1993 = vmatpush1.msra.mxu0 %v244
    %1994 = vmatprep.subr.mxu0 0.0
    %1995 = vmatpush1.msra.mxu0 %v245
    %1996 = vmatprep.subr.mxu0 0.0
    %1997 = vmatpush1.msra.mxu0 %v246
    %1998 = vmatprep.subr.mxu0 0.0
    %1999 = vmatpush1.msra.mxu0 %v247
    %2000 = vmatprep.subr.mxu0 0.0
    %2001 = vmatpush1.msra.mxu0 %v248
    %2002 = vmatprep.subr.mxu0 0.0
    %2003 = vmatpush1.msra.mxu0 %v249
    %2004 = vmatprep.subr.mxu0 0.0
    %2005 = vmatpush1.msra.mxu0 0.0
    %2006 = vmatprep.subr.mxu0 0.0
    %2007 = vmatpush1.msra.mxu0 0.0
    %2008 = vmatprep.subr.mxu0 0.0
    %2009 = vmatpush1.msra.mxu0 0.0
    %2010 = vmatprep.subr.mxu0 0.0
    %2011 = vmatpush1.msra.mxu0 0.0
    %2012 = vmatprep.subr.mxu0 0.0
    %2013 = vmatpush1.msra.mxu0 0.0
    %2014 = vmatprep.subr.mxu0 0.0
    %2015 = vmatpush1.msra.mxu0 0.0
    %2016 = vmatprep.subr.mxu0 0.0
    %2017 = vmatpush1.msra.mxu0 0.0
    %2018 = vmatprep.subr.mxu0 0.0
    %2019 = vmatpush1.msra.mxu0 0.0
    %2020 = vmatprep.subr.mxu0 0.0
    %2021 = vmatpush1.msra.mxu0 0.0
    %2022 = vmatprep.subr.mxu0 0.0
    %2023 = vmatpush1.msra.mxu0 0.0
    %2024 = vmatprep.subr.mxu0 0.0
    %2025 = vmatpush1.msra.mxu0 0.0
    %2026 = vmatprep.subr.mxu0 0.0
    %2027 = vmatpush1.msra.mxu0 0.0
    %2028 = vmatprep.subr.mxu0 0.0
    %2029 = vmatpush1.msra.mxu0 0.0
    %2030 = vmatprep.subr.mxu0 0.0
    %2031 = vmatpush1.msra.mxu0 0.0
    %2032 = vmatprep.subr.mxu0 0.0
    %2033 = vmatpush1.msra.mxu0 0.0
    %2034 = vmatprep.subr.mxu0 0.0
    %2035 = vmatpush1.msra.mxu0 0.0
    %2036 = vmatprep.subr.mxu0 0.0
    %2037 = vmatpush1.msra.mxu0 0.0
    %2038 = vmatprep.subr.mxu0 0.0
    %2039 = vmatpush1.msra.mxu0 0.0
    %2040 = vmatprep.subr.mxu0 0.0
    %2041 = vmatpush1.msra.mxu0 0.0
    %2042 = vmatprep.subr.mxu0 0.0
    %2043 = vmatpush1.msra.mxu0 0.0
    %2044 = vmatprep.subr.mxu0 0.0
    %2045 = vmatpush1.msra.mxu0 0.0
    %2046 = vmatprep.subr.mxu0 0.0
    %2047 = vmatpush1.msra.mxu0 0.0
    %2048 = vmatprep.subr.mxu0 0.0
    %2049 = vmatpush1.msra.mxu0 0.0
    %2050 = vmatprep.subr.mxu0 0.0
    %2051 = vmatpush1.msra.mxu0 0.0
    %2052 = vmatprep.mubr.f32.mxu0 0.0
    %2053 = vmatmul.mubr.f32.gmra.mrb[0].mxu0 %v1983
    %v2054 = vpop.f32.mrb[0].mxu0
    %v2055 = vadd.f32 %v1980, %v2054
    %v2056 = vpop.f32.mrb[0].mxu0
    %2057 = vmatprep.mubr.f32.mxu0 0.0
    %2058 = vmatmul.mubr.f32.gmra.mrb[0].mxu0 %v1986
    %v2059 = vpop.f32.mrb[0].mxu0
    %v2060 = vadd.f32 %v1980, %v2059
    %v2061 = vpop.f32.mrb[0].mxu0
    %2062 = vdwg.mxu0
    %v2063 = vadd.f32 %v1859, %v2055
    %v2064 = vadd.f32 %v1860, %v2060
    %v2065 = vsel %vm267, %v2063, 0.0
    %2066 = vadd.xlane.f32.xlu0 %v2065
    %v2067 = vpop.xlane.xlu0 %2066
    %v2068 = vsel %vm267, %v2064, 0.0
    %2069 = vadd.xlane.f32.xlu0 %v2068
    %v2070 = vpop.xlane.xlu0 %2069
    %v2071 = vmul.f32 %v2067, %v316
    %v2072 = vmul.f32 %v2070, %v316
    %v2073 = vsub.f32 %v2063, %v2071
    %v2074 = vsub.f32 %v2064, %v2072
    %v2075 = vmul.f32 %v2073, %v2073
    %v2076 = vmul.f32 %v2074, %v2074
    %v2077 = vsel %vm267, %v2075, 0.0
    %2078 = vadd.xlane.f32.xlu0 %v2077
    %v2079 = vpop.xlane.xlu0 %2078
    %v2080 = vsel %vm267, %v2076, 0.0
    %2081 = vadd.xlane.f32.xlu0 %v2080
    %v2082 = vpop.xlane.xlu0 %2081
    %v2083 = vmul.f32 %v2079, %v316
    %v2084 = vmul.f32 %v2082, %v316
    %v2085 = vadd.f32 %v2083, 1e-05
    %v2086 = vadd.f32 %v2084, 1e-05
    %v2087 = vrsqrt.pop %v2085
    %v2088 = vrsqrt.pop %v2086
    %v2089 = vmul.f32 %v2073, %v2087
    %v2090 = vmul.f32 %v2074, %v2088
    %v2092 = vsel %vm267, %v2089, 0
    %v2095 = vsel %vm267, %v2090, 0
    %2097 = vmatprep.subr.mxu0 0.0
    %2098 = vmatpush1.msra.mxu0 %v204
    %2099 = vmatprep.subr.mxu0 0.0
    %2100 = vmatpush1.msra.mxu0 %v205
    %2101 = vmatprep.subr.mxu0 0.0
    %2102 = vmatpush1.msra.mxu0 %v206
    %2103 = vmatprep.subr.mxu0 0.0
    %2104 = vmatpush1.msra.mxu0 %v207
    %2105 = vmatprep.subr.mxu0 0.0
    %2106 = vmatpush1.msra.mxu0 0.0
    %2107 = vmatprep.subr.mxu0 0.0
    %2108 = vmatpush1.msra.mxu0 0.0
    %2109 = vmatprep.subr.mxu0 0.0
    %2110 = vmatpush1.msra.mxu0 0.0
    %2111 = vmatprep.subr.mxu0 0.0
    %2112 = vmatpush1.msra.mxu0 0.0
    %2113 = vmatprep.subr.mxu0 0.0
    %2114 = vmatpush1.msra.mxu0 0.0
    %2115 = vmatprep.subr.mxu0 0.0
    %2116 = vmatpush1.msra.mxu0 0.0
    %2117 = vmatprep.subr.mxu0 0.0
    %2118 = vmatpush1.msra.mxu0 0.0
    %2119 = vmatprep.subr.mxu0 0.0
    %2120 = vmatpush1.msra.mxu0 0.0
    %2121 = vmatprep.subr.mxu0 0.0
    %2122 = vmatpush1.msra.mxu0 0.0
    %2123 = vmatprep.subr.mxu0 0.0
    %2124 = vmatpush1.msra.mxu0 0.0
    %2125 = vmatprep.subr.mxu0 0.0
    %2126 = vmatpush1.msra.mxu0 0.0
    %2127 = vmatprep.subr.mxu0 0.0
    %2128 = vmatpush1.msra.mxu0 0.0
    %2129 = vmatprep.subr.mxu0 0.0
    %2130 = vmatpush1.msra.mxu0 0.0
    %2131 = vmatprep.subr.mxu0 0.0
    %2132 = vmatpush1.msra.mxu0 0.0
    %2133 = vmatprep.subr.mxu0 0.0
    %2134 = vmatpush1.msra.mxu0 0.0
    %2135 = vmatprep.subr.mxu0 0.0
    %2136 = vmatpush1.msra.mxu0 0.0
    %2137 = vmatprep.subr.mxu0 0.0
    %2138 = vmatpush1.msra.mxu0 0.0
    %2139 = vmatprep.subr.mxu0 0.0
    %2140 = vmatpush1.msra.mxu0 0.0
    %2141 = vmatprep.subr.mxu0 0.0
    %2142 = vmatpush1.msra.mxu0 0.0
    %2143 = vmatprep.subr.mxu0 0.0
    %2144 = vmatpush1.msra.mxu0 0.0
    %2145 = vmatprep.subr.mxu0 0.0
    %2146 = vmatpush1.msra.mxu0 0.0
    %2147 = vmatprep.subr.mxu0 0.0
    %2148 = vmatpush1.msra.mxu0 0.0
    %2149 = vmatprep.subr.mxu0 0.0
    %2150 = vmatpush1.msra.mxu0 0.0
    %2151 = vmatprep.subr.mxu0 0.0
    %2152 = vmatpush1.msra.mxu0 0.0
    %2153 = vmatprep.subr.mxu0 0.0
    %2154 = vmatpush1.msra.mxu0 0.0
    %2155 = vmatprep.subr.mxu0 0.0
    %2156 = vmatpush1.msra.mxu0 0.0
    %2157 = vmatprep.subr.mxu0 0.0
    %2158 = vmatpush1.msra.mxu0 0.0
    %2159 = vmatprep.subr.mxu0 0.0
    %2160 = vmatpush1.msra.mxu0 0.0
    %2161 = vmatprep.mubr.f32.mxu0 0.0
    %2162 = vmatmul.mubr.f32.gmra.mrb[0].mxu0 %v2092
    %v2163 = vpop.f32.mrb[0].mxu0
    %v2164 = vadd.f32 %v859, %v2163
    %v2165 = vpop.f32.mrb[0].mxu0
    %2166 = vmatprep.mubr.f32.mxu0 0.0
    %2167 = vmatmul.mubr.f32.gmra.mrb[0].mxu0 %v2095
    %v2168 = vpop.f32.mrb[0].mxu0
    %v2169 = vadd.f32 %v859, %v2168
    %v2170 = vpop.f32.mrb[0].mxu0
    %2171 = vdwg.mxu0
    %v2173 = vsel %vm267, %v2164, 0
    %2175 = vmatprep.subr.mxu0 0.0
    %2176 = vmatpush1.xpose.msra.mxu0 %v946
    %2177 = vmatprep.subr.mxu0 0.0
    %2178 = vmatpush1.xpose.msra.mxu0 %v949
    %2179 = vmatprep.subr.mxu0 0.0
    %2180 = vmatpush1.xpose.msra.mxu0 %v952
    %2181 = vmatprep.subr.mxu0 0.0
    %2182 = vmatpush1.xpose.msra.mxu0 %v955
    %2183 = vmatprep.subr.mxu0 0.0
    %2184 = vmatpush1.xpose.msra.mxu0 %v958
    %2185 = vmatprep.subr.mxu0 0.0
    %2186 = vmatpush1.xpose.msra.mxu0 %v961
    %2187 = vmatprep.subr.mxu0 0.0
    %2188 = vmatpush1.xpose.msra.mxu0 %v964
    %2189 = vmatprep.subr.mxu0 0.0
    %2190 = vmatpush1.xpose.msra.mxu0 %v967
    %2191 = vmatprep.subr.mxu0 0.0
    %2192 = vmatpush1.xpose.msra.mxu0 0.0
    %2193 = vmatprep.subr.mxu0 0.0
    %2194 = vmatpush1.xpose.msra.mxu0 0.0
    %2195 = vmatprep.subr.mxu0 0.0
    %2196 = vmatpush1.xpose.msra.mxu0 0.0
    %2197 = vmatprep.subr.mxu0 0.0
    %2198 = vmatpush1.xpose.msra.mxu0 0.0
    %2199 = vmatprep.subr.mxu0 0.0
    %2200 = vmatpush1.xpose.msra.mxu0 0.0
    %2201 = vmatprep.subr.mxu0 0.0
    %2202 = vmatpush1.xpose.msra.mxu0 0.0
    %2203 = vmatprep.subr.mxu0 0.0
    %2204 = vmatpush1.xpose.msra.mxu0 0.0
    %2205 = vmatprep.subr.mxu0 0.0
    %2206 = vmatpush1.xpose.msra.mxu0 0.0
    %2207 = vmatprep.subr.mxu0 0.0
    %2208 = vmatpush1.xpose.msra.mxu0 0.0
    %2209 = vmatprep.subr.mxu0 0.0
    %2210 = vmatpush1.xpose.msra.mxu0 0.0
    %2211 = vmatprep.subr.mxu0 0.0
    %2212 = vmatpush1.xpose.msra.mxu0 0.0
    %2213 = vmatprep.subr.mxu0 0.0
    %2214 = vmatpush1.xpose.msra.mxu0 0.0
    %2215 = vmatprep.subr.mxu0 0.0
    %2216 = vmatpush1.xpose.msra.mxu0 0.0
    %2217 = vmatprep.subr.mxu0 0.0
    %2218 = vmatpush1.xpose.msra.mxu0 0.0
    %2219 = vmatprep.subr.mxu0 0.0
    %2220 = vmatpush1.xpose.msra.mxu0 0.0
    %2221 = vmatprep.subr.mxu0 0.0
    %2222 = vmatpush1.xpose.msra.mxu0 0.0
    %2223 = vmatprep.subr.mxu0 0.0
    %2224 = vmatpush1.xpose.msra.mxu0 0.0
    %2225 = vmatprep.subr.mxu0 0.0
    %2226 = vmatpush1.xpose.msra.mxu0 0.0
    %2227 = vmatprep.subr.mxu0 0.0
    %2228 = vmatpush1.xpose.msra.mxu0 0.0
    %2229 = vmatprep.subr.mxu0 0.0
    %2230 = vmatpush1.xpose.msra.mxu0 0.0
    %2231 = vmatprep.subr.mxu0 0.0
    %2232 = vmatpush1.xpose.msra.mxu0 0.0
    %2233 = vmatprep.subr.mxu0 0.0
    %2234 = vmatpush1.xpose.msra.mxu0 0.0
    %2235 = vmatprep.subr.mxu0 0.0
    %2236 = vmatpush1.xpose.msra.mxu0 0.0
    %2237 = vmatprep.subr.mxu0 0.0
    %2238 = vmatpush1.xpose.msra.mxu0 0.0
    %2239 = vmatprep.mubr.f32.mxu0 0.0
    %2240 = vmatmul.mubr.f32.gmra.mrb[0].mxu0 %v2173
    %v2241 = vpop.f32.mrb[0].mxu0
    %v2242 = vadd.f32 0.0, %v2241
    %v2243 = vpop.f32.mrb[0].mxu0
    %2244 = vdwg.mxu0
    %v2246 = vsel %vm267, %v2169, 0
    %2248 = vmatprep.subr.mxu0 0.0
    %2249 = vmatpush1.xpose.msra.mxu0 %v1043
    %2250 = vmatprep.subr.mxu0 0.0
    %2251 = vmatpush1.xpose.msra.mxu0 %v1046
    %2252 = vmatprep.subr.mxu0 0.0
    %2253 = vmatpush1.xpose.msra.mxu0 %v1049
    %2254 = vmatprep.subr.mxu0 0.0
    %2255 = vmatpush1.xpose.msra.mxu0 %v1052
    %2256 = vmatprep.subr.mxu0 0.0
    %2257 = vmatpush1.xpose.msra.mxu0 %v1055
    %2258 = vmatprep.subr.mxu0 0.0
    %2259 = vmatpush1.xpose.msra.mxu0 %v1058
    %2260 = vmatprep.subr.mxu0 0.0
    %2261 = vmatpush1.xpose.msra.mxu0 %v1061
    %2262 = vmatprep.subr.mxu0 0.0
    %2263 = vmatpush1.xpose.msra.mxu0 %v1064
    %2264 = vmatprep.subr.mxu0 0.0
    %2265 = vmatpush1.xpose.msra.mxu0 0.0
    %2266 = vmatprep.subr.mxu0 0.0
    %2267 = vmatpush1.xpose.msra.mxu0 0.0
    %2268 = vmatprep.subr.mxu0 0.0
    %2269 = vmatpush1.xpose.msra.mxu0 0.0
    %2270 = vmatprep.subr.mxu0 0.0
    %2271 = vmatpush1.xpose.msra.mxu0 0.0
    %2272 = vmatprep.subr.mxu0 0.0
    %2273 = vmatpush1.xpose.msra.mxu0 0.0
    %2274 = vmatprep.subr.mxu0 0.0
    %2275 = vmatpush1.xpose.msra.mxu0 0.0
    %2276 = vmatprep.subr.mxu0 0.0
    %2277 = vmatpush1.xpose.msra.mxu0 0.0
    %2278 = vmatprep.subr.mxu0 0.0
    %2279 = vmatpush1.xpose.msra.mxu0 0.0
    %2280 = vmatprep.subr.mxu0 0.0
    %2281 = vmatpush1.xpose.msra.mxu0 0.0
    %2282 = vmatprep.subr.mxu0 0.0
    %2283 = vmatpush1.xpose.msra.mxu0 0.0
    %2284 = vmatprep.subr.mxu0 0.0
    %2285 = vmatpush1.xpose.msra.mxu0 0.0
    %2286 = vmatprep.subr.mxu0 0.0
    %2287 = vmatpush1.xpose.msra.mxu0 0.0
    %2288 = vmatprep.subr.mxu0 0.0
    %2289 = vmatpush1.xpose.msra.mxu0 0.0
    %2290 = vmatprep.subr.mxu0 0.0
    %2291 = vmatpush1.xpose.msra.mxu0 0.0
    %2292 = vmatprep.subr.mxu0 0.0
    %2293 = vmatpush1.xpose.msra.mxu0 0.0
    %2294 = vmatprep.subr.mxu0 0.0
    %2295 = vmatpush1.xpose.msra.mxu0 0.0
    %2296 = vmatprep.subr.mxu0 0.0
    %2297 = vmatpush1.xpose.msra.mxu0 0.0
    %2298 = vmatprep.subr.mxu0 0.0
    %2299 = vmatpush1.xpose.msra.mxu0 0.0
    %2300 = vmatprep.subr.mxu0 0.0
    %2301 = vmatpush1.xpose.msra.mxu0 0.0
    %2302 = vmatprep.subr.mxu0 0.0
    %2303 = vmatpush1.xpose.msra.mxu0 0.0
    %2304 = vmatprep.subr.mxu0 0.0
    %2305 = vmatpush1.xpose.msra.mxu0 0.0
    %2306 = vmatprep.subr.mxu0 0.0
    %2307 = vmatpush1.xpose.msra.mxu0 0.0
    %2308 = vmatprep.subr.mxu0 0.0
    %2309 = vmatpush1.xpose.msra.mxu0 0.0
    %2310 = vmatprep.subr.mxu0 0.0
    %2311 = vmatpush1.xpose.msra.mxu0 0.0
    %2312 = vmatprep.mubr.f32.mxu0 0.0
    %2313 = vmatmul.mubr.f32.gmra.mrb[0].mxu0 %v2246
    %v2314 = vpop.f32.mrb[0].mxu0
    %v2315 = vadd.f32 0.0, %v2314
    %v2316 = vpop.f32.mrb[0].mxu0
    %2317 = vdwg.mxu0
    %v2318 = vsel %vm1136, %v2242, -inf
    %v2319 = vrot.slane %v2318, 4
    %v2320 = vmax.f32 %v2318, %v2319
    %v2321 = vrot.slane %v2320, 2
    %v2322 = vmax.f32 %v2320, %v2321
    %v2323 = vrot.slane %v2322, 1
    %v2324 = vmax.f32 %v2322, %v2323
    %v2325 = vsel %vm1136, %v2315, -inf
    %v2326 = vrot.slane %v2325, 4
    %v2327 = vmax.f32 %v2325, %v2326
    %v2328 = vrot.slane %v2327, 2
    %v2329 = vmax.f32 %v2327, %v2328
    %v2330 = vrot.slane %v2329, 1
    %v2331 = vmax.f32 %v2329, %v2330
    %v2332 = vsub.f32 %v2242, %v2324
    %v2333 = vsub.f32 %v2315, %v2331
    %v2334 = vmul.f32 %v2332, 1.442695
    %v2335 = vpow.pop %v2334
    %v2336 = vmul.f32 %v2333, 1.442695
    %v2337 = vpow.pop %v2336
    %v2338 = vsel %vm1136, %v2335, 0.0
    %v2339 = vrot.slane %v2338, 4
    %v2340 = vadd.f32 %v2338, %v2339
    %v2341 = vrot.slane %v2340, 2
    %v2342 = vadd.f32 %v2340, %v2341
    %v2343 = vrot.slane %v2342, 1
    %v2344 = vadd.f32 %v2342, %v2343
    %v2345 = vsel %vm1136, %v2337, 0.0
    %v2346 = vrot.slane %v2345, 4
    %v2347 = vadd.f32 %v2345, %v2346
    %v2348 = vrot.slane %v2347, 2
    %v2349 = vadd.f32 %v2347, %v2348
    %v2350 = vrot.slane %v2349, 1
    %v2351 = vadd.f32 %v2349, %v2350
    %v2352 = vrcp.pop %v2344
    %v2353 = vrcp.pop %v2351
    %v2354 = vmul.f32 %v2335, %v2352
    %v2355 = vmul.f32 %v2337, %v2353
    %v2356 = vadd.f32 %v2354, 1e-06
    %v2357 = vadd.f32 %v2355, 1e-06
    %v2358 = vsel %vm1136, %v2356, 0.0
    %2359 = vadd.xlane.f32.xlu0 %v2358
    %v2360 = vpop.xlane.xlu0 %2359
    %v2361 = vsel %vm1136, %v2357, 0.0
    %2362 = vadd.xlane.f32.xlu0 %v2361
    %v2363 = vpop.xlane.xlu0 %2362
    %v2364 = vrcp.pop %v2360
    %v2365 = vrcp.pop %v2363
    %v2366 = vmul.f32 %v2356, %v2364
    %v2367 = vmul.f32 %v2357, %v2365
    %v2369 = vsel %vm1136, %v2366, 0
    %2371 = vmatprep.subr.mxu0 0.0
    %2372 = vmatpush1.msra.mxu0 %v749
    %2373 = vmatprep.subr.mxu0 0.0
    %2374 = vmatpush1.msra.mxu0 %v754
    %2375 = vmatprep.subr.mxu0 0.0
    %2376 = vmatpush1.msra.mxu0 %v759
    %2377 = vmatprep.subr.mxu0 0.0
    %2378 = vmatpush1.msra.mxu0 %v764
    %2379 = vmatprep.subr.mxu0 0.0
    %2380 = vmatpush1.msra.mxu0 %v769
    %2381 = vmatprep.subr.mxu0 0.0
    %2382 = vmatpush1.msra.mxu0 %v774
    %2383 = vmatprep.subr.mxu0 0.0
    %2384 = vmatpush1.msra.mxu0 %v779
    %2385 = vmatprep.subr.mxu0 0.0
    %2386 = vmatpush1.msra.mxu0 %v784
    %2387 = vmatprep.subr.mxu0 0.0
    %2388 = vmatpush1.msra.mxu0 0.0
    %2389 = vmatprep.subr.mxu0 0.0
    %2390 = vmatpush1.msra.mxu0 0.0
    %2391 = vmatprep.subr.mxu0 0.0
    %2392 = vmatpush1.msra.mxu0 0.0
    %2393 = vmatprep.subr.mxu0 0.0
    %2394 = vmatpush1.msra.mxu0 0.0
    %2395 = vmatprep.subr.mxu0 0.0
    %2396 = vmatpush1.msra.mxu0 0.0
    %2397 = vmatprep.subr.mxu0 0.0
    %2398 = vmatpush1.msra.mxu0 0.0
    %2399 = vmatprep.subr.mxu0 0.0
    %2400 = vmatpush1.msra.mxu0 0.0
    %2401 = vmatprep.subr.mxu0 0.0
    %2402 = vmatpush1.msra.mxu0 0.0
    %2403 = vmatprep.subr.mxu0 0.0
    %2404 = vmatpush1.msra.mxu0 0.0
    %2405 = vmatprep.subr.mxu0 0.0
    %2406 = vmatpush1.msra.mxu0 0.0
    %2407 = vmatprep.subr.mxu0 0.0
    %2408 = vmatpush1.msra.mxu0 0.0
    %2409 = vmatprep.subr.mxu0 0.0
    %2410 = vmatpush1.msra.mxu0 0.0
    %2411 = vmatprep.subr.mxu0 0.0
    %2412 = vmatpush1.msra.mxu0 0.0
    %2413 = vmatprep.subr.mxu0 0.0
    %2414 = vmatpush1.msra.mxu0 0.0
    %2415 = vmatprep.subr.mxu0 0.0
    %2416 = vmatpush1.msra.mxu0 0.0
    %2417 = vmatprep.subr.mxu0 0.0
    %2418 = vmatpush1.msra.mxu0 0.0
    %2419 = vmatprep.subr.mxu0 0.0
    %2420 = vmatpush1.msra.mxu0 0.0
    %2421 = vmatprep.subr.mxu0 0.0
    %2422 = vmatpush1.msra.mxu0 0.0
    %2423 = vmatprep.subr.mxu0 0.0
    %2424 = vmatpush1.msra.mxu0 0.0
    %2425 = vmatprep.subr.mxu0 0.0
    %2426 = vmatpush1.msra.mxu0 0.0
    %2427 = vmatprep.subr.mxu0 0.0
    %2428 = vmatpush1.msra.mxu0 0.0
    %2429 = vmatprep.subr.mxu0 0.0
    %2430 = vmatpush1.msra.mxu0 0.0
    %2431 = vmatprep.subr.mxu0 0.0
    %2432 = vmatpush1.msra.mxu0 0.0
    %2433 = vmatprep.subr.mxu0 0.0
    %2434 = vmatpush1.msra.mxu0 0.0
    %2435 = vmatprep.mubr.f32.mxu0 0.0
    %2436 = vmatmul.mubr.f32.gmra.mrb[0].mxu0 %v2369
    %v2437 = vpop.f32.mrb[0].mxu0
    %v2438 = vadd.f32 0.0, %v2437
    %v2439 = vpop.f32.mrb[0].mxu0
    %2440 = vdwg.mxu0
    %v2442 = vsel %vm1136, %v2367, 0
    %2444 = vmatprep.subr.mxu0 0.0
    %2445 = vmatpush1.msra.mxu0 %v789
    %2446 = vmatprep.subr.mxu0 0.0
    %2447 = vmatpush1.msra.mxu0 %v794
    %2448 = vmatprep.subr.mxu0 0.0
    %2449 = vmatpush1.msra.mxu0 %v799
    %2450 = vmatprep.subr.mxu0 0.0
    %2451 = vmatpush1.msra.mxu0 %v804
    %2452 = vmatprep.subr.mxu0 0.0
    %2453 = vmatpush1.msra.mxu0 %v809
    %2454 = vmatprep.subr.mxu0 0.0
    %2455 = vmatpush1.msra.mxu0 %v814
    %2456 = vmatprep.subr.mxu0 0.0
    %2457 = vmatpush1.msra.mxu0 %v819
    %2458 = vmatprep.subr.mxu0 0.0
    %2459 = vmatpush1.msra.mxu0 %v824
    %2460 = vmatprep.subr.mxu0 0.0
    %2461 = vmatpush1.msra.mxu0 0.0
    %2462 = vmatprep.subr.mxu0 0.0
    %2463 = vmatpush1.msra.mxu0 0.0
    %2464 = vmatprep.subr.mxu0 0.0
    %2465 = vmatpush1.msra.mxu0 0.0
    %2466 = vmatprep.subr.mxu0 0.0
    %2467 = vmatpush1.msra.mxu0 0.0
    %2468 = vmatprep.subr.mxu0 0.0
    %2469 = vmatpush1.msra.mxu0 0.0
    %2470 = vmatprep.subr.mxu0 0.0
    %2471 = vmatpush1.msra.mxu0 0.0
    %2472 = vmatprep.subr.mxu0 0.0
    %2473 = vmatpush1.msra.mxu0 0.0
    %2474 = vmatprep.subr.mxu0 0.0
    %2475 = vmatpush1.msra.mxu0 0.0
    %2476 = vmatprep.subr.mxu0 0.0
    %2477 = vmatpush1.msra.mxu0 0.0
    %2478 = vmatprep.subr.mxu0 0.0
    %2479 = vmatpush1.msra.mxu0 0.0
    %2480 = vmatprep.subr.mxu0 0.0
    %2481 = vmatpush1.msra.mxu0 0.0
    %2482 = vmatprep.subr.mxu0 0.0
    %2483 = vmatpush1.msra.mxu0 0.0
    %2484 = vmatprep.subr.mxu0 0.0
    %2485 = vmatpush1.msra.mxu0 0.0
    %2486 = vmatprep.subr.mxu0 0.0
    %2487 = vmatpush1.msra.mxu0 0.0
    %2488 = vmatprep.subr.mxu0 0.0
    %2489 = vmatpush1.msra.mxu0 0.0
    %2490 = vmatprep.subr.mxu0 0.0
    %2491 = vmatpush1.msra.mxu0 0.0
    %2492 = vmatprep.subr.mxu0 0.0
    %2493 = vmatpush1.msra.mxu0 0.0
    %2494 = vmatprep.subr.mxu0 0.0
    %2495 = vmatpush1.msra.mxu0 0.0
    %2496 = vmatprep.subr.mxu0 0.0
    %2497 = vmatpush1.msra.mxu0 0.0
    %2498 = vmatprep.subr.mxu0 0.0
    %2499 = vmatpush1.msra.mxu0 0.0
    %2500 = vmatprep.subr.mxu0 0.0
    %2501 = vmatpush1.msra.mxu0 0.0
    %2502 = vmatprep.subr.mxu0 0.0
    %2503 = vmatpush1.msra.mxu0 0.0
    %2504 = vmatprep.subr.mxu0 0.0
    %2505 = vmatpush1.msra.mxu0 0.0
    %2506 = vmatprep.subr.mxu0 0.0
    %2507 = vmatpush1.msra.mxu0 0.0
    %2508 = vmatprep.mubr.f32.mxu0 0.0
    %2509 = vmatmul.mubr.f32.gmra.mrb[0].mxu0 %v2442
    %v2510 = vpop.f32.mrb[0].mxu0
    %v2511 = vadd.f32 0.0, %v2510
    %v2512 = vpop.f32.mrb[0].mxu0
    %2513 = vdwg.mxu0
    %v2515 = vsel %vm267, %v2063, 0
    %v2518 = vsel %vm267, %v2064, 0
    %2520 = vmatprep.subr.mxu0 0.0
    %2521 = vmatpush1.msra.mxu0 %v221
    %2522 = vmatprep.subr.mxu0 0.0
    %2523 = vmatpush1.msra.mxu0 %v222
    %2524 = vmatprep.subr.mxu0 0.0
    %2525 = vmatpush1.msra.mxu0 %v223
    %2526 = vmatprep.subr.mxu0 0.0
    %2527 = vmatpush1.msra.mxu0 %v224
    %2528 = vmatprep.subr.mxu0 0.0
    %2529 = vmatpush1.msra.mxu0 0.0
    %2530 = vmatprep.subr.mxu0 0.0
    %2531 = vmatpush1.msra.mxu0 0.0
    %2532 = vmatprep.subr.mxu0 0.0
    %2533 = vmatpush1.msra.mxu0 0.0
    %2534 = vmatprep.subr.mxu0 0.0
    %2535 = vmatpush1.msra.mxu0 0.0
    %2536 = vmatprep.subr.mxu0 0.0
    %2537 = vmatpush1.msra.mxu0 0.0
    %2538 = vmatprep.subr.mxu0 0.0
    %2539 = vmatpush1.msra.mxu0 0.0
    %2540 = vmatprep.subr.mxu0 0.0
    %2541 = vmatpush1.msra.mxu0 0.0
    %2542 = vmatprep.subr.mxu0 0.0
    %2543 = vmatpush1.msra.mxu0 0.0
    %2544 = vmatprep.subr.mxu0 0.0
    %2545 = vmatpush1.msra.mxu0 0.0
    %2546 = vmatprep.subr.mxu0 0.0
    %2547 = vmatpush1.msra.mxu0 0.0
    %2548 = vmatprep.subr.mxu0 0.0
    %2549 = vmatpush1.msra.mxu0 0.0
    %2550 = vmatprep.subr.mxu0 0.0
    %2551 = vmatpush1.msra.mxu0 0.0
    %2552 = vmatprep.subr.mxu0 0.0
    %2553 = vmatpush1.msra.mxu0 0.0
    %2554 = vmatprep.subr.mxu0 0.0
    %2555 = vmatpush1.msra.mxu0 0.0
    %2556 = vmatprep.subr.mxu0 0.0
    %2557 = vmatpush1.msra.mxu0 0.0
    %2558 = vmatprep.subr.mxu0 0.0
    %2559 = vmatpush1.msra.mxu0 0.0
    %2560 = vmatprep.subr.mxu0 0.0
    %2561 = vmatpush1.msra.mxu0 0.0
    %2562 = vmatprep.subr.mxu0 0.0
    %2563 = vmatpush1.msra.mxu0 0.0
    %2564 = vmatprep.subr.mxu0 0.0
    %2565 = vmatpush1.msra.mxu0 0.0
    %2566 = vmatprep.subr.mxu0 0.0
    %2567 = vmatpush1.msra.mxu0 0.0
    %2568 = vmatprep.subr.mxu0 0.0
    %2569 = vmatpush1.msra.mxu0 0.0
    %2570 = vmatprep.subr.mxu0 0.0
    %2571 = vmatpush1.msra.mxu0 0.0
    %2572 = vmatprep.subr.mxu0 0.0
    %2573 = vmatpush1.msra.mxu0 0.0
    %2574 = vmatprep.subr.mxu0 0.0
    %2575 = vmatpush1.msra.mxu0 0.0
    %2576 = vmatprep.subr.mxu0 0.0
    %2577 = vmatpush1.msra.mxu0 0.0
    %2578 = vmatprep.subr.mxu0 0.0
    %2579 = vmatpush1.msra.mxu0 0.0
    %2580 = vmatprep.subr.mxu0 0.0
    %2581 = vmatpush1.msra.mxu0 0.0
    %2582 = vmatprep.subr.mxu0 0.0
    %2583 = vmatpush1.msra.mxu0 0.0
    %2584 = vmatprep.mubr.f32.mxu0 0.0
    %2585 = vmatmul.mubr.f32.gmra.mrb[0].mxu0 %v2515
    %v2586 = vpop.f32.mrb[0].mxu0
    %v2587 = vadd.f32 0.0, %v2586
    %v2588 = vpop.f32.mrb[0].mxu0
    %2589 = vmatprep.mubr.f32.mxu0 0.0
    %2590 = vmatmul.mubr.f32.gmra.mrb[0].mxu0 %v2518
    %v2591 = vpop.f32.mrb[0].mxu0
    %v2592 = vadd.f32 0.0, %v2591
    %v2593 = vpop.f32.mrb[0].mxu0
    %2594 = vdwg.mxu0
    %v2596 = vsel %vm267, %v2438, 0
    %v2599 = vsel %vm267, %v2511, 0
    %2601 = vmatprep.subr.mxu0 0.0
    %2602 = vmatpush1.msra.mxu0 %v209
    %2603 = vmatprep.subr.mxu0 0.0
    %2604 = vmatpush1.msra.mxu0 %v210
    %2605 = vmatprep.subr.mxu0 0.0
    %2606 = vmatpush1.msra.mxu0 %v211
    %2607 = vmatprep.subr.mxu0 0.0
    %2608 = vmatpush1.msra.mxu0 %v212
    %2609 = vmatprep.subr.mxu0 0.0
    %2610 = vmatpush1.msra.mxu0 0.0
    %2611 = vmatprep.subr.mxu0 0.0
    %2612 = vmatpush1.msra.mxu0 0.0
    %2613 = vmatprep.subr.mxu0 0.0
    %2614 = vmatpush1.msra.mxu0 0.0
    %2615 = vmatprep.subr.mxu0 0.0
    %2616 = vmatpush1.msra.mxu0 0.0
    %2617 = vmatprep.subr.mxu0 0.0
    %2618 = vmatpush1.msra.mxu0 0.0
    %2619 = vmatprep.subr.mxu0 0.0
    %2620 = vmatpush1.msra.mxu0 0.0
    %2621 = vmatprep.subr.mxu0 0.0
    %2622 = vmatpush1.msra.mxu0 0.0
    %2623 = vmatprep.subr.mxu0 0.0
    %2624 = vmatpush1.msra.mxu0 0.0
    %2625 = vmatprep.subr.mxu0 0.0
    %2626 = vmatpush1.msra.mxu0 0.0
    %2627 = vmatprep.subr.mxu0 0.0
    %2628 = vmatpush1.msra.mxu0 0.0
    %2629 = vmatprep.subr.mxu0 0.0
    %2630 = vmatpush1.msra.mxu0 0.0
    %2631 = vmatprep.subr.mxu0 0.0
    %2632 = vmatpush1.msra.mxu0 0.0
    %2633 = vmatprep.subr.mxu0 0.0
    %2634 = vmatpush1.msra.mxu0 0.0
    %2635 = vmatprep.subr.mxu0 0.0
    %2636 = vmatpush1.msra.mxu0 0.0
    %2637 = vmatprep.subr.mxu0 0.0
    %2638 = vmatpush1.msra.mxu0 0.0
    %2639 = vmatprep.subr.mxu0 0.0
    %2640 = vmatpush1.msra.mxu0 0.0
    %2641 = vmatprep.subr.mxu0 0.0
    %2642 = vmatpush1.msra.mxu0 0.0
    %2643 = vmatprep.subr.mxu0 0.0
    %2644 = vmatpush1.msra.mxu0 0.0
    %2645 = vmatprep.subr.mxu0 0.0
    %2646 = vmatpush1.msra.mxu0 0.0
    %2647 = vmatprep.subr.mxu0 0.0
    %2648 = vmatpush1.msra.mxu0 0.0
    %2649 = vmatprep.subr.mxu0 0.0
    %2650 = vmatpush1.msra.mxu0 0.0
    %2651 = vmatprep.subr.mxu0 0.0
    %2652 = vmatpush1.msra.mxu0 0.0
    %2653 = vmatprep.subr.mxu0 0.0
    %2654 = vmatpush1.msra.mxu0 0.0
    %2655 = vmatprep.subr.mxu0 0.0
    %2656 = vmatpush1.msra.mxu0 0.0
    %2657 = vmatprep.subr.mxu0 0.0
    %2658 = vmatpush1.msra.mxu0 0.0
    %2659 = vmatprep.subr.mxu0 0.0
    %2660 = vmatpush1.msra.mxu0 0.0
    %2661 = vmatprep.subr.mxu0 0.0
    %2662 = vmatpush1.msra.mxu0 0.0
    %2663 = vmatprep.subr.mxu0 0.0
    %2664 = vmatpush1.msra.mxu0 0.0
    %2665 = vmatprep.mubr.f32.mxu0 0.0
    %2666 = vmatmul.mubr.f32.gmra.mrb[0].mxu0 %v2596
    %v2667 = vpop.f32.mrb[0].mxu0
    %v2668 = vadd.f32 %v2587, %v2667
    %v2669 = vpop.f32.mrb[0].mxu0
    %2670 = vmatprep.mubr.f32.mxu0 0.0
    %2671 = vmatmul.mubr.f32.gmra.mrb[0].mxu0 %v2599
    %v2672 = vpop.f32.mrb[0].mxu0
    %v2673 = vadd.f32 %v2592, %v2672
    %v2674 = vpop.f32.mrb[0].mxu0
    %2675 = vdwg.mxu0
    %v2676 = vadd.f32 %v2668, %v1499
    %v2677 = vadd.f32 %v2673, %v1499
    %v2678 = vxor.u32 %v2676, 2147483648
    %v2679 = vxor.u32 %v2677, 2147483648
    %v2680 = vmul.f32 %v2678, 1.442695
    %v2681 = vpow.pop %v2680
    %v2682 = vmul.f32 %v2679, 1.442695
    %v2683 = vpow.pop %v2682
    %v2684 = vadd.f32 %v2681, 1.0
    %v2685 = vadd.f32 %v2683, 1.0
    %v2686 = vrcp.pop %v2684
    %v2687 = vmul.f32 1.0, %v2686
    %v2688 = vrcp.pop %v2685
    %v2689 = vmul.f32 1.0, %v2688
    %2690 = vmatprep.subr.mxu0 0.0
    %2691 = vmatpush1.msra.mxu0 %v225
    %2692 = vmatprep.subr.mxu0 0.0
    %2693 = vmatpush1.msra.mxu0 %v226
    %2694 = vmatprep.subr.mxu0 0.0
    %2695 = vmatpush1.msra.mxu0 %v227
    %2696 = vmatprep.subr.mxu0 0.0
    %2697 = vmatpush1.msra.mxu0 %v228
    %2698 = vmatprep.subr.mxu0 0.0
    %2699 = vmatpush1.msra.mxu0 0.0
    %2700 = vmatprep.subr.mxu0 0.0
    %2701 = vmatpush1.msra.mxu0 0.0
    %2702 = vmatprep.subr.mxu0 0.0
    %2703 = vmatpush1.msra.mxu0 0.0
    %2704 = vmatprep.subr.mxu0 0.0
    %2705 = vmatpush1.msra.mxu0 0.0
    %2706 = vmatprep.subr.mxu0 0.0
    %2707 = vmatpush1.msra.mxu0 0.0
    %2708 = vmatprep.subr.mxu0 0.0
    %2709 = vmatpush1.msra.mxu0 0.0
    %2710 = vmatprep.subr.mxu0 0.0
    %2711 = vmatpush1.msra.mxu0 0.0
    %2712 = vmatprep.subr.mxu0 0.0
    %2713 = vmatpush1.msra.mxu0 0.0
    %2714 = vmatprep.subr.mxu0 0.0
    %2715 = vmatpush1.msra.mxu0 0.0
    %2716 = vmatprep.subr.mxu0 0.0
    %2717 = vmatpush1.msra.mxu0 0.0
    %2718 = vmatprep.subr.mxu0 0.0
    %2719 = vmatpush1.msra.mxu0 0.0
    %2720 = vmatprep.subr.mxu0 0.0
    %2721 = vmatpush1.msra.mxu0 0.0
    %2722 = vmatprep.subr.mxu0 0.0
    %2723 = vmatpush1.msra.mxu0 0.0
    %2724 = vmatprep.subr.mxu0 0.0
    %2725 = vmatpush1.msra.mxu0 0.0
    %2726 = vmatprep.subr.mxu0 0.0
    %2727 = vmatpush1.msra.mxu0 0.0
    %2728 = vmatprep.subr.mxu0 0.0
    %2729 = vmatpush1.msra.mxu0 0.0
    %2730 = vmatprep.subr.mxu0 0.0
    %2731 = vmatpush1.msra.mxu0 0.0
    %2732 = vmatprep.subr.mxu0 0.0
    %2733 = vmatpush1.msra.mxu0 0.0
    %2734 = vmatprep.subr.mxu0 0.0
    %2735 = vmatpush1.msra.mxu0 0.0
    %2736 = vmatprep.subr.mxu0 0.0
    %2737 = vmatpush1.msra.mxu0 0.0
    %2738 = vmatprep.subr.mxu0 0.0
    %2739 = vmatpush1.msra.mxu0 0.0
    %2740 = vmatprep.subr.mxu0 0.0
    %2741 = vmatpush1.msra.mxu0 0.0
    %2742 = vmatprep.subr.mxu0 0.0
    %2743 = vmatpush1.msra.mxu0 0.0
    %2744 = vmatprep.subr.mxu0 0.0
    %2745 = vmatpush1.msra.mxu0 0.0
    %2746 = vmatprep.subr.mxu0 0.0
    %2747 = vmatpush1.msra.mxu0 0.0
    %2748 = vmatprep.subr.mxu0 0.0
    %2749 = vmatpush1.msra.mxu0 0.0
    %2750 = vmatprep.subr.mxu0 0.0
    %2751 = vmatpush1.msra.mxu0 0.0
    %2752 = vmatprep.subr.mxu0 0.0
    %2753 = vmatpush1.msra.mxu0 0.0
    %2754 = vmatprep.mubr.f32.mxu0 0.0
    %2755 = vmatmul.mubr.f32.gmra.mrb[0].mxu0 %v2515
    %v2756 = vpop.f32.mrb[0].mxu0
    %v2757 = vadd.f32 0.0, %v2756
    %v2758 = vpop.f32.mrb[0].mxu0
    %2759 = vmatprep.mubr.f32.mxu0 0.0
    %2760 = vmatmul.mubr.f32.gmra.mrb[0].mxu0 %v2518
    %v2761 = vpop.f32.mrb[0].mxu0
    %v2762 = vadd.f32 0.0, %v2761
    %v2763 = vpop.f32.mrb[0].mxu0
    %2764 = vdwg.mxu0
    %2765 = vmatprep.subr.mxu0 0.0
    %2766 = vmatpush1.msra.mxu0 %v213
    %2767 = vmatprep.subr.mxu0 0.0
    %2768 = vmatpush1.msra.mxu0 %v214
    %2769 = vmatprep.subr.mxu0 0.0
    %2770 = vmatpush1.msra.mxu0 %v215
    %2771 = vmatprep.subr.mxu0 0.0
    %2772 = vmatpush1.msra.mxu0 %v216
    %2773 = vmatprep.subr.mxu0 0.0
    %2774 = vmatpush1.msra.mxu0 0.0
    %2775 = vmatprep.subr.mxu0 0.0
    %2776 = vmatpush1.msra.mxu0 0.0
    %2777 = vmatprep.subr.mxu0 0.0
    %2778 = vmatpush1.msra.mxu0 0.0
    %2779 = vmatprep.subr.mxu0 0.0
    %2780 = vmatpush1.msra.mxu0 0.0
    %2781 = vmatprep.subr.mxu0 0.0
    %2782 = vmatpush1.msra.mxu0 0.0
    %2783 = vmatprep.subr.mxu0 0.0
    %2784 = vmatpush1.msra.mxu0 0.0
    %2785 = vmatprep.subr.mxu0 0.0
    %2786 = vmatpush1.msra.mxu0 0.0
    %2787 = vmatprep.subr.mxu0 0.0
    %2788 = vmatpush1.msra.mxu0 0.0
    %2789 = vmatprep.subr.mxu0 0.0
    %2790 = vmatpush1.msra.mxu0 0.0
    %2791 = vmatprep.subr.mxu0 0.0
    %2792 = vmatpush1.msra.mxu0 0.0
    %2793 = vmatprep.subr.mxu0 0.0
    %2794 = vmatpush1.msra.mxu0 0.0
    %2795 = vmatprep.subr.mxu0 0.0
    %2796 = vmatpush1.msra.mxu0 0.0
    %2797 = vmatprep.subr.mxu0 0.0
    %2798 = vmatpush1.msra.mxu0 0.0
    %2799 = vmatprep.subr.mxu0 0.0
    %2800 = vmatpush1.msra.mxu0 0.0
    %2801 = vmatprep.subr.mxu0 0.0
    %2802 = vmatpush1.msra.mxu0 0.0
    %2803 = vmatprep.subr.mxu0 0.0
    %2804 = vmatpush1.msra.mxu0 0.0
    %2805 = vmatprep.subr.mxu0 0.0
    %2806 = vmatpush1.msra.mxu0 0.0
    %2807 = vmatprep.subr.mxu0 0.0
    %2808 = vmatpush1.msra.mxu0 0.0
    %2809 = vmatprep.subr.mxu0 0.0
    %2810 = vmatpush1.msra.mxu0 0.0
    %2811 = vmatprep.subr.mxu0 0.0
    %2812 = vmatpush1.msra.mxu0 0.0
    %2813 = vmatprep.subr.mxu0 0.0
    %2814 = vmatpush1.msra.mxu0 0.0
    %2815 = vmatprep.subr.mxu0 0.0
    %2816 = vmatpush1.msra.mxu0 0.0
    %2817 = vmatprep.subr.mxu0 0.0
    %2818 = vmatpush1.msra.mxu0 0.0
    %2819 = vmatprep.subr.mxu0 0.0
    %2820 = vmatpush1.msra.mxu0 0.0
    %2821 = vmatprep.subr.mxu0 0.0
    %2822 = vmatpush1.msra.mxu0 0.0
    %2823 = vmatprep.subr.mxu0 0.0
    %2824 = vmatpush1.msra.mxu0 0.0
    %2825 = vmatprep.subr.mxu0 0.0
    %2826 = vmatpush1.msra.mxu0 0.0
    %2827 = vmatprep.subr.mxu0 0.0
    %2828 = vmatpush1.msra.mxu0 0.0
    %2829 = vmatprep.mubr.f32.mxu0 0.0
    %2830 = vmatmul.mubr.f32.gmra.mrb[0].mxu0 %v2596
    %v2831 = vpop.f32.mrb[0].mxu0
    %v2832 = vadd.f32 %v2757, %v2831
    %v2833 = vpop.f32.mrb[0].mxu0
    %2834 = vmatprep.mubr.f32.mxu0 0.0
    %2835 = vmatmul.mubr.f32.gmra.mrb[0].mxu0 %v2599
    %v2836 = vpop.f32.mrb[0].mxu0
    %v2837 = vadd.f32 %v2762, %v2836
    %v2838 = vpop.f32.mrb[0].mxu0
    %2839 = vdwg.mxu0
    %v2840 = vadd.f32 %v2832, %v1669
    %v2841 = vadd.f32 %v2837, %v1669
    %v2842 = vxor.u32 %v2840, 2147483648
    %v2843 = vxor.u32 %v2841, 2147483648
    %v2844 = vmul.f32 %v2842, 1.442695
    %v2845 = vpow.pop %v2844
    %v2846 = vmul.f32 %v2843, 1.442695
    %v2847 = vpow.pop %v2846
    %v2848 = vadd.f32 %v2845, 1.0
    %v2849 = vadd.f32 %v2847, 1.0
    %v2850 = vrcp.pop %v2848
    %v2851 = vmul.f32 1.0, %v2850
    %v2852 = vrcp.pop %v2849
    %v2853 = vmul.f32 1.0, %v2852
    %2854 = vmatprep.subr.mxu0 0.0
    %2855 = vmatpush1.msra.mxu0 %v217
    %2856 = vmatprep.subr.mxu0 0.0
    %2857 = vmatpush1.msra.mxu0 %v218
    %2858 = vmatprep.subr.mxu0 0.0
    %2859 = vmatpush1.msra.mxu0 %v219
    %2860 = vmatprep.subr.mxu0 0.0
    %2861 = vmatpush1.msra.mxu0 %v220
    %2862 = vmatprep.subr.mxu0 0.0
    %2863 = vmatpush1.msra.mxu0 0.0
    %2864 = vmatprep.subr.mxu0 0.0
    %2865 = vmatpush1.msra.mxu0 0.0
    %2866 = vmatprep.subr.mxu0 0.0
    %2867 = vmatpush1.msra.mxu0 0.0
    %2868 = vmatprep.subr.mxu0 0.0
    %2869 = vmatpush1.msra.mxu0 0.0
    %2870 = vmatprep.subr.mxu0 0.0
    %2871 = vmatpush1.msra.mxu0 0.0
    %2872 = vmatprep.subr.mxu0 0.0
    %2873 = vmatpush1.msra.mxu0 0.0
    %2874 = vmatprep.subr.mxu0 0.0
    %2875 = vmatpush1.msra.mxu0 0.0
    %2876 = vmatprep.subr.mxu0 0.0
    %2877 = vmatpush1.msra.mxu0 0.0
    %2878 = vmatprep.subr.mxu0 0.0
    %2879 = vmatpush1.msra.mxu0 0.0
    %2880 = vmatprep.subr.mxu0 0.0
    %2881 = vmatpush1.msra.mxu0 0.0
    %2882 = vmatprep.subr.mxu0 0.0
    %2883 = vmatpush1.msra.mxu0 0.0
    %2884 = vmatprep.subr.mxu0 0.0
    %2885 = vmatpush1.msra.mxu0 0.0
    %2886 = vmatprep.subr.mxu0 0.0
    %2887 = vmatpush1.msra.mxu0 0.0
    %2888 = vmatprep.subr.mxu0 0.0
    %2889 = vmatpush1.msra.mxu0 0.0
    %2890 = vmatprep.subr.mxu0 0.0
    %2891 = vmatpush1.msra.mxu0 0.0
    %2892 = vmatprep.subr.mxu0 0.0
    %2893 = vmatpush1.msra.mxu0 0.0
    %2894 = vmatprep.subr.mxu0 0.0
    %2895 = vmatpush1.msra.mxu0 0.0
    %2896 = vmatprep.subr.mxu0 0.0
    %2897 = vmatpush1.msra.mxu0 0.0
    %2898 = vmatprep.subr.mxu0 0.0
    %2899 = vmatpush1.msra.mxu0 0.0
    %2900 = vmatprep.subr.mxu0 0.0
    %2901 = vmatpush1.msra.mxu0 0.0
    %2902 = vmatprep.subr.mxu0 0.0
    %2903 = vmatpush1.msra.mxu0 0.0
    %2904 = vmatprep.subr.mxu0 0.0
    %2905 = vmatpush1.msra.mxu0 0.0
    %2906 = vmatprep.subr.mxu0 0.0
    %2907 = vmatpush1.msra.mxu0 0.0
    %2908 = vmatprep.subr.mxu0 0.0
    %2909 = vmatpush1.msra.mxu0 0.0
    %2910 = vmatprep.subr.mxu0 0.0
    %2911 = vmatpush1.msra.mxu0 0.0
    %2912 = vmatprep.subr.mxu0 0.0
    %2913 = vmatpush1.msra.mxu0 0.0
    %2914 = vmatprep.subr.mxu0 0.0
    %2915 = vmatpush1.msra.mxu0 0.0
    %2916 = vmatprep.subr.mxu0 0.0
    %2917 = vmatpush1.msra.mxu0 0.0
    %2918 = vmatprep.mubr.f32.mxu0 0.0
    %2919 = vmatmul.mubr.f32.gmra.mrb[0].mxu0 %v2596
    %v2920 = vpop.f32.mrb[0].mxu0
    %v2921 = vadd.f32 %v1689, %v2920
    %v2922 = vpop.f32.mrb[0].mxu0
    %2923 = vmatprep.mubr.f32.mxu0 0.0
    %2924 = vmatmul.mubr.f32.gmra.mrb[0].mxu0 %v2599
    %v2925 = vpop.f32.mrb[0].mxu0
    %v2926 = vadd.f32 %v1689, %v2925
    %v2927 = vpop.f32.mrb[0].mxu0
    %2928 = vdwg.mxu0
    %2929 = vmatprep.subr.mxu0 0.0
    %2930 = vmatpush1.msra.mxu0 %v229
    %2931 = vmatprep.subr.mxu0 0.0
    %2932 = vmatpush1.msra.mxu0 %v230
    %2933 = vmatprep.subr.mxu0 0.0
    %2934 = vmatpush1.msra.mxu0 %v231
    %2935 = vmatprep.subr.mxu0 0.0
    %2936 = vmatpush1.msra.mxu0 %v232
    %2937 = vmatprep.subr.mxu0 0.0
    %2938 = vmatpush1.msra.mxu0 0.0
    %2939 = vmatprep.subr.mxu0 0.0
    %2940 = vmatpush1.msra.mxu0 0.0
    %2941 = vmatprep.subr.mxu0 0.0
    %2942 = vmatpush1.msra.mxu0 0.0
    %2943 = vmatprep.subr.mxu0 0.0
    %2944 = vmatpush1.msra.mxu0 0.0
    %2945 = vmatprep.subr.mxu0 0.0
    %2946 = vmatpush1.msra.mxu0 0.0
    %2947 = vmatprep.subr.mxu0 0.0
    %2948 = vmatpush1.msra.mxu0 0.0
    %2949 = vmatprep.subr.mxu0 0.0
    %2950 = vmatpush1.msra.mxu0 0.0
    %2951 = vmatprep.subr.mxu0 0.0
    %2952 = vmatpush1.msra.mxu0 0.0
    %2953 = vmatprep.subr.mxu0 0.0
    %2954 = vmatpush1.msra.mxu0 0.0
    %2955 = vmatprep.subr.mxu0 0.0
    %2956 = vmatpush1.msra.mxu0 0.0
    %2957 = vmatprep.subr.mxu0 0.0
    %2958 = vmatpush1.msra.mxu0 0.0
    %2959 = vmatprep.subr.mxu0 0.0
    %2960 = vmatpush1.msra.mxu0 0.0
    %2961 = vmatprep.subr.mxu0 0.0
    %2962 = vmatpush1.msra.mxu0 0.0
    %2963 = vmatprep.subr.mxu0 0.0
    %2964 = vmatpush1.msra.mxu0 0.0
    %2965 = vmatprep.subr.mxu0 0.0
    %2966 = vmatpush1.msra.mxu0 0.0
    %2967 = vmatprep.subr.mxu0 0.0
    %2968 = vmatpush1.msra.mxu0 0.0
    %2969 = vmatprep.subr.mxu0 0.0
    %2970 = vmatpush1.msra.mxu0 0.0
    %2971 = vmatprep.subr.mxu0 0.0
    %2972 = vmatpush1.msra.mxu0 0.0
    %2973 = vmatprep.subr.mxu0 0.0
    %2974 = vmatpush1.msra.mxu0 0.0
    %2975 = vmatprep.subr.mxu0 0.0
    %2976 = vmatpush1.msra.mxu0 0.0
    %2977 = vmatprep.subr.mxu0 0.0
    %2978 = vmatpush1.msra.mxu0 0.0
    %2979 = vmatprep.subr.mxu0 0.0
    %2980 = vmatpush1.msra.mxu0 0.0
    %2981 = vmatprep.subr.mxu0 0.0
    %2982 = vmatpush1.msra.mxu0 0.0
    %2983 = vmatprep.subr.mxu0 0.0
    %2984 = vmatpush1.msra.mxu0 0.0
    %2985 = vmatprep.subr.mxu0 0.0
    %2986 = vmatpush1.msra.mxu0 0.0
    %2987 = vmatprep.subr.mxu0 0.0
    %2988 = vmatpush1.msra.mxu0 0.0
    %2989 = vmatprep.subr.mxu0 0.0
    %2990 = vmatpush1.msra.mxu0 0.0
    %2991 = vmatprep.subr.mxu0 0.0
    %2992 = vmatpush1.msra.mxu0 0.0
    %2993 = vmatprep.mubr.f32.mxu0 0.0
    %2994 = vmatmul.mubr.f32.gmra.mrb[0].mxu0 %v2515
    %v2995 = vpop.f32.mrb[0].mxu0
    %v2996 = vadd.f32 %v1770, %v2995
    %v2997 = vpop.f32.mrb[0].mxu0
    %2998 = vmatprep.mubr.f32.mxu0 0.0
    %2999 = vmatmul.mubr.f32.gmra.mrb[0].mxu0 %v2518
    %v3000 = vpop.f32.mrb[0].mxu0
    %v3001 = vadd.f32 %v1770, %v3000
    %v3002 = vpop.f32.mrb[0].mxu0
    %3003 = vdwg.mxu0
    %v3004 = vmul.f32 %v2687, %v2996
    %v3005 = vmul.f32 %v2689, %v3001
    %v3006 = vadd.f32 %v2921, %v3004
    %v3007 = vadd.f32 %v2926, %v3005
    %v3008 = vtanh.pop %v3006
    %v3009 = vtanh.pop %v3007
    %v3010 = vsub.f32 1.0, %v2851
    %v3011 = vsub.f32 1.0, %v2853
    %v3012 = vmul.f32 %v3010, %v3008
    %v3013 = vmul.f32 %v3011, %v3009
    %v3014 = vmul.f32 %v2851, %v2063
    %v3015 = vmul.f32 %v2853, %v2064
    %v3016 = vadd.f32 %v3012, %v3014
    %v3017 = vadd.f32 %v3013, %v3015
    %v3018 = vsel %vm267, %v3016, 0.0
    %3019 = vadd.xlane.f32.xlu0 %v3018
    %v3020 = vpop.xlane.xlu0 %3019
    %v3021 = vsel %vm267, %v3017, 0.0
    %3022 = vadd.xlane.f32.xlu0 %v3021
    %v3023 = vpop.xlane.xlu0 %3022
    %v3024 = vmul.f32 %v3020, %v316
    %v3025 = vmul.f32 %v3023, %v316
    %v3026 = vsub.f32 %v3016, %v3024
    %v3027 = vsub.f32 %v3017, %v3025
    %v3028 = vmul.f32 %v3026, %v3026
    %v3029 = vmul.f32 %v3027, %v3027
    %v3030 = vsel %vm267, %v3028, 0.0
    %3031 = vadd.xlane.f32.xlu0 %v3030
    %v3032 = vpop.xlane.xlu0 %3031
    %v3033 = vsel %vm267, %v3029, 0.0
    %3034 = vadd.xlane.f32.xlu0 %v3033
    %v3035 = vpop.xlane.xlu0 %3034
    %v3036 = vmul.f32 %v3032, %v316
    %v3037 = vmul.f32 %v3035, %v316
    %v3038 = vadd.f32 %v3036, 1e-05
    %v3039 = vadd.f32 %v3037, 1e-05
    %v3040 = vrsqrt.pop %v3038
    %v3041 = vrsqrt.pop %v3039
    %v3042 = vmul.f32 %v3026, %v3040
    %v3043 = vmul.f32 %v3027, %v3041
    %v3045 = vsel %vm267, %v3042, 0
    %v3048 = vsel %vm267, %v3043, 0
    %3050 = vmatprep.subr.mxu0 0.0
    %3051 = vmatpush1.msra.mxu0 %v237
    %3052 = vmatprep.subr.mxu0 0.0
    %3053 = vmatpush1.msra.mxu0 %v238
    %3054 = vmatprep.subr.mxu0 0.0
    %3055 = vmatpush1.msra.mxu0 %v239
    %3056 = vmatprep.subr.mxu0 0.0
    %3057 = vmatpush1.msra.mxu0 %v240
    %3058 = vmatprep.subr.mxu0 0.0
    %3059 = vmatpush1.msra.mxu0 0.0
    %3060 = vmatprep.subr.mxu0 0.0
    %3061 = vmatpush1.msra.mxu0 0.0
    %3062 = vmatprep.subr.mxu0 0.0
    %3063 = vmatpush1.msra.mxu0 0.0
    %3064 = vmatprep.subr.mxu0 0.0
    %3065 = vmatpush1.msra.mxu0 0.0
    %3066 = vmatprep.subr.mxu0 0.0
    %3067 = vmatpush1.msra.mxu0 0.0
    %3068 = vmatprep.subr.mxu0 0.0
    %3069 = vmatpush1.msra.mxu0 0.0
    %3070 = vmatprep.subr.mxu0 0.0
    %3071 = vmatpush1.msra.mxu0 0.0
    %3072 = vmatprep.subr.mxu0 0.0
    %3073 = vmatpush1.msra.mxu0 0.0
    %3074 = vmatprep.subr.mxu0 0.0
    %3075 = vmatpush1.msra.mxu0 0.0
    %3076 = vmatprep.subr.mxu0 0.0
    %3077 = vmatpush1.msra.mxu0 0.0
    %3078 = vmatprep.subr.mxu0 0.0
    %3079 = vmatpush1.msra.mxu0 0.0
    %3080 = vmatprep.subr.mxu0 0.0
    %3081 = vmatpush1.msra.mxu0 0.0
    %3082 = vmatprep.subr.mxu0 0.0
    %3083 = vmatpush1.msra.mxu0 0.0
    %3084 = vmatprep.subr.mxu0 0.0
    %3085 = vmatpush1.msra.mxu0 0.0
    %3086 = vmatprep.subr.mxu0 0.0
    %3087 = vmatpush1.msra.mxu0 0.0
    %3088 = vmatprep.subr.mxu0 0.0
    %3089 = vmatpush1.msra.mxu0 0.0
    %3090 = vmatprep.subr.mxu0 0.0
    %3091 = vmatpush1.msra.mxu0 0.0
    %3092 = vmatprep.subr.mxu0 0.0
    %3093 = vmatpush1.msra.mxu0 0.0
    %3094 = vmatprep.subr.mxu0 0.0
    %3095 = vmatpush1.msra.mxu0 0.0
    %3096 = vmatprep.subr.mxu0 0.0
    %3097 = vmatpush1.msra.mxu0 0.0
    %3098 = vmatprep.subr.mxu0 0.0
    %3099 = vmatpush1.msra.mxu0 0.0
    %3100 = vmatprep.subr.mxu0 0.0
    %3101 = vmatpush1.msra.mxu0 0.0
    %3102 = vmatprep.subr.mxu0 0.0
    %3103 = vmatpush1.msra.mxu0 0.0
    %3104 = vmatprep.subr.mxu0 0.0
    %3105 = vmatpush1.msra.mxu0 0.0
    %3106 = vmatprep.subr.mxu0 0.0
    %3107 = vmatpush1.msra.mxu0 0.0
    %3108 = vmatprep.subr.mxu0 0.0
    %3109 = vmatpush1.msra.mxu0 0.0
    %3110 = vmatprep.subr.mxu0 0.0
    %3111 = vmatpush1.msra.mxu0 0.0
    %3112 = vmatprep.subr.mxu0 0.0
    %3113 = vmatpush1.msra.mxu0 0.0
    %3114 = vmatprep.mubr.f32.mxu0 0.0
    %3115 = vmatmul.mubr.f32.gmra.mrb[0].mxu0 %v3045
    %v3116 = vpop.f32.mrb[0].mxu0
    %v3117 = vadd.f32 %v1891, %v3116
    %v3118 = vpop.f32.mrb[0].mxu0
    %3119 = vmatprep.mubr.f32.mxu0 0.0
    %3120 = vmatmul.mubr.f32.gmra.mrb[0].mxu0 %v3048
    %v3121 = vpop.f32.mrb[0].mxu0
    %v3122 = vadd.f32 %v1891, %v3121
    %v3123 = vpop.f32.mrb[0].mxu0
    %3124 = vdwg.mxu0
    %v3125 = vmax.f32 %v3117, 0.0
    %v3126 = vmax.f32 %v3122, 0.0
    %v3128 = vsel %vm1136, %v3125, 0
    %v3131 = vsel %vm1136, %v3126, 0
    %3133 = vmatprep.subr.mxu0 0.0
    %3134 = vmatpush1.msra.mxu0 %v242
    %3135 = vmatprep.subr.mxu0 0.0
    %3136 = vmatpush1.msra.mxu0 %v243
    %3137 = vmatprep.subr.mxu0 0.0
    %3138 = vmatpush1.msra.mxu0 %v244
    %3139 = vmatprep.subr.mxu0 0.0
    %3140 = vmatpush1.msra.mxu0 %v245
    %3141 = vmatprep.subr.mxu0 0.0
    %3142 = vmatpush1.msra.mxu0 %v246
    %3143 = vmatprep.subr.mxu0 0.0
    %3144 = vmatpush1.msra.mxu0 %v247
    %3145 = vmatprep.subr.mxu0 0.0
    %3146 = vmatpush1.msra.mxu0 %v248
    %3147 = vmatprep.subr.mxu0 0.0
    %3148 = vmatpush1.msra.mxu0 %v249
    %3149 = vmatprep.subr.mxu0 0.0
    %3150 = vmatpush1.msra.mxu0 0.0
    %3151 = vmatprep.subr.mxu0 0.0
    %3152 = vmatpush1.msra.mxu0 0.0
    %3153 = vmatprep.subr.mxu0 0.0
    %3154 = vmatpush1.msra.mxu0 0.0
    %3155 = vmatprep.subr.mxu0 0.0
    %3156 = vmatpush1.msra.mxu0 0.0
    %3157 = vmatprep.subr.mxu0 0.0
    %3158 = vmatpush1.msra.mxu0 0.0
    %3159 = vmatprep.subr.mxu0 0.0
    %3160 = vmatpush1.msra.mxu0 0.0
    %3161 = vmatprep.subr.mxu0 0.0
    %3162 = vmatpush1.msra.mxu0 0.0
    %3163 = vmatprep.subr.mxu0 0.0
    %3164 = vmatpush1.msra.mxu0 0.0
    %3165 = vmatprep.subr.mxu0 0.0
    %3166 = vmatpush1.msra.mxu0 0.0
    %3167 = vmatprep.subr.mxu0 0.0
    %3168 = vmatpush1.msra.mxu0 0.0
    %3169 = vmatprep.subr.mxu0 0.0
    %3170 = vmatpush1.msra.mxu0 0.0
    %3171 = vmatprep.subr.mxu0 0.0
    %3172 = vmatpush1.msra.mxu0 0.0
    %3173 = vmatprep.subr.mxu0 0.0
    %3174 = vmatpush1.msra.mxu0 0.0
    %3175 = vmatprep.subr.mxu0 0.0
    %3176 = vmatpush1.msra.mxu0 0.0
    %3177 = vmatprep.subr.mxu0 0.0
    %3178 = vmatpush1.msra.mxu0 0.0
    %3179 = vmatprep.subr.mxu0 0.0
    %3180 = vmatpush1.msra.mxu0 0.0
    %3181 = vmatprep.subr.mxu0 0.0
    %3182 = vmatpush1.msra.mxu0 0.0
    %3183 = vmatprep.subr.mxu0 0.0
    %3184 = vmatpush1.msra.mxu0 0.0
    %3185 = vmatprep.subr.mxu0 0.0
    %3186 = vmatpush1.msra.mxu0 0.0
    %3187 = vmatprep.subr.mxu0 0.0
    %3188 = vmatpush1.msra.mxu0 0.0
    %3189 = vmatprep.subr.mxu0 0.0
    %3190 = vmatpush1.msra.mxu0 0.0
    %3191 = vmatprep.subr.mxu0 0.0
    %3192 = vmatpush1.msra.mxu0 0.0
    %3193 = vmatprep.subr.mxu0 0.0
    %3194 = vmatpush1.msra.mxu0 0.0
    %3195 = vmatprep.subr.mxu0 0.0
    %3196 = vmatpush1.msra.mxu0 0.0
    %3197 = vmatprep.mubr.f32.mxu0 0.0
    %3198 = vmatmul.mubr.f32.gmra.mrb[0].mxu0 %v3128
    %v3199 = vpop.f32.mrb[0].mxu0
    %v3200 = vadd.f32 %v1980, %v3199
    %v3201 = vpop.f32.mrb[0].mxu0
    %3202 = vmatprep.mubr.f32.mxu0 0.0
    %3203 = vmatmul.mubr.f32.gmra.mrb[0].mxu0 %v3131
    %v3204 = vpop.f32.mrb[0].mxu0
    %v3205 = vadd.f32 %v1980, %v3204
    %v3206 = vpop.f32.mrb[0].mxu0
    %3207 = vdwg.mxu0
    %v3208 = vadd.f32 %v3016, %v3200
    %v3209 = vadd.f32 %v3017, %v3205
    %v3210 = vsel %vm267, %v3208, 0.0
    %3211 = vadd.xlane.f32.xlu0 %v3210
    %v3212 = vpop.xlane.xlu0 %3211
    %v3213 = vsel %vm267, %v3209, 0.0
    %3214 = vadd.xlane.f32.xlu0 %v3213
    %v3215 = vpop.xlane.xlu0 %3214
    %v3216 = vmul.f32 %v3212, %v316
    %v3217 = vmul.f32 %v3215, %v316
    %v3218 = vsub.f32 %v3208, %v3216
    %v3219 = vsub.f32 %v3209, %v3217
    %v3220 = vmul.f32 %v3218, %v3218
    %v3221 = vmul.f32 %v3219, %v3219
    %v3222 = vsel %vm267, %v3220, 0.0
    %3223 = vadd.xlane.f32.xlu0 %v3222
    %v3224 = vpop.xlane.xlu0 %3223
    %v3225 = vsel %vm267, %v3221, 0.0
    %3226 = vadd.xlane.f32.xlu0 %v3225
    %v3227 = vpop.xlane.xlu0 %3226
    %v3228 = vmul.f32 %v3224, %v316
    %v3229 = vmul.f32 %v3227, %v316
    %v3230 = vadd.f32 %v3228, 1e-05
    %v3231 = vadd.f32 %v3229, 1e-05
    %v3232 = vrsqrt.pop %v3230
    %v3233 = vrsqrt.pop %v3231
    %v3234 = vmul.f32 %v3218, %v3232
    %v3235 = vmul.f32 %v3219, %v3233
    %v3237 = vsel %vm267, %v3234, 0
    %v3240 = vsel %vm267, %v3235, 0
    %3242 = vmatprep.subr.mxu0 0.0
    %3243 = vmatpush1.msra.mxu0 %v204
    %3244 = vmatprep.subr.mxu0 0.0
    %3245 = vmatpush1.msra.mxu0 %v205
    %3246 = vmatprep.subr.mxu0 0.0
    %3247 = vmatpush1.msra.mxu0 %v206
    %3248 = vmatprep.subr.mxu0 0.0
    %3249 = vmatpush1.msra.mxu0 %v207
    %3250 = vmatprep.subr.mxu0 0.0
    %3251 = vmatpush1.msra.mxu0 0.0
    %3252 = vmatprep.subr.mxu0 0.0
    %3253 = vmatpush1.msra.mxu0 0.0
    %3254 = vmatprep.subr.mxu0 0.0
    %3255 = vmatpush1.msra.mxu0 0.0
    %3256 = vmatprep.subr.mxu0 0.0
    %3257 = vmatpush1.msra.mxu0 0.0
    %3258 = vmatprep.subr.mxu0 0.0
    %3259 = vmatpush1.msra.mxu0 0.0
    %3260 = vmatprep.subr.mxu0 0.0
    %3261 = vmatpush1.msra.mxu0 0.0
    %3262 = vmatprep.subr.mxu0 0.0
    %3263 = vmatpush1.msra.mxu0 0.0
    %3264 = vmatprep.subr.mxu0 0.0
    %3265 = vmatpush1.msra.mxu0 0.0
    %3266 = vmatprep.subr.mxu0 0.0
    %3267 = vmatpush1.msra.mxu0 0.0
    %3268 = vmatprep.subr.mxu0 0.0
    %3269 = vmatpush1.msra.mxu0 0.0
    %3270 = vmatprep.subr.mxu0 0.0
    %3271 = vmatpush1.msra.mxu0 0.0
    %3272 = vmatprep.subr.mxu0 0.0
    %3273 = vmatpush1.msra.mxu0 0.0
    %3274 = vmatprep.subr.mxu0 0.0
    %3275 = vmatpush1.msra.mxu0 0.0
    %3276 = vmatprep.subr.mxu0 0.0
    %3277 = vmatpush1.msra.mxu0 0.0
    %3278 = vmatprep.subr.mxu0 0.0
    %3279 = vmatpush1.msra.mxu0 0.0
    %3280 = vmatprep.subr.mxu0 0.0
    %3281 = vmatpush1.msra.mxu0 0.0
    %3282 = vmatprep.subr.mxu0 0.0
    %3283 = vmatpush1.msra.mxu0 0.0
    %3284 = vmatprep.subr.mxu0 0.0
    %3285 = vmatpush1.msra.mxu0 0.0
    %3286 = vmatprep.subr.mxu0 0.0
    %3287 = vmatpush1.msra.mxu0 0.0
    %3288 = vmatprep.subr.mxu0 0.0
    %3289 = vmatpush1.msra.mxu0 0.0
    %3290 = vmatprep.subr.mxu0 0.0
    %3291 = vmatpush1.msra.mxu0 0.0
    %3292 = vmatprep.subr.mxu0 0.0
    %3293 = vmatpush1.msra.mxu0 0.0
    %3294 = vmatprep.subr.mxu0 0.0
    %3295 = vmatpush1.msra.mxu0 0.0
    %3296 = vmatprep.subr.mxu0 0.0
    %3297 = vmatpush1.msra.mxu0 0.0
    %3298 = vmatprep.subr.mxu0 0.0
    %3299 = vmatpush1.msra.mxu0 0.0
    %3300 = vmatprep.subr.mxu0 0.0
    %3301 = vmatpush1.msra.mxu0 0.0
    %3302 = vmatprep.subr.mxu0 0.0
    %3303 = vmatpush1.msra.mxu0 0.0
    %3304 = vmatprep.subr.mxu0 0.0
    %3305 = vmatpush1.msra.mxu0 0.0
    %3306 = vmatprep.mubr.f32.mxu0 0.0
    %3307 = vmatmul.mubr.f32.gmra.mrb[0].mxu0 %v3237
    %v3308 = vpop.f32.mrb[0].mxu0
    %v3309 = vadd.f32 %v859, %v3308
    %v3310 = vpop.f32.mrb[0].mxu0
    %3311 = vmatprep.mubr.f32.mxu0 0.0
    %3312 = vmatmul.mubr.f32.gmra.mrb[0].mxu0 %v3240
    %v3313 = vpop.f32.mrb[0].mxu0
    %v3314 = vadd.f32 %v859, %v3313
    %v3315 = vpop.f32.mrb[0].mxu0
    %3316 = vdwg.mxu0
    %v3318 = vsel %vm267, %v3309, 0
    %3320 = vmatprep.subr.mxu0 0.0
    %3321 = vmatpush1.xpose.msra.mxu0 %v946
    %3322 = vmatprep.subr.mxu0 0.0
    %3323 = vmatpush1.xpose.msra.mxu0 %v949
    %3324 = vmatprep.subr.mxu0 0.0
    %3325 = vmatpush1.xpose.msra.mxu0 %v952
    %3326 = vmatprep.subr.mxu0 0.0
    %3327 = vmatpush1.xpose.msra.mxu0 %v955
    %3328 = vmatprep.subr.mxu0 0.0
    %3329 = vmatpush1.xpose.msra.mxu0 %v958
    %3330 = vmatprep.subr.mxu0 0.0
    %3331 = vmatpush1.xpose.msra.mxu0 %v961
    %3332 = vmatprep.subr.mxu0 0.0
    %3333 = vmatpush1.xpose.msra.mxu0 %v964
    %3334 = vmatprep.subr.mxu0 0.0
    %3335 = vmatpush1.xpose.msra.mxu0 %v967
    %3336 = vmatprep.subr.mxu0 0.0
    %3337 = vmatpush1.xpose.msra.mxu0 0.0
    %3338 = vmatprep.subr.mxu0 0.0
    %3339 = vmatpush1.xpose.msra.mxu0 0.0
    %3340 = vmatprep.subr.mxu0 0.0
    %3341 = vmatpush1.xpose.msra.mxu0 0.0
    %3342 = vmatprep.subr.mxu0 0.0
    %3343 = vmatpush1.xpose.msra.mxu0 0.0
    %3344 = vmatprep.subr.mxu0 0.0
    %3345 = vmatpush1.xpose.msra.mxu0 0.0
    %3346 = vmatprep.subr.mxu0 0.0
    %3347 = vmatpush1.xpose.msra.mxu0 0.0
    %3348 = vmatprep.subr.mxu0 0.0
    %3349 = vmatpush1.xpose.msra.mxu0 0.0
    %3350 = vmatprep.subr.mxu0 0.0
    %3351 = vmatpush1.xpose.msra.mxu0 0.0
    %3352 = vmatprep.subr.mxu0 0.0
    %3353 = vmatpush1.xpose.msra.mxu0 0.0
    %3354 = vmatprep.subr.mxu0 0.0
    %3355 = vmatpush1.xpose.msra.mxu0 0.0
    %3356 = vmatprep.subr.mxu0 0.0
    %3357 = vmatpush1.xpose.msra.mxu0 0.0
    %3358 = vmatprep.subr.mxu0 0.0
    %3359 = vmatpush1.xpose.msra.mxu0 0.0
    %3360 = vmatprep.subr.mxu0 0.0
    %3361 = vmatpush1.xpose.msra.mxu0 0.0
    %3362 = vmatprep.subr.mxu0 0.0
    %3363 = vmatpush1.xpose.msra.mxu0 0.0
    %3364 = vmatprep.subr.mxu0 0.0
    %3365 = vmatpush1.xpose.msra.mxu0 0.0
    %3366 = vmatprep.subr.mxu0 0.0
    %3367 = vmatpush1.xpose.msra.mxu0 0.0
    %3368 = vmatprep.subr.mxu0 0.0
    %3369 = vmatpush1.xpose.msra.mxu0 0.0
    %3370 = vmatprep.subr.mxu0 0.0
    %3371 = vmatpush1.xpose.msra.mxu0 0.0
    %3372 = vmatprep.subr.mxu0 0.0
    %3373 = vmatpush1.xpose.msra.mxu0 0.0
    %3374 = vmatprep.subr.mxu0 0.0
    %3375 = vmatpush1.xpose.msra.mxu0 0.0
    %3376 = vmatprep.subr.mxu0 0.0
    %3377 = vmatpush1.xpose.msra.mxu0 0.0
    %3378 = vmatprep.subr.mxu0 0.0
    %3379 = vmatpush1.xpose.msra.mxu0 0.0
    %3380 = vmatprep.subr.mxu0 0.0
    %3381 = vmatpush1.xpose.msra.mxu0 0.0
    %3382 = vmatprep.subr.mxu0 0.0
    %3383 = vmatpush1.xpose.msra.mxu0 0.0
    %3384 = vmatprep.mubr.f32.mxu0 0.0
    %3385 = vmatmul.mubr.f32.gmra.mrb[0].mxu0 %v3318
    %v3386 = vpop.f32.mrb[0].mxu0
    %v3387 = vadd.f32 0.0, %v3386
    %v3388 = vpop.f32.mrb[0].mxu0
    %3389 = vdwg.mxu0
    %v3391 = vsel %vm267, %v3314, 0
    %3393 = vmatprep.subr.mxu0 0.0
    %3394 = vmatpush1.xpose.msra.mxu0 %v1043
    %3395 = vmatprep.subr.mxu0 0.0
    %3396 = vmatpush1.xpose.msra.mxu0 %v1046
    %3397 = vmatprep.subr.mxu0 0.0
    %3398 = vmatpush1.xpose.msra.mxu0 %v1049
    %3399 = vmatprep.subr.mxu0 0.0
    %3400 = vmatpush1.xpose.msra.mxu0 %v1052
    %3401 = vmatprep.subr.mxu0 0.0
    %3402 = vmatpush1.xpose.msra.mxu0 %v1055
    %3403 = vmatprep.subr.mxu0 0.0
    %3404 = vmatpush1.xpose.msra.mxu0 %v1058
    %3405 = vmatprep.subr.mxu0 0.0
    %3406 = vmatpush1.xpose.msra.mxu0 %v1061
    %3407 = vmatprep.subr.mxu0 0.0
    %3408 = vmatpush1.xpose.msra.mxu0 %v1064
    %3409 = vmatprep.subr.mxu0 0.0
    %3410 = vmatpush1.xpose.msra.mxu0 0.0
    %3411 = vmatprep.subr.mxu0 0.0
    %3412 = vmatpush1.xpose.msra.mxu0 0.0
    %3413 = vmatprep.subr.mxu0 0.0
    %3414 = vmatpush1.xpose.msra.mxu0 0.0
    %3415 = vmatprep.subr.mxu0 0.0
    %3416 = vmatpush1.xpose.msra.mxu0 0.0
    %3417 = vmatprep.subr.mxu0 0.0
    %3418 = vmatpush1.xpose.msra.mxu0 0.0
    %3419 = vmatprep.subr.mxu0 0.0
    %3420 = vmatpush1.xpose.msra.mxu0 0.0
    %3421 = vmatprep.subr.mxu0 0.0
    %3422 = vmatpush1.xpose.msra.mxu0 0.0
    %3423 = vmatprep.subr.mxu0 0.0
    %3424 = vmatpush1.xpose.msra.mxu0 0.0
    %3425 = vmatprep.subr.mxu0 0.0
    %3426 = vmatpush1.xpose.msra.mxu0 0.0
    %3427 = vmatprep.subr.mxu0 0.0
    %3428 = vmatpush1.xpose.msra.mxu0 0.0
    %3429 = vmatprep.subr.mxu0 0.0
    %3430 = vmatpush1.xpose.msra.mxu0 0.0
    %3431 = vmatprep.subr.mxu0 0.0
    %3432 = vmatpush1.xpose.msra.mxu0 0.0
    %3433 = vmatprep.subr.mxu0 0.0
    %3434 = vmatpush1.xpose.msra.mxu0 0.0
    %3435 = vmatprep.subr.mxu0 0.0
    %3436 = vmatpush1.xpose.msra.mxu0 0.0
    %3437 = vmatprep.subr.mxu0 0.0
    %3438 = vmatpush1.xpose.msra.mxu0 0.0
    %3439 = vmatprep.subr.mxu0 0.0
    %3440 = vmatpush1.xpose.msra.mxu0 0.0
    %3441 = vmatprep.subr.mxu0 0.0
    %3442 = vmatpush1.xpose.msra.mxu0 0.0
    %3443 = vmatprep.subr.mxu0 0.0
    %3444 = vmatpush1.xpose.msra.mxu0 0.0
    %3445 = vmatprep.subr.mxu0 0.0
    %3446 = vmatpush1.xpose.msra.mxu0 0.0
    %3447 = vmatprep.subr.mxu0 0.0
    %3448 = vmatpush1.xpose.msra.mxu0 0.0
    %3449 = vmatprep.subr.mxu0 0.0
    %3450 = vmatpush1.xpose.msra.mxu0 0.0
    %3451 = vmatprep.subr.mxu0 0.0
    %3452 = vmatpush1.xpose.msra.mxu0 0.0
    %3453 = vmatprep.subr.mxu0 0.0
    %3454 = vmatpush1.xpose.msra.mxu0 0.0
    %3455 = vmatprep.subr.mxu0 0.0
    %3456 = vmatpush1.xpose.msra.mxu0 0.0
    %3457 = vmatprep.mubr.f32.mxu0 0.0
    %3458 = vmatmul.mubr.f32.gmra.mrb[0].mxu0 %v3391
    %v3459 = vpop.f32.mrb[0].mxu0
    %v3460 = vadd.f32 0.0, %v3459
    %v3461 = vpop.f32.mrb[0].mxu0
    %3462 = vdwg.mxu0
    %v3463 = vsel %vm1136, %v3387, -inf
    %v3464 = vrot.slane %v3463, 4
    %v3465 = vmax.f32 %v3463, %v3464
    %v3466 = vrot.slane %v3465, 2
    %v3467 = vmax.f32 %v3465, %v3466
    %v3468 = vrot.slane %v3467, 1
    %v3469 = vmax.f32 %v3467, %v3468
    %v3470 = vsel %vm1136, %v3460, -inf
    %v3471 = vrot.slane %v3470, 4
    %v3472 = vmax.f32 %v3470, %v3471
    %v3473 = vrot.slane %v3472, 2
    %v3474 = vmax.f32 %v3472, %v3473
    %v3475 = vrot.slane %v3474, 1
    %v3476 = vmax.f32 %v3474, %v3475
    %v3477 = vsub.f32 %v3387, %v3469
    %v3478 = vsub.f32 %v3460, %v3476
    %v3479 = vmul.f32 %v3477, 1.442695
    %v3480 = vpow.pop %v3479
    %v3481 = vmul.f32 %v3478, 1.442695
    %v3482 = vpow.pop %v3481
    %v3483 = vsel %vm1136, %v3480, 0.0
    %v3484 = vrot.slane %v3483, 4
    %v3485 = vadd.f32 %v3483, %v3484
    %v3486 = vrot.slane %v3485, 2
    %v3487 = vadd.f32 %v3485, %v3486
    %v3488 = vrot.slane %v3487, 1
    %v3489 = vadd.f32 %v3487, %v3488
    %v3490 = vsel %vm1136, %v3482, 0.0
    %v3491 = vrot.slane %v3490, 4
    %v3492 = vadd.f32 %v3490, %v3491
    %v3493 = vrot.slane %v3492, 2
    %v3494 = vadd.f32 %v3492, %v3493
    %v3495 = vrot.slane %v3494, 1
    %v3496 = vadd.f32 %v3494, %v3495
    %v3497 = vrcp.pop %v3489
    %v3498 = vrcp.pop %v3496
    %v3499 = vmul.f32 %v3480, %v3497
    %v3500 = vmul.f32 %v3482, %v3498
    %v3501 = vadd.f32 %v3499, 1e-06
    %v3502 = vadd.f32 %v3500, 1e-06
    %v3503 = vsel %vm1136, %v3501, 0.0
    %3504 = vadd.xlane.f32.xlu0 %v3503
    %v3505 = vpop.xlane.xlu0 %3504
    %v3506 = vsel %vm1136, %v3502, 0.0
    %3507 = vadd.xlane.f32.xlu0 %v3506
    %v3508 = vpop.xlane.xlu0 %3507
    %v3509 = vrcp.pop %v3505
    %v3510 = vrcp.pop %v3508
    %v3511 = vmul.f32 %v3501, %v3509
    %v3512 = vmul.f32 %v3502, %v3510
    %v3514 = vsel %vm1136, %v3511, 0
    %3516 = vmatprep.subr.mxu0 0.0
    %3517 = vmatpush1.msra.mxu0 %v749
    %3518 = vmatprep.subr.mxu0 0.0
    %3519 = vmatpush1.msra.mxu0 %v754
    %3520 = vmatprep.subr.mxu0 0.0
    %3521 = vmatpush1.msra.mxu0 %v759
    %3522 = vmatprep.subr.mxu0 0.0
    %3523 = vmatpush1.msra.mxu0 %v764
    %3524 = vmatprep.subr.mxu0 0.0
    %3525 = vmatpush1.msra.mxu0 %v769
    %3526 = vmatprep.subr.mxu0 0.0
    %3527 = vmatpush1.msra.mxu0 %v774
    %3528 = vmatprep.subr.mxu0 0.0
    %3529 = vmatpush1.msra.mxu0 %v779
    %3530 = vmatprep.subr.mxu0 0.0
    %3531 = vmatpush1.msra.mxu0 %v784
    %3532 = vmatprep.subr.mxu0 0.0
    %3533 = vmatpush1.msra.mxu0 0.0
    %3534 = vmatprep.subr.mxu0 0.0
    %3535 = vmatpush1.msra.mxu0 0.0
    %3536 = vmatprep.subr.mxu0 0.0
    %3537 = vmatpush1.msra.mxu0 0.0
    %3538 = vmatprep.subr.mxu0 0.0
    %3539 = vmatpush1.msra.mxu0 0.0
    %3540 = vmatprep.subr.mxu0 0.0
    %3541 = vmatpush1.msra.mxu0 0.0
    %3542 = vmatprep.subr.mxu0 0.0
    %3543 = vmatpush1.msra.mxu0 0.0
    %3544 = vmatprep.subr.mxu0 0.0
    %3545 = vmatpush1.msra.mxu0 0.0
    %3546 = vmatprep.subr.mxu0 0.0
    %3547 = vmatpush1.msra.mxu0 0.0
    %3548 = vmatprep.subr.mxu0 0.0
    %3549 = vmatpush1.msra.mxu0 0.0
    %3550 = vmatprep.subr.mxu0 0.0
    %3551 = vmatpush1.msra.mxu0 0.0
    %3552 = vmatprep.subr.mxu0 0.0
    %3553 = vmatpush1.msra.mxu0 0.0
    %3554 = vmatprep.subr.mxu0 0.0
    %3555 = vmatpush1.msra.mxu0 0.0
    %3556 = vmatprep.subr.mxu0 0.0
    %3557 = vmatpush1.msra.mxu0 0.0
    %3558 = vmatprep.subr.mxu0 0.0
    %3559 = vmatpush1.msra.mxu0 0.0
    %3560 = vmatprep.subr.mxu0 0.0
    %3561 = vmatpush1.msra.mxu0 0.0
    %3562 = vmatprep.subr.mxu0 0.0
    %3563 = vmatpush1.msra.mxu0 0.0
    %3564 = vmatprep.subr.mxu0 0.0
    %3565 = vmatpush1.msra.mxu0 0.0
    %3566 = vmatprep.subr.mxu0 0.0
    %3567 = vmatpush1.msra.mxu0 0.0
    %3568 = vmatprep.subr.mxu0 0.0
    %3569 = vmatpush1.msra.mxu0 0.0
    %3570 = vmatprep.subr.mxu0 0.0
    %3571 = vmatpush1.msra.mxu0 0.0
    %3572 = vmatprep.subr.mxu0 0.0
    %3573 = vmatpush1.msra.mxu0 0.0
    %3574 = vmatprep.subr.mxu0 0.0
    %3575 = vmatpush1.msra.mxu0 0.0
    %3576 = vmatprep.subr.mxu0 0.0
    %3577 = vmatpush1.msra.mxu0 0.0
    %3578 = vmatprep.subr.mxu0 0.0
    %3579 = vmatpush1.msra.mxu0 0.0
    %3580 = vmatprep.mubr.f32.mxu0 0.0
    %3581 = vmatmul.mubr.f32.gmra.mrb[0].mxu0 %v3514
    %v3582 = vpop.f32.mrb[0].mxu0
    %v3583 = vadd.f32 0.0, %v3582
    %v3584 = vpop.f32.mrb[0].mxu0
    %3585 = vdwg.mxu0
    %v3587 = vsel %vm1136, %v3512, 0
    %3589 = vmatprep.subr.mxu0 0.0
    %3590 = vmatpush1.msra.mxu0 %v789
    %3591 = vmatprep.subr.mxu0 0.0
    %3592 = vmatpush1.msra.mxu0 %v794
    %3593 = vmatprep.subr.mxu0 0.0
    %3594 = vmatpush1.msra.mxu0 %v799
    %3595 = vmatprep.subr.mxu0 0.0
    %3596 = vmatpush1.msra.mxu0 %v804
    %3597 = vmatprep.subr.mxu0 0.0
    %3598 = vmatpush1.msra.mxu0 %v809
    %3599 = vmatprep.subr.mxu0 0.0
    %3600 = vmatpush1.msra.mxu0 %v814
    %3601 = vmatprep.subr.mxu0 0.0
    %3602 = vmatpush1.msra.mxu0 %v819
    %3603 = vmatprep.subr.mxu0 0.0
    %3604 = vmatpush1.msra.mxu0 %v824
    %3605 = vmatprep.subr.mxu0 0.0
    %3606 = vmatpush1.msra.mxu0 0.0
    %3607 = vmatprep.subr.mxu0 0.0
    %3608 = vmatpush1.msra.mxu0 0.0
    %3609 = vmatprep.subr.mxu0 0.0
    %3610 = vmatpush1.msra.mxu0 0.0
    %3611 = vmatprep.subr.mxu0 0.0
    %3612 = vmatpush1.msra.mxu0 0.0
    %3613 = vmatprep.subr.mxu0 0.0
    %3614 = vmatpush1.msra.mxu0 0.0
    %3615 = vmatprep.subr.mxu0 0.0
    %3616 = vmatpush1.msra.mxu0 0.0
    %3617 = vmatprep.subr.mxu0 0.0
    %3618 = vmatpush1.msra.mxu0 0.0
    %3619 = vmatprep.subr.mxu0 0.0
    %3620 = vmatpush1.msra.mxu0 0.0
    %3621 = vmatprep.subr.mxu0 0.0
    %3622 = vmatpush1.msra.mxu0 0.0
    %3623 = vmatprep.subr.mxu0 0.0
    %3624 = vmatpush1.msra.mxu0 0.0
    %3625 = vmatprep.subr.mxu0 0.0
    %3626 = vmatpush1.msra.mxu0 0.0
    %3627 = vmatprep.subr.mxu0 0.0
    %3628 = vmatpush1.msra.mxu0 0.0
    %3629 = vmatprep.subr.mxu0 0.0
    %3630 = vmatpush1.msra.mxu0 0.0
    %3631 = vmatprep.subr.mxu0 0.0
    %3632 = vmatpush1.msra.mxu0 0.0
    %3633 = vmatprep.subr.mxu0 0.0
    %3634 = vmatpush1.msra.mxu0 0.0
    %3635 = vmatprep.subr.mxu0 0.0
    %3636 = vmatpush1.msra.mxu0 0.0
    %3637 = vmatprep.subr.mxu0 0.0
    %3638 = vmatpush1.msra.mxu0 0.0
    %3639 = vmatprep.subr.mxu0 0.0
    %3640 = vmatpush1.msra.mxu0 0.0
    %3641 = vmatprep.subr.mxu0 0.0
    %3642 = vmatpush1.msra.mxu0 0.0
    %3643 = vmatprep.subr.mxu0 0.0
    %3644 = vmatpush1.msra.mxu0 0.0
    %3645 = vmatprep.subr.mxu0 0.0
    %3646 = vmatpush1.msra.mxu0 0.0
    %3647 = vmatprep.subr.mxu0 0.0
    %3648 = vmatpush1.msra.mxu0 0.0
    %3649 = vmatprep.subr.mxu0 0.0
    %3650 = vmatpush1.msra.mxu0 0.0
    %3651 = vmatprep.subr.mxu0 0.0
    %3652 = vmatpush1.msra.mxu0 0.0
    %3653 = vmatprep.mubr.f32.mxu0 0.0
    %3654 = vmatmul.mubr.f32.gmra.mrb[0].mxu0 %v3587
    %v3655 = vpop.f32.mrb[0].mxu0
    %v3656 = vadd.f32 0.0, %v3655
    %v3657 = vpop.f32.mrb[0].mxu0
    %3658 = vdwg.mxu0
    %v3660 = vsel %vm267, %v3208, 0
    %v3663 = vsel %vm267, %v3209, 0
    %3665 = vmatprep.subr.mxu0 0.0
    %3666 = vmatpush1.msra.mxu0 %v221
    %3667 = vmatprep.subr.mxu0 0.0
    %3668 = vmatpush1.msra.mxu0 %v222
    %3669 = vmatprep.subr.mxu0 0.0
    %3670 = vmatpush1.msra.mxu0 %v223
    %3671 = vmatprep.subr.mxu0 0.0
    %3672 = vmatpush1.msra.mxu0 %v224
    %3673 = vmatprep.subr.mxu0 0.0
    %3674 = vmatpush1.msra.mxu0 0.0
    %3675 = vmatprep.subr.mxu0 0.0
    %3676 = vmatpush1.msra.mxu0 0.0
    %3677 = vmatprep.subr.mxu0 0.0
    %3678 = vmatpush1.msra.mxu0 0.0
    %3679 = vmatprep.subr.mxu0 0.0
    %3680 = vmatpush1.msra.mxu0 0.0
    %3681 = vmatprep.subr.mxu0 0.0
    %3682 = vmatpush1.msra.mxu0 0.0
    %3683 = vmatprep.subr.mxu0 0.0
    %3684 = vmatpush1.msra.mxu0 0.0
    %3685 = vmatprep.subr.mxu0 0.0
    %3686 = vmatpush1.msra.mxu0 0.0
    %3687 = vmatprep.subr.mxu0 0.0
    %3688 = vmatpush1.msra.mxu0 0.0
    %3689 = vmatprep.subr.mxu0 0.0
    %3690 = vmatpush1.msra.mxu0 0.0
    %3691 = vmatprep.subr.mxu0 0.0
    %3692 = vmatpush1.msra.mxu0 0.0
    %3693 = vmatprep.subr.mxu0 0.0
    %3694 = vmatpush1.msra.mxu0 0.0
    %3695 = vmatprep.subr.mxu0 0.0
    %3696 = vmatpush1.msra.mxu0 0.0
    %3697 = vmatprep.subr.mxu0 0.0
    %3698 = vmatpush1.msra.mxu0 0.0
    %3699 = vmatprep.subr.mxu0 0.0
    %3700 = vmatpush1.msra.mxu0 0.0
    %3701 = vmatprep.subr.mxu0 0.0
    %3702 = vmatpush1.msra.mxu0 0.0
    %3703 = vmatprep.subr.mxu0 0.0
    %3704 = vmatpush1.msra.mxu0 0.0
    %3705 = vmatprep.subr.mxu0 0.0
    %3706 = vmatpush1.msra.mxu0 0.0
    %3707 = vmatprep.subr.mxu0 0.0
    %3708 = vmatpush1.msra.mxu0 0.0
    %3709 = vmatprep.subr.mxu0 0.0
    %3710 = vmatpush1.msra.mxu0 0.0
    %3711 = vmatprep.subr.mxu0 0.0
    %3712 = vmatpush1.msra.mxu0 0.0
    %3713 = vmatprep.subr.mxu0 0.0
    %3714 = vmatpush1.msra.mxu0 0.0
    %3715 = vmatprep.subr.mxu0 0.0
    %3716 = vmatpush1.msra.mxu0 0.0
    %3717 = vmatprep.subr.mxu0 0.0
    %3718 = vmatpush1.msra.mxu0 0.0
    %3719 = vmatprep.subr.mxu0 0.0
    %3720 = vmatpush1.msra.mxu0 0.0
    %3721 = vmatprep.subr.mxu0 0.0
    %3722 = vmatpush1.msra.mxu0 0.0
    %3723 = vmatprep.subr.mxu0 0.0
    %3724 = vmatpush1.msra.mxu0 0.0
    %3725 = vmatprep.subr.mxu0 0.0
    %3726 = vmatpush1.msra.mxu0 0.0
    %3727 = vmatprep.subr.mxu0 0.0
    %3728 = vmatpush1.msra.mxu0 0.0
    %3729 = vmatprep.mubr.f32.mxu0 0.0
    %3730 = vmatmul.mubr.f32.gmra.mrb[0].mxu0 %v3660
    %v3731 = vpop.f32.mrb[0].mxu0
    %v3732 = vadd.f32 0.0, %v3731
    %v3733 = vpop.f32.mrb[0].mxu0
    %3734 = vmatprep.mubr.f32.mxu0 0.0
    %3735 = vmatmul.mubr.f32.gmra.mrb[0].mxu0 %v3663
    %v3736 = vpop.f32.mrb[0].mxu0
    %v3737 = vadd.f32 0.0, %v3736
    %v3738 = vpop.f32.mrb[0].mxu0
    %3739 = vdwg.mxu0
    %v3741 = vsel %vm267, %v3583, 0
    %v3744 = vsel %vm267, %v3656, 0
    %3746 = vmatprep.subr.mxu0 0.0
    %3747 = vmatpush1.msra.mxu0 %v209
    %3748 = vmatprep.subr.mxu0 0.0
    %3749 = vmatpush1.msra.mxu0 %v210
    %3750 = vmatprep.subr.mxu0 0.0
    %3751 = vmatpush1.msra.mxu0 %v211
    %3752 = vmatprep.subr.mxu0 0.0
    %3753 = vmatpush1.msra.mxu0 %v212
    %3754 = vmatprep.subr.mxu0 0.0
    %3755 = vmatpush1.msra.mxu0 0.0
    %3756 = vmatprep.subr.mxu0 0.0
    %3757 = vmatpush1.msra.mxu0 0.0
    %3758 = vmatprep.subr.mxu0 0.0
    %3759 = vmatpush1.msra.mxu0 0.0
    %3760 = vmatprep.subr.mxu0 0.0
    %3761 = vmatpush1.msra.mxu0 0.0
    %3762 = vmatprep.subr.mxu0 0.0
    %3763 = vmatpush1.msra.mxu0 0.0
    %3764 = vmatprep.subr.mxu0 0.0
    %3765 = vmatpush1.msra.mxu0 0.0
    %3766 = vmatprep.subr.mxu0 0.0
    %3767 = vmatpush1.msra.mxu0 0.0
    %3768 = vmatprep.subr.mxu0 0.0
    %3769 = vmatpush1.msra.mxu0 0.0
    %3770 = vmatprep.subr.mxu0 0.0
    %3771 = vmatpush1.msra.mxu0 0.0
    %3772 = vmatprep.subr.mxu0 0.0
    %3773 = vmatpush1.msra.mxu0 0.0
    %3774 = vmatprep.subr.mxu0 0.0
    %3775 = vmatpush1.msra.mxu0 0.0
    %3776 = vmatprep.subr.mxu0 0.0
    %3777 = vmatpush1.msra.mxu0 0.0
    %3778 = vmatprep.subr.mxu0 0.0
    %3779 = vmatpush1.msra.mxu0 0.0
    %3780 = vmatprep.subr.mxu0 0.0
    %3781 = vmatpush1.msra.mxu0 0.0
    %3782 = vmatprep.subr.mxu0 0.0
    %3783 = vmatpush1.msra.mxu0 0.0
    %3784 = vmatprep.subr.mxu0 0.0
    %3785 = vmatpush1.msra.mxu0 0.0
    %3786 = vmatprep.subr.mxu0 0.0
    %3787 = vmatpush1.msra.mxu0 0.0
    %3788 = vmatprep.subr.mxu0 0.0
    %3789 = vmatpush1.msra.mxu0 0.0
    %3790 = vmatprep.subr.mxu0 0.0
    %3791 = vmatpush1.msra.mxu0 0.0
    %3792 = vmatprep.subr.mxu0 0.0
    %3793 = vmatpush1.msra.mxu0 0.0
    %3794 = vmatprep.subr.mxu0 0.0
    %3795 = vmatpush1.msra.mxu0 0.0
    %3796 = vmatprep.subr.mxu0 0.0
    %3797 = vmatpush1.msra.mxu0 0.0
    %3798 = vmatprep.subr.mxu0 0.0
    %3799 = vmatpush1.msra.mxu0 0.0
    %3800 = vmatprep.subr.mxu0 0.0
    %3801 = vmatpush1.msra.mxu0 0.0
    %3802 = vmatprep.subr.mxu0 0.0
    %3803 = vmatpush1.msra.mxu0 0.0
    %3804 = vmatprep.subr.mxu0 0.0
    %3805 = vmatpush1.msra.mxu0 0.0
    %3806 = vmatprep.subr.mxu0 0.0
    %3807 = vmatpush1.msra.mxu0 0.0
    %3808 = vmatprep.subr.mxu0 0.0
    %3809 = vmatpush1.msra.mxu0 0.0
    %3810 = vmatprep.mubr.f32.mxu0 0.0
    %3811 = vmatmul.mubr.f32.gmra.mrb[0].mxu0 %v3741
    %v3812 = vpop.f32.mrb[0].mxu0
    %v3813 = vadd.f32 %v3732, %v3812
    %v3814 = vpop.f32.mrb[0].mxu0
    %3815 = vmatprep.mubr.f32.mxu0 0.0
    %3816 = vmatmul.mubr.f32.gmra.mrb[0].mxu0 %v3744
    %v3817 = vpop.f32.mrb[0].mxu0
    %v3818 = vadd.f32 %v3737, %v3817
    %v3819 = vpop.f32.mrb[0].mxu0
    %3820 = vdwg.mxu0
    %v3821 = vadd.f32 %v3813, %v1499
    %v3822 = vadd.f32 %v3818, %v1499
    %v3823 = vxor.u32 %v3821, 2147483648
    %v3824 = vxor.u32 %v3822, 2147483648
    %v3825 = vmul.f32 %v3823, 1.442695
    %v3826 = vpow.pop %v3825
    %v3827 = vmul.f32 %v3824, 1.442695
    %v3828 = vpow.pop %v3827
    %v3829 = vadd.f32 %v3826, 1.0
    %v3830 = vadd.f32 %v3828, 1.0
    %v3831 = vrcp.pop %v3829
    %v3832 = vmul.f32 1.0, %v3831
    %v3833 = vrcp.pop %v3830
    %v3834 = vmul.f32 1.0, %v3833
    %3835 = vmatprep.subr.mxu0 0.0
    %3836 = vmatpush1.msra.mxu0 %v225
    %3837 = vmatprep.subr.mxu0 0.0
    %3838 = vmatpush1.msra.mxu0 %v226
    %3839 = vmatprep.subr.mxu0 0.0
    %3840 = vmatpush1.msra.mxu0 %v227
    %3841 = vmatprep.subr.mxu0 0.0
    %3842 = vmatpush1.msra.mxu0 %v228
    %3843 = vmatprep.subr.mxu0 0.0
    %3844 = vmatpush1.msra.mxu0 0.0
    %3845 = vmatprep.subr.mxu0 0.0
    %3846 = vmatpush1.msra.mxu0 0.0
    %3847 = vmatprep.subr.mxu0 0.0
    %3848 = vmatpush1.msra.mxu0 0.0
    %3849 = vmatprep.subr.mxu0 0.0
    %3850 = vmatpush1.msra.mxu0 0.0
    %3851 = vmatprep.subr.mxu0 0.0
    %3852 = vmatpush1.msra.mxu0 0.0
    %3853 = vmatprep.subr.mxu0 0.0
    %3854 = vmatpush1.msra.mxu0 0.0
    %3855 = vmatprep.subr.mxu0 0.0
    %3856 = vmatpush1.msra.mxu0 0.0
    %3857 = vmatprep.subr.mxu0 0.0
    %3858 = vmatpush1.msra.mxu0 0.0
    %3859 = vmatprep.subr.mxu0 0.0
    %3860 = vmatpush1.msra.mxu0 0.0
    %3861 = vmatprep.subr.mxu0 0.0
    %3862 = vmatpush1.msra.mxu0 0.0
    %3863 = vmatprep.subr.mxu0 0.0
    %3864 = vmatpush1.msra.mxu0 0.0
    %3865 = vmatprep.subr.mxu0 0.0
    %3866 = vmatpush1.msra.mxu0 0.0
    %3867 = vmatprep.subr.mxu0 0.0
    %3868 = vmatpush1.msra.mxu0 0.0
    %3869 = vmatprep.subr.mxu0 0.0
    %3870 = vmatpush1.msra.mxu0 0.0
    %3871 = vmatprep.subr.mxu0 0.0
    %3872 = vmatpush1.msra.mxu0 0.0
    %3873 = vmatprep.subr.mxu0 0.0
    %3874 = vmatpush1.msra.mxu0 0.0
    %3875 = vmatprep.subr.mxu0 0.0
    %3876 = vmatpush1.msra.mxu0 0.0
    %3877 = vmatprep.subr.mxu0 0.0
    %3878 = vmatpush1.msra.mxu0 0.0
    %3879 = vmatprep.subr.mxu0 0.0
    %3880 = vmatpush1.msra.mxu0 0.0
    %3881 = vmatprep.subr.mxu0 0.0
    %3882 = vmatpush1.msra.mxu0 0.0
    %3883 = vmatprep.subr.mxu0 0.0
    %3884 = vmatpush1.msra.mxu0 0.0
    %3885 = vmatprep.subr.mxu0 0.0
    %3886 = vmatpush1.msra.mxu0 0.0
    %3887 = vmatprep.subr.mxu0 0.0
    %3888 = vmatpush1.msra.mxu0 0.0
    %3889 = vmatprep.subr.mxu0 0.0
    %3890 = vmatpush1.msra.mxu0 0.0
    %3891 = vmatprep.subr.mxu0 0.0
    %3892 = vmatpush1.msra.mxu0 0.0
    %3893 = vmatprep.subr.mxu0 0.0
    %3894 = vmatpush1.msra.mxu0 0.0
    %3895 = vmatprep.subr.mxu0 0.0
    %3896 = vmatpush1.msra.mxu0 0.0
    %3897 = vmatprep.subr.mxu0 0.0
    %3898 = vmatpush1.msra.mxu0 0.0
    %3899 = vmatprep.mubr.f32.mxu0 0.0
    %3900 = vmatmul.mubr.f32.gmra.mrb[0].mxu0 %v3660
    %v3901 = vpop.f32.mrb[0].mxu0
    %v3902 = vadd.f32 0.0, %v3901
    %v3903 = vpop.f32.mrb[0].mxu0
    %3904 = vmatprep.mubr.f32.mxu0 0.0
    %3905 = vmatmul.mubr.f32.gmra.mrb[0].mxu0 %v3663
    %v3906 = vpop.f32.mrb[0].mxu0
    %v3907 = vadd.f32 0.0, %v3906
    %v3908 = vpop.f32.mrb[0].mxu0
    %3909 = vdwg.mxu0
    %3910 = vmatprep.subr.mxu0 0.0
    %3911 = vmatpush1.msra.mxu0 %v213
    %3912 = vmatprep.subr.mxu0 0.0
    %3913 = vmatpush1.msra.mxu0 %v214
    %3914 = vmatprep.subr.mxu0 0.0
    %3915 = vmatpush1.msra.mxu0 %v215
    %3916 = vmatprep.subr.mxu0 0.0
    %3917 = vmatpush1.msra.mxu0 %v216
    %3918 = vmatprep.subr.mxu0 0.0
    %3919 = vmatpush1.msra.mxu0 0.0
    %3920 = vmatprep.subr.mxu0 0.0
    %3921 = vmatpush1.msra.mxu0 0.0
    %3922 = vmatprep.subr.mxu0 0.0
    %3923 = vmatpush1.msra.mxu0 0.0
    %3924 = vmatprep.subr.mxu0 0.0
    %3925 = vmatpush1.msra.mxu0 0.0
    %3926 = vmatprep.subr.mxu0 0.0
    %3927 = vmatpush1.msra.mxu0 0.0
    %3928 = vmatprep.subr.mxu0 0.0
    %3929 = vmatpush1.msra.mxu0 0.0
    %3930 = vmatprep.subr.mxu0 0.0
    %3931 = vmatpush1.msra.mxu0 0.0
    %3932 = vmatprep.subr.mxu0 0.0
    %3933 = vmatpush1.msra.mxu0 0.0
    %3934 = vmatprep.subr.mxu0 0.0
    %3935 = vmatpush1.msra.mxu0 0.0
    %3936 = vmatprep.subr.mxu0 0.0
    %3937 = vmatpush1.msra.mxu0 0.0
    %3938 = vmatprep.subr.mxu0 0.0
    %3939 = vmatpush1.msra.mxu0 0.0
    %3940 = vmatprep.subr.mxu0 0.0
    %3941 = vmatpush1.msra.mxu0 0.0
    %3942 = vmatprep.subr.mxu0 0.0
    %3943 = vmatpush1.msra.mxu0 0.0
    %3944 = vmatprep.subr.mxu0 0.0
    %3945 = vmatpush1.msra.mxu0 0.0
    %3946 = vmatprep.subr.mxu0 0.0
    %3947 = vmatpush1.msra.mxu0 0.0
    %3948 = vmatprep.subr.mxu0 0.0
    %3949 = vmatpush1.msra.mxu0 0.0
    %3950 = vmatprep.subr.mxu0 0.0
    %3951 = vmatpush1.msra.mxu0 0.0
    %3952 = vmatprep.subr.mxu0 0.0
    %3953 = vmatpush1.msra.mxu0 0.0
    %3954 = vmatprep.subr.mxu0 0.0
    %3955 = vmatpush1.msra.mxu0 0.0
    %3956 = vmatprep.subr.mxu0 0.0
    %3957 = vmatpush1.msra.mxu0 0.0
    %3958 = vmatprep.subr.mxu0 0.0
    %3959 = vmatpush1.msra.mxu0 0.0
    %3960 = vmatprep.subr.mxu0 0.0
    %3961 = vmatpush1.msra.mxu0 0.0
    %3962 = vmatprep.subr.mxu0 0.0
    %3963 = vmatpush1.msra.mxu0 0.0
    %3964 = vmatprep.subr.mxu0 0.0
    %3965 = vmatpush1.msra.mxu0 0.0
    %3966 = vmatprep.subr.mxu0 0.0
    %3967 = vmatpush1.msra.mxu0 0.0
    %3968 = vmatprep.subr.mxu0 0.0
    %3969 = vmatpush1.msra.mxu0 0.0
    %3970 = vmatprep.subr.mxu0 0.0
    %3971 = vmatpush1.msra.mxu0 0.0
    %3972 = vmatprep.subr.mxu0 0.0
    %3973 = vmatpush1.msra.mxu0 0.0
    %3974 = vmatprep.mubr.f32.mxu0 0.0
    %3975 = vmatmul.mubr.f32.gmra.mrb[0].mxu0 %v3741
    %v3976 = vpop.f32.mrb[0].mxu0
    %v3977 = vadd.f32 %v3902, %v3976
    %v3978 = vpop.f32.mrb[0].mxu0
    %3979 = vmatprep.mubr.f32.mxu0 0.0
    %3980 = vmatmul.mubr.f32.gmra.mrb[0].mxu0 %v3744
    %v3981 = vpop.f32.mrb[0].mxu0
    %v3982 = vadd.f32 %v3907, %v3981
    %v3983 = vpop.f32.mrb[0].mxu0
    %3984 = vdwg.mxu0
    %v3985 = vadd.f32 %v3977, %v1669
    %v3986 = vadd.f32 %v3982, %v1669
    %v3987 = vxor.u32 %v3985, 2147483648
    %v3988 = vxor.u32 %v3986, 2147483648
    %v3989 = vmul.f32 %v3987, 1.442695
    %v3990 = vpow.pop %v3989
    %v3991 = vmul.f32 %v3988, 1.442695
    %v3992 = vpow.pop %v3991
    %v3993 = vadd.f32 %v3990, 1.0
    %v3994 = vadd.f32 %v3992, 1.0
    %v3995 = vrcp.pop %v3993
    %v3996 = vmul.f32 1.0, %v3995
    %v3997 = vrcp.pop %v3994
    %v3998 = vmul.f32 1.0, %v3997
    %3999 = vmatprep.subr.mxu0 0.0
    %4000 = vmatpush1.msra.mxu0 %v217
    %4001 = vmatprep.subr.mxu0 0.0
    %4002 = vmatpush1.msra.mxu0 %v218
    %4003 = vmatprep.subr.mxu0 0.0
    %4004 = vmatpush1.msra.mxu0 %v219
    %4005 = vmatprep.subr.mxu0 0.0
    %4006 = vmatpush1.msra.mxu0 %v220
    %4007 = vmatprep.subr.mxu0 0.0
    %4008 = vmatpush1.msra.mxu0 0.0
    %4009 = vmatprep.subr.mxu0 0.0
    %4010 = vmatpush1.msra.mxu0 0.0
    %4011 = vmatprep.subr.mxu0 0.0
    %4012 = vmatpush1.msra.mxu0 0.0
    %4013 = vmatprep.subr.mxu0 0.0
    %4014 = vmatpush1.msra.mxu0 0.0
    %4015 = vmatprep.subr.mxu0 0.0
    %4016 = vmatpush1.msra.mxu0 0.0
    %4017 = vmatprep.subr.mxu0 0.0
    %4018 = vmatpush1.msra.mxu0 0.0
    %4019 = vmatprep.subr.mxu0 0.0
    %4020 = vmatpush1.msra.mxu0 0.0
    %4021 = vmatprep.subr.mxu0 0.0
    %4022 = vmatpush1.msra.mxu0 0.0
    %4023 = vmatprep.subr.mxu0 0.0
    %4024 = vmatpush1.msra.mxu0 0.0
    %4025 = vmatprep.subr.mxu0 0.0
    %4026 = vmatpush1.msra.mxu0 0.0
    %4027 = vmatprep.subr.mxu0 0.0
    %4028 = vmatpush1.msra.mxu0 0.0
    %4029 = vmatprep.subr.mxu0 0.0
    %4030 = vmatpush1.msra.mxu0 0.0
    %4031 = vmatprep.subr.mxu0 0.0
    %4032 = vmatpush1.msra.mxu0 0.0
    %4033 = vmatprep.subr.mxu0 0.0
    %4034 = vmatpush1.msra.mxu0 0.0
    %4035 = vmatprep.subr.mxu0 0.0
    %4036 = vmatpush1.msra.mxu0 0.0
    %4037 = vmatprep.subr.mxu0 0.0
    %4038 = vmatpush1.msra.mxu0 0.0
    %4039 = vmatprep.subr.mxu0 0.0
    %4040 = vmatpush1.msra.mxu0 0.0
    %4041 = vmatprep.subr.mxu0 0.0
    %4042 = vmatpush1.msra.mxu0 0.0
    %4043 = vmatprep.subr.mxu0 0.0
    %4044 = vmatpush1.msra.mxu0 0.0
    %4045 = vmatprep.subr.mxu0 0.0
    %4046 = vmatpush1.msra.mxu0 0.0
    %4047 = vmatprep.subr.mxu0 0.0
    %4048 = vmatpush1.msra.mxu0 0.0
    %4049 = vmatprep.subr.mxu0 0.0
    %4050 = vmatpush1.msra.mxu0 0.0
    %4051 = vmatprep.subr.mxu0 0.0
    %4052 = vmatpush1.msra.mxu0 0.0
    %4053 = vmatprep.subr.mxu0 0.0
    %4054 = vmatpush1.msra.mxu0 0.0
    %4055 = vmatprep.subr.mxu0 0.0
    %4056 = vmatpush1.msra.mxu0 0.0
    %4057 = vmatprep.subr.mxu0 0.0
    %4058 = vmatpush1.msra.mxu0 0.0
    %4059 = vmatprep.subr.mxu0 0.0
    %4060 = vmatpush1.msra.mxu0 0.0
    %4061 = vmatprep.subr.mxu0 0.0
    %4062 = vmatpush1.msra.mxu0 0.0
    %4063 = vmatprep.mubr.f32.mxu0 0.0
    %4064 = vmatmul.mubr.f32.gmra.mrb[0].mxu0 %v3741
    %v4065 = vpop.f32.mrb[0].mxu0
    %v4066 = vadd.f32 %v1689, %v4065
    %v4067 = vpop.f32.mrb[0].mxu0
    %4068 = vmatprep.mubr.f32.mxu0 0.0
    %4069 = vmatmul.mubr.f32.gmra.mrb[0].mxu0 %v3744
    %v4070 = vpop.f32.mrb[0].mxu0
    %v4071 = vadd.f32 %v1689, %v4070
    %v4072 = vpop.f32.mrb[0].mxu0
    %4073 = vdwg.mxu0
    %4074 = vmatprep.subr.mxu0 0.0
    %4075 = vmatpush1.msra.mxu0 %v229
    %4076 = vmatprep.subr.mxu0 0.0
    %4077 = vmatpush1.msra.mxu0 %v230
    %4078 = vmatprep.subr.mxu0 0.0
    %4079 = vmatpush1.msra.mxu0 %v231
    %4080 = vmatprep.subr.mxu0 0.0
    %4081 = vmatpush1.msra.mxu0 %v232
    %4082 = vmatprep.subr.mxu0 0.0
    %4083 = vmatpush1.msra.mxu0 0.0
    %4084 = vmatprep.subr.mxu0 0.0
    %4085 = vmatpush1.msra.mxu0 0.0
    %4086 = vmatprep.subr.mxu0 0.0
    %4087 = vmatpush1.msra.mxu0 0.0
    %4088 = vmatprep.subr.mxu0 0.0
    %4089 = vmatpush1.msra.mxu0 0.0
    %4090 = vmatprep.subr.mxu0 0.0
    %4091 = vmatpush1.msra.mxu0 0.0
    %4092 = vmatprep.subr.mxu0 0.0
    %4093 = vmatpush1.msra.mxu0 0.0
    %4094 = vmatprep.subr.mxu0 0.0
    %4095 = vmatpush1.msra.mxu0 0.0
    %4096 = vmatprep.subr.mxu0 0.0
    %4097 = vmatpush1.msra.mxu0 0.0
    %4098 = vmatprep.subr.mxu0 0.0
    %4099 = vmatpush1.msra.mxu0 0.0
    %4100 = vmatprep.subr.mxu0 0.0
    %4101 = vmatpush1.msra.mxu0 0.0
    %4102 = vmatprep.subr.mxu0 0.0
    %4103 = vmatpush1.msra.mxu0 0.0
    %4104 = vmatprep.subr.mxu0 0.0
    %4105 = vmatpush1.msra.mxu0 0.0
    %4106 = vmatprep.subr.mxu0 0.0
    %4107 = vmatpush1.msra.mxu0 0.0
    %4108 = vmatprep.subr.mxu0 0.0
    %4109 = vmatpush1.msra.mxu0 0.0
    %4110 = vmatprep.subr.mxu0 0.0
    %4111 = vmatpush1.msra.mxu0 0.0
    %4112 = vmatprep.subr.mxu0 0.0
    %4113 = vmatpush1.msra.mxu0 0.0
    %4114 = vmatprep.subr.mxu0 0.0
    %4115 = vmatpush1.msra.mxu0 0.0
    %4116 = vmatprep.subr.mxu0 0.0
    %4117 = vmatpush1.msra.mxu0 0.0
    %4118 = vmatprep.subr.mxu0 0.0
    %4119 = vmatpush1.msra.mxu0 0.0
    %4120 = vmatprep.subr.mxu0 0.0
    %4121 = vmatpush1.msra.mxu0 0.0
    %4122 = vmatprep.subr.mxu0 0.0
    %4123 = vmatpush1.msra.mxu0 0.0
    %4124 = vmatprep.subr.mxu0 0.0
    %4125 = vmatpush1.msra.mxu0 0.0
    %4126 = vmatprep.subr.mxu0 0.0
    %4127 = vmatpush1.msra.mxu0 0.0
    %4128 = vmatprep.subr.mxu0 0.0
    %4129 = vmatpush1.msra.mxu0 0.0
    %4130 = vmatprep.subr.mxu0 0.0
    %4131 = vmatpush1.msra.mxu0 0.0
    %4132 = vmatprep.subr.mxu0 0.0
    %4133 = vmatpush1.msra.mxu0 0.0
    %4134 = vmatprep.subr.mxu0 0.0
    %4135 = vmatpush1.msra.mxu0 0.0
    %4136 = vmatprep.subr.mxu0 0.0
    %4137 = vmatpush1.msra.mxu0 0.0
    %4138 = vmatprep.mubr.f32.mxu0 0.0
    %4139 = vmatmul.mubr.f32.gmra.mrb[0].mxu0 %v3660
    %v4140 = vpop.f32.mrb[0].mxu0
    %v4141 = vadd.f32 %v1770, %v4140
    %v4142 = vpop.f32.mrb[0].mxu0
    %4143 = vmatprep.mubr.f32.mxu0 0.0
    %4144 = vmatmul.mubr.f32.gmra.mrb[0].mxu0 %v3663
    %v4145 = vpop.f32.mrb[0].mxu0
    %v4146 = vadd.f32 %v1770, %v4145
    %v4147 = vpop.f32.mrb[0].mxu0
    %4148 = vdwg.mxu0
    %v4149 = vmul.f32 %v3832, %v4141
    %v4150 = vmul.f32 %v3834, %v4146
    %v4151 = vadd.f32 %v4066, %v4149
    %v4152 = vadd.f32 %v4071, %v4150
    %v4153 = vtanh.pop %v4151
    %v4154 = vtanh.pop %v4152
    %v4155 = vsub.f32 1.0, %v3996
    %v4156 = vsub.f32 1.0, %v3998
    %v4157 = vmul.f32 %v4155, %v4153
    %v4158 = vmul.f32 %v4156, %v4154
    %v4159 = vmul.f32 %v3996, %v3208
    %v4160 = vmul.f32 %v3998, %v3209
    %v4161 = vadd.f32 %v4157, %v4159
    %v4162 = vadd.f32 %v4158, %v4160
    %v4163 = vsel %vm267, %v4161, 0.0
    %4164 = vadd.xlane.f32.xlu0 %v4163
    %v4165 = vpop.xlane.xlu0 %4164
    %v4166 = vsel %vm267, %v4162, 0.0
    %4167 = vadd.xlane.f32.xlu0 %v4166
    %v4168 = vpop.xlane.xlu0 %4167
    %v4169 = vmul.f32 %v4165, %v316
    %v4170 = vmul.f32 %v4168, %v316
    %v4171 = vsub.f32 %v4161, %v4169
    %v4172 = vsub.f32 %v4162, %v4170
    %v4173 = vmul.f32 %v4171, %v4171
    %v4174 = vmul.f32 %v4172, %v4172
    %v4175 = vsel %vm267, %v4173, 0.0
    %4176 = vadd.xlane.f32.xlu0 %v4175
    %v4177 = vpop.xlane.xlu0 %4176
    %v4178 = vsel %vm267, %v4174, 0.0
    %4179 = vadd.xlane.f32.xlu0 %v4178
    %v4180 = vpop.xlane.xlu0 %4179
    %v4181 = vmul.f32 %v4177, %v316
    %v4182 = vmul.f32 %v4180, %v316
    %v4183 = vadd.f32 %v4181, 1e-05
    %v4184 = vadd.f32 %v4182, 1e-05
    %v4185 = vrsqrt.pop %v4183
    %v4186 = vrsqrt.pop %v4184
    %v4187 = vmul.f32 %v4171, %v4185
    %v4188 = vmul.f32 %v4172, %v4186
    %v4190 = vsel %vm267, %v4187, 0
    %v4193 = vsel %vm267, %v4188, 0
    %4195 = vmatprep.subr.mxu0 0.0
    %4196 = vmatpush1.msra.mxu0 %v237
    %4197 = vmatprep.subr.mxu0 0.0
    %4198 = vmatpush1.msra.mxu0 %v238
    %4199 = vmatprep.subr.mxu0 0.0
    %4200 = vmatpush1.msra.mxu0 %v239
    %4201 = vmatprep.subr.mxu0 0.0
    %4202 = vmatpush1.msra.mxu0 %v240
    %4203 = vmatprep.subr.mxu0 0.0
    %4204 = vmatpush1.msra.mxu0 0.0
    %4205 = vmatprep.subr.mxu0 0.0
    %4206 = vmatpush1.msra.mxu0 0.0
    %4207 = vmatprep.subr.mxu0 0.0
    %4208 = vmatpush1.msra.mxu0 0.0
    %4209 = vmatprep.subr.mxu0 0.0
    %4210 = vmatpush1.msra.mxu0 0.0
    %4211 = vmatprep.subr.mxu0 0.0
    %4212 = vmatpush1.msra.mxu0 0.0
    %4213 = vmatprep.subr.mxu0 0.0
    %4214 = vmatpush1.msra.mxu0 0.0
    %4215 = vmatprep.subr.mxu0 0.0
    %4216 = vmatpush1.msra.mxu0 0.0
    %4217 = vmatprep.subr.mxu0 0.0
    %4218 = vmatpush1.msra.mxu0 0.0
    %4219 = vmatprep.subr.mxu0 0.0
    %4220 = vmatpush1.msra.mxu0 0.0
    %4221 = vmatprep.subr.mxu0 0.0
    %4222 = vmatpush1.msra.mxu0 0.0
    %4223 = vmatprep.subr.mxu0 0.0
    %4224 = vmatpush1.msra.mxu0 0.0
    %4225 = vmatprep.subr.mxu0 0.0
    %4226 = vmatpush1.msra.mxu0 0.0
    %4227 = vmatprep.subr.mxu0 0.0
    %4228 = vmatpush1.msra.mxu0 0.0
    %4229 = vmatprep.subr.mxu0 0.0
    %4230 = vmatpush1.msra.mxu0 0.0
    %4231 = vmatprep.subr.mxu0 0.0
    %4232 = vmatpush1.msra.mxu0 0.0
    %4233 = vmatprep.subr.mxu0 0.0
    %4234 = vmatpush1.msra.mxu0 0.0
    %4235 = vmatprep.subr.mxu0 0.0
    %4236 = vmatpush1.msra.mxu0 0.0
    %4237 = vmatprep.subr.mxu0 0.0
    %4238 = vmatpush1.msra.mxu0 0.0
    %4239 = vmatprep.subr.mxu0 0.0
    %4240 = vmatpush1.msra.mxu0 0.0
    %4241 = vmatprep.subr.mxu0 0.0
    %4242 = vmatpush1.msra.mxu0 0.0
    %4243 = vmatprep.subr.mxu0 0.0
    %4244 = vmatpush1.msra.mxu0 0.0
    %4245 = vmatprep.subr.mxu0 0.0
    %4246 = vmatpush1.msra.mxu0 0.0
    %4247 = vmatprep.subr.mxu0 0.0
    %4248 = vmatpush1.msra.mxu0 0.0
    %4249 = vmatprep.subr.mxu0 0.0
    %4250 = vmatpush1.msra.mxu0 0.0
    %4251 = vmatprep.subr.mxu0 0.0
    %4252 = vmatpush1.msra.mxu0 0.0
    %4253 = vmatprep.subr.mxu0 0.0
    %4254 = vmatpush1.msra.mxu0 0.0
    %4255 = vmatprep.subr.mxu0 0.0
    %4256 = vmatpush1.msra.mxu0 0.0
    %4257 = vmatprep.subr.mxu0 0.0
    %4258 = vmatpush1.msra.mxu0 0.0
    %4259 = vmatprep.mubr.f32.mxu0 0.0
    %4260 = vmatmul.mubr.f32.gmra.mrb[0].mxu0 %v4190
    %v4261 = vpop.f32.mrb[0].mxu0
    %v4262 = vadd.f32 %v1891, %v4261
    %v4263 = vpop.f32.mrb[0].mxu0
    %4264 = vmatprep.mubr.f32.mxu0 0.0
    %4265 = vmatmul.mubr.f32.gmra.mrb[0].mxu0 %v4193
    %v4266 = vpop.f32.mrb[0].mxu0
    %v4267 = vadd.f32 %v1891, %v4266
    %v4268 = vpop.f32.mrb[0].mxu0
    %4269 = vdwg.mxu0
    %v4270 = vmax.f32 %v4262, 0.0
    %v4271 = vmax.f32 %v4267, 0.0
    %v4273 = vsel %vm1136, %v4270, 0
    %v4276 = vsel %vm1136, %v4271, 0
    %4278 = vmatprep.subr.mxu0 0.0
    %4279 = vmatpush1.msra.mxu0 %v242
    %4280 = vmatprep.subr.mxu0 0.0
    %4281 = vmatpush1.msra.mxu0 %v243
    %4282 = vmatprep.subr.mxu0 0.0
    %4283 = vmatpush1.msra.mxu0 %v244
    %4284 = vmatprep.subr.mxu0 0.0
    %4285 = vmatpush1.msra.mxu0 %v245
    %4286 = vmatprep.subr.mxu0 0.0
    %4287 = vmatpush1.msra.mxu0 %v246
    %4288 = vmatprep.subr.mxu0 0.0
    %4289 = vmatpush1.msra.mxu0 %v247
    %4290 = vmatprep.subr.mxu0 0.0
    %4291 = vmatpush1.msra.mxu0 %v248
    %4292 = vmatprep.subr.mxu0 0.0
    %4293 = vmatpush1.msra.mxu0 %v249
    %4294 = vmatprep.subr.mxu0 0.0
    %4295 = vmatpush1.msra.mxu0 0.0
    %4296 = vmatprep.subr.mxu0 0.0
    %4297 = vmatpush1.msra.mxu0 0.0
    %4298 = vmatprep.subr.mxu0 0.0
    %4299 = vmatpush1.msra.mxu0 0.0
    %4300 = vmatprep.subr.mxu0 0.0
    %4301 = vmatpush1.msra.mxu0 0.0
    %4302 = vmatprep.subr.mxu0 0.0
    %4303 = vmatpush1.msra.mxu0 0.0
    %4304 = vmatprep.subr.mxu0 0.0
    %4305 = vmatpush1.msra.mxu0 0.0
    %4306 = vmatprep.subr.mxu0 0.0
    %4307 = vmatpush1.msra.mxu0 0.0
    %4308 = vmatprep.subr.mxu0 0.0
    %4309 = vmatpush1.msra.mxu0 0.0
    %4310 = vmatprep.subr.mxu0 0.0
    %4311 = vmatpush1.msra.mxu0 0.0
    %4312 = vmatprep.subr.mxu0 0.0
    %4313 = vmatpush1.msra.mxu0 0.0
    %4314 = vmatprep.subr.mxu0 0.0
    %4315 = vmatpush1.msra.mxu0 0.0
    %4316 = vmatprep.subr.mxu0 0.0
    %4317 = vmatpush1.msra.mxu0 0.0
    %4318 = vmatprep.subr.mxu0 0.0
    %4319 = vmatpush1.msra.mxu0 0.0
    %4320 = vmatprep.subr.mxu0 0.0
    %4321 = vmatpush1.msra.mxu0 0.0
    %4322 = vmatprep.subr.mxu0 0.0
    %4323 = vmatpush1.msra.mxu0 0.0
    %4324 = vmatprep.subr.mxu0 0.0
    %4325 = vmatpush1.msra.mxu0 0.0
    %4326 = vmatprep.subr.mxu0 0.0
    %4327 = vmatpush1.msra.mxu0 0.0
    %4328 = vmatprep.subr.mxu0 0.0
    %4329 = vmatpush1.msra.mxu0 0.0
    %4330 = vmatprep.subr.mxu0 0.0
    %4331 = vmatpush1.msra.mxu0 0.0
    %4332 = vmatprep.subr.mxu0 0.0
    %4333 = vmatpush1.msra.mxu0 0.0
    %4334 = vmatprep.subr.mxu0 0.0
    %4335 = vmatpush1.msra.mxu0 0.0
    %4336 = vmatprep.subr.mxu0 0.0
    %4337 = vmatpush1.msra.mxu0 0.0
    %4338 = vmatprep.subr.mxu0 0.0
    %4339 = vmatpush1.msra.mxu0 0.0
    %4340 = vmatprep.subr.mxu0 0.0
    %4341 = vmatpush1.msra.mxu0 0.0
    %4342 = vmatprep.mubr.f32.mxu0 0.0
    %4343 = vmatmul.mubr.f32.gmra.mrb[0].mxu0 %v4273
    %v4344 = vpop.f32.mrb[0].mxu0
    %v4345 = vadd.f32 %v1980, %v4344
    %v4346 = vpop.f32.mrb[0].mxu0
    %4347 = vmatprep.mubr.f32.mxu0 0.0
    %4348 = vmatmul.mubr.f32.gmra.mrb[0].mxu0 %v4276
    %v4349 = vpop.f32.mrb[0].mxu0
    %v4350 = vadd.f32 %v1980, %v4349
    %v4351 = vpop.f32.mrb[0].mxu0
    %4352 = vdwg.mxu0
    %v4353 = vadd.f32 %v4161, %v4345
    %v4354 = vadd.f32 %v4162, %v4350
    %4355 = vst.msk [vmem:[#allocation19] sm:$0xff] %vm267, %v4353
    %4356 = vst.msk [vmem:[#allocation19 + $0x8] sm:$0xff] %vm267, %v4354
    // Predicated region
    $region130: #{tpu_custom_call.1} parent=1 // pred_check
      _
    $region131: #{tpu_custom_call.1} parent=1 // pred_check_branch
      %4358 = sbr.rel (0) target = $region133
    $region132: #{tpu_custom_call.1} parent=1 // pred_region
      %s4360 = ssub.s32 256, 256
      %4361 = vsyncadd [#allocation4], %s4360
      %s4362 = sshll.u32 [#allocation19], 4
      %s4363 = int_to_ptr.vmem [resolvable:$true] %s4362
      %4368 = dma.vmem_to_hbm [thread:$0]  %s4363, 256, %s22, [#allocation4], 128, 128, 8
    $region133: #{tpu_custom_call.1} parent=1 // pred_fallthru
      _
    // Predicated region
    $region134: #{tpu_custom_call.1} parent=1 // pred_check
      _
    $region135: #{tpu_custom_call.1} parent=1 // pred_check_branch
      %4370 = sbr.rel (0) target = $region137
    $region136: #{tpu_custom_call.1} parent=1 // pred_region
      %4371 = dma.done [#allocation4], 256
    $region137: #{tpu_custom_call.1} parent=1 // pred_fallthru
      _
    %4372 = vsyncpa [#allocation3], 1
    %4373 = vsyncpa [#allocation6], 1
    %4374 = vsyncpa [#allocation9], 1
    %4375 = vsyncpa [#allocation12], 1
    %4376 = vsyncpa [#allocation15], 1
    %4377 = vsyncpa [#allocation18], 1
    %4378 = vsyncpa [#allocation4], 1

</llo_original>
